<compile_context>
chip_gen: v7x
topology: tpu7x:2x2x1
jax: 0.10.0
libtpu: 0.0.40
codegen_flags: <defaults>
</compile_context>

<pallas_src>
import jax
import jax.numpy as jnp
from jax.experimental import pallas as pl
from jax.experimental.pallas import tpu as pltpu

EPS = 1e-5


# ----------------------------------------------------------------------------
# Kernel
# ----------------------------------------------------------------------------
def _dense_relu(h, w_ref, b_ref):
    """(Conv1d k=1 / Linear) -> ReLU. bf16 MXU operands, f32 accumulation."""
    y = jnp.dot(h.astype(jnp.bfloat16), w_ref[...],
                preferred_element_type=jnp.float32) + b_ref[...]
    return jnp.maximum(y, 0.0)


def _make_kernel(TB, PC, n_points, apply_pre_pool_bn):
    n_chunks = n_points // PC

    def kernel(x_hbm, w2, b2, w3, b3, w4, b4, s4, t4,
               dw1, db1, dw2, db2, dw3, db3,
               out_ref, g2_ref, mx_ref):
        i = pl.program_id(0)
        j = pl.program_id(1)

        # Encoder + decoder trunk: once per batch tile (j == 0).  Everything the
        # streamed output slabs need afterwards is the (TB, 2048) hidden in
        # scratch VMEM.
        @pl.when(j == 0)
        def _trunk():
            mx_ref[...] = jnp.full(mx_ref.shape, -jnp.inf, mx_ref.dtype)

            def chunk(x_vmem):                       # (TB, PC, 128) bf16
                h = x_vmem[...].reshape(TB * PC, 128)
                h = _dense_relu(h, w2, b2)           # (TB*PC, 128)
                h = _dense_relu(h, w3, b3)           # (TB*PC, 256)
                h = _dense_relu(h, w4, b4)           # (TB*PC, 512)
                if apply_pre_pool_bn:                # only if BN4 scale <= 0 somewhere
                    h = h * s4[...] + t4[...]
                hmax = jnp.max(h.reshape(TB, PC, 512), axis=1)
                mx_ref[...] = jnp.maximum(mx_ref[...], hmax)

            # Stream point slabs of this batch tile from HBM with a nested
            # pipeline; the batch-tile index i comes in through the closure.
            pltpu.emit_pipeline(
                chunk,
                grid=(n_chunks,),
                in_specs=[pl.BlockSpec((TB, PC, 128), lambda p: (i, p, 0))],
            )(x_hbm)

            latent = mx_ref[...]                     # (TB, 512)  MaxPool1d(n)
            g = _dense_relu(latent, dw1, db1)        # (TB, n)
            g = _dense_relu(g, dw2, db2)             # (TB, 2048)
            g2_ref[...] = g.astype(jnp.bfloat16)

        # Final Linear(2048, 3n): one (2048, T3) weight slab per j step.
        out_ref[...] = (jnp.dot(g2_ref[...], dw3[...],
                                preferred_element_type=jnp.float32)
                        + db3[...]).astype(out_ref.dtype)

    return kernel


# ----------------------------------------------------------------------------
# Host-side helpers
# ----------------------------------------------------------------------------
def _fold_bn(gamma, beta, mean, var):
    scale = gamma / jnp.sqrt(var + EPS)
    shift = beta - mean * scale
    return scale, shift


def _vmem_limit_bytes():
    # Generation-aware: ~48 MiB on v7x (64 MiB physical / TC), ~96 MiB on
    # v5e/v6e (128 MiB physical).
    try:
        cap = int(pltpu.get_tpu_info().vmem_capacity_bytes)
        return min(cap * 3 // 4, 100 * 1024 * 1024)
    except Exception:
        return 48 * 1024 * 1024        # conservative fallback fits every gen


def _pick_batch_tile(B):
    """Large TB amortizes streamed weights; never fall back to huge TB=B."""
    if B <= 8:
        return B                       # block == full batch dim (always legal)
    half = ((B // 2) // 8) * 8         # multiple of 8, <= B/2 -> grid[0] >= 2
    if half >= 8:
        return min(128, half)
    return max(8, (min(B, 128) // 8) * 8)


def _pick_point_chunk(n, TB):
    """Point-slab size: keeps TB*PC around ~2K rows so f32 temps stay small."""
    target = max(16, (2048 // max(TB, 1)) // 16 * 16)
    pc = min(n, target) // 16 * 16
    while pc >= 16 and n % pc != 0:
        pc -= 16
    if pc >= 16:
        return pc
    pc = max(8, min(n, (2048 // max(TB, 1)) // 8 * 8))
    while pc > 8 and n % pc != 0:
        pc -= 8
    return pc if n % pc == 0 else n


def _pick_out_tile(total_cols):
    T3_MAX = 1536                      # 128-aligned streaming slab width
    return total_cols if total_cols <= T3_MAX else T3_MAX


# ----------------------------------------------------------------------------
# Forward pass
# ----------------------------------------------------------------------------
def vanilla_point_ae_forward(x_ncl, raw_params, n):
    """x_ncl: (B, 3, n) float32 (PyTorch NCL layout). Returns (B, 3, n)."""
    B = x_ncl.shape[0]
    assert n % 8 == 0, "n must be a multiple of 8 (pad the point cloud)"

    # --- hoisted layer 1 (3 -> 128): tiny XLA matmul, makes kernel input lane-dense
    W1, b1 = raw_params[0][0], raw_params[0][1]
    x = jnp.transpose(x_ncl, (0, 2, 1)).astype(jnp.float32)        # (B, n, 3)
    h1 = jnp.maximum(jnp.einsum('bnc,cf->bnf', x, W1) + b1, 0.0)   # (B, n, 128)

    # --- fold eval-mode BNs (per-channel affine) into the next matmul
    scales, shifts = [], []
    for k in range(6):
        _, _, g, bt, mu, var = raw_params[k]
        s, t = _fold_bn(g, bt, mu, var)
        scales.append(s)
        shifts.append(t)

    try:
        fold_pre_pool = bool(jnp.all(scales[3] > 0))   # max commutes iff scale > 0
    except Exception:
        fold_pre_pool = False                          # traced params: be safe

    def folded(layer_idx, prev_bn):
        W, b = raw_params[layer_idx][0], raw_params[layer_idx][1]
        if prev_bn is None:
            return W, b
        s, t = prev_bn
        return s[:, None] * W, t @ W + b

    w2, b2 = folded(1, (scales[0], shifts[0]))
    w3, b3 = folded(2, (scales[1], shifts[1]))
    w4, b4 = folded(3, (scales[2], shifts[2]))
    dw1, db1 = folded(4, (scales[3], shifts[3]) if fold_pre_pool else None)
    dw2, db2 = folded(5, (scales[4], shifts[4]))
    dw3, db3 = folded(6, (scales[5], shifts[5]))
    s4 = scales[3].reshape(1, -1).astype(jnp.float32)
    t4 = shifts[3].reshape(1, -1).astype(jnp.float32)

    # --- tiling
    TB = _pick_batch_tile(B)
    B_pad = pl.cdiv(B, TB) * TB
    if B_pad != B:
        h1 = jnp.pad(h1, ((0, B_pad - B), (0, 0), (0, 0)))
    h1 = h1.astype(jnp.bfloat16)

    PC = _pick_point_chunk(n, TB)
    T3 = _pick_out_tile(3 * n)
    grid = (B_pad // TB, pl.cdiv(3 * n, T3))           # partial last column block OK

    bf16 = lambda a: a.astype(jnp.bfloat16)
    f32row = lambda a: a.reshape(1, -1).astype(jnp.float32)

    resident = [bf16(w2), f32row(b2), bf16(w3), f32row(b3), bf16(w4), f32row(b4),
                s4, t4,
                bf16(dw1), f32row(db1), bf16(dw2), f32row(db2)]

    args = [h1] + resident + [bf16(dw3), f32row(db3)]

    in_specs = [pl.BlockSpec(memory_space=pl.ANY)]      # raw HBM ref, DMA'd in-kernel
    in_specs += [pl.BlockSpec(p.shape, lambda i, j: (0, 0)) for p in resident]
    in_specs += [pl.BlockSpec((2048, T3), lambda i, j: (0, j)),   # streamed weight
                 pl.BlockSpec((1, T3), lambda i, j: (0, j))]      # streamed bias

    kernel = _make_kernel(TB, PC, n, apply_pre_pool_bn=not fold_pre_pool)

    out_flat = pl.pallas_call(
        kernel,
        out_shape=jax.ShapeDtypeStruct((B_pad, 3 * n), jnp.float32),
        grid=grid,
        in_specs=in_specs,
        out_specs=pl.BlockSpec((TB, T3), lambda i, j: (i, j)),
        scratch_shapes=[pltpu.VMEM((TB, 2048), jnp.bfloat16),   # decoder hidden
                        pltpu.VMEM((TB, 512), jnp.float32)],    # running max
        compiler_params=pltpu.CompilerParams(
            dimension_semantics=("parallel", "arbitrary"),
            vmem_limit_bytes=_vmem_limit_bytes()),
    )(*args)
    # TODO(synk): for n >~ 4096 on v7x (64 MiB VMEM/TC), also stream dw2 (n, 2048)
    # in K slabs instead of keeping it VMEM-resident.

    return out_flat[:B].reshape(B, 3, n)    # matches reconstructed.view(-1, 3, n)


# ----------------------------------------------------------------------------
# Pure-JAX reference and parameter init
# ----------------------------------------------------------------------------
def reference_forward(x_ncl, raw_params, n):
    """Pure-JAX f32 reference with the same (eval-mode BN) semantics."""
    h = jnp.transpose(x_ncl, (0, 2, 1)).astype(jnp.float32)   # (B, n, 3)
    for i in range(4):
        W, b, g, bt, mu, var = raw_params[i]
        h = jnp.maximum(h @ W + b, 0.0)
        h = (h - mu) / jnp.sqrt(var + EPS) * g + bt
    latent = jnp.max(h, axis=1)                                # (B, 512)
    z = latent
    for i in range(4, 6):
        W, b, g, bt, mu, var = raw_params[i]
        z = jnp.maximum(z @ W + b, 0.0)
        z = (z - mu) / jnp.sqrt(var + EPS) * g + bt
    W, b = raw_params[6]
    out = z @ W + b
    return out.reshape(-1, 3, n)


def init_params(key, n):
    dims = [(3, 128), (128, 128), (128, 256), (256, 512),   # encoder 1x1 convs
            (512, n), (n, 2048), (2048, 3 * n)]             # decoder linears
    raw = []
    for i, (fin, fout) in enumerate(dims):
        key, kw, kb, kg, kbt, km, kv = jax.random.split(key, 7)
        W = jax.random.normal(kw, (fin, fout), jnp.float32) * 0.05
        b = jax.random.normal(kb, (fout,), jnp.float32) * 0.05
        if i < 6:   # layers followed by ReLU + BatchNorm
            gamma = jax.random.uniform(kg, (fout,), jnp.float32, 0.5, 1.5)
            beta = jax.random.normal(kbt, (fout,), jnp.float32) * 0.1
            mean = jax.random.normal(km, (fout,), jnp.float32) * 0.1
            var = jax.random.uniform(kv, (fout,), jnp.float32, 0.5, 1.5)
            raw.append((W, b, gamma, beta, mean, var))
        else:       # final Linear(2048, 3n)
            raw.append((W, b))
    return raw


if __name__ == "__main__":
    B, n = 2, 64
    key = jax.random.PRNGKey(0)
    kx, kp = jax.random.split(key)
    x = jax.random.normal(kx, (B, 3, n), jnp.float32)   # PyTorch NCL input layout
    raw_params = init_params(kp, n)

    out = vanilla_point_ae_forward(x, raw_params, n)
    out = jax.block_until_ready(out)

    ref = reference_forward(x, raw_params, n)
    assert out.shape == (B, 3, n), out.shape
    err = float(jnp.max(jnp.abs(out - ref)))
    scale = float(jnp.max(jnp.abs(ref)))
    # bf16 matmul operands (f32 accumulation) vs an f32 reference: allow ~5% of
    # the output dynamic range.
    assert err <= 5e-2 * max(scale, 1.0), f"mismatch vs reference: abs={err} scale={scale}"

    print("KERNEL_OK")
</pallas_src>

<mosaic_0001>
module attributes {stable_mosaic.version = 11 : i64} {
  func.func @kernel(%arg0: i32, %arg1: i32, %arg2: memref<2x64x128xbf16, #tpu.memory_space<any>>, %arg3: memref<128x128xbf16, #tpu.memory_space<vmem>>, %arg4: memref<1x128xf32, #tpu.memory_space<vmem>>, %arg5: memref<128x256xbf16, #tpu.memory_space<vmem>>, %arg6: memref<1x256xf32, #tpu.memory_space<vmem>>, %arg7: memref<256x512xbf16, #tpu.memory_space<vmem>>, %arg8: memref<1x512xf32, #tpu.memory_space<vmem>>, %arg9: memref<1x512xf32, #tpu.memory_space<vmem>>, %arg10: memref<1x512xf32, #tpu.memory_space<vmem>>, %arg11: memref<512x64xbf16, #tpu.memory_space<vmem>>, %arg12: memref<1x64xf32, #tpu.memory_space<vmem>>, %arg13: memref<64x2048xbf16, #tpu.memory_space<vmem>>, %arg14: memref<1x2048xf32, #tpu.memory_space<vmem>>, %arg15: memref<2048x192xbf16, #tpu.memory_space<vmem>>, %arg16: memref<1x192xf32, #tpu.memory_space<vmem>>, %arg17: memref<2x192xf32, #tpu.memory_space<vmem>>, %arg18: memref<2x2048xbf16, #tpu.memory_space<vmem>>, %arg19: memref<2x512xf32, #tpu.memory_space<vmem>>) attributes {dimension_semantics = [#tpu.dimension_semantics<parallel>, #tpu.dimension_semantics<arbitrary>], iteration_bounds = array<i64: 1, 1>, scalar_prefetch = 0 : i64, scratch_operands = 2 : i64, tpu.core_type = #tpu.core_type<tc>, window_params = [{}, {pipeline_mode = #tpu.pipeline_mode<synchronous>, transform_indices = @transform_1, window_bounds = array<i64: 128, 128>}, {pipeline_mode = #tpu.pipeline_mode<synchronous>, transform_indices = @transform_2, window_bounds = array<i64: 1, 128>}, {pipeline_mode = #tpu.pipeline_mode<synchronous>, transform_indices = @transform_3, window_bounds = array<i64: 128, 256>}, {pipeline_mode = #tpu.pipeline_mode<synchronous>, transform_indices = @transform_4, window_bounds = array<i64: 1, 256>}, {pipeline_mode = #tpu.pipeline_mode<synchronous>, transform_indices = @transform_5, window_bounds = array<i64: 256, 512>}, {pipeline_mode = #tpu.pipeline_mode<synchronous>, transform_indices = @transform_6, window_bounds = array<i64: 1, 512>}, {pipeline_mode = #tpu.pipeline_mode<synchronous>, transform_indices = @transform_7, window_bounds = array<i64: 1, 512>}, {pipeline_mode = #tpu.pipeline_mode<synchronous>, transform_indices = @transform_8, window_bounds = array<i64: 1, 512>}, {pipeline_mode = #tpu.pipeline_mode<synchronous>, transform_indices = @transform_9, window_bounds = array<i64: 512, 64>}, {pipeline_mode = #tpu.pipeline_mode<synchronous>, transform_indices = @transform_10, window_bounds = array<i64: 1, 64>}, {pipeline_mode = #tpu.pipeline_mode<synchronous>, transform_indices = @transform_11, window_bounds = array<i64: 64, 2048>}, {pipeline_mode = #tpu.pipeline_mode<synchronous>, transform_indices = @transform_12, window_bounds = array<i64: 1, 2048>}, {transform_indices = @transform_13, window_bounds = array<i64: 2048, 192>}, {transform_indices = @transform_14, window_bounds = array<i64: 1, 192>}, {transform_indices = @transform_15, window_bounds = array<i64: 2, 192>}]} {
    %c0_i32 = arith.constant 0 : i32
    %0 = arith.cmpi eq, %arg1, %c0_i32 : i32
    %1 = arith.extui %0 : i1 to i32
    %c0_i32_0 = arith.constant 0 : i32
    %2 = arith.cmpi ne, %1, %c0_i32_0 : i32
    scf.if %2 {
      %cst_8 = arith.constant 0xFF800000 : f32
      %10 = vector.broadcast %cst_8 : f32 to vector<2x512xf32>
      %c0_9 = arith.constant 0 : index
      %c0_10 = arith.constant 0 : index
      %11 = vector.load %arg19[%c0_9, %c0_10] : memref<2x512xf32, #tpu.memory_space<vmem>>, vector<2x512xf32>
      tpu.vector_store %arg19[%c0_9, %c0_10], %10 {strides = array<i32>} : memref<2x512xf32, #tpu.memory_space<vmem>>, vector<2x512xf32>,
      %c1_i32 = arith.constant 1 : i32
      %c1_i32_11 = arith.constant 1 : i32
      %12 = arith.muli %c1_i32, %c1_i32_11 : i32
      "tpu.region"() ({
        %alloca = memref.alloca() : memref<2x64x128xbf16, #tpu.memory_space<vmem>>
        %c0_i32_28 = arith.constant 0 : i32
        %32 = arith.cmpi sgt, %12, %c0_i32_28 : i32
        %33 = arith.extui %32 : i1 to i32
        %c0_i32_29 = arith.constant 0 : i32
        %34 = arith.cmpi ne, %33, %c0_i32_29 : i32
        scf.if %34 {
          %c1_i32_30 = arith.constant 1 : i32
          %c1_i32_31 = arith.constant 1 : i32
          %35 = arith.muli %c1_i32_30, %c1_i32_31 : i32
          %c1_i32_32 = arith.constant 1 : i32
          %36 = arith.subi %35, %c1_i32_32 : i32
          %c0_i32_33 = arith.constant 0 : i32
          %37 = arith.cmpi eq, %36, %c0_i32_33 : i32
          %true = arith.constant true
          %c0_i32_34 = arith.constant 0 : i32
          %c-1_i32 = arith.constant -1 : i32
          %38 = arith.select %true, %c-1_i32, %c0_i32_34 : i32
          %c-1_i32_35 = arith.constant -1 : i32
          %39 = arith.cmpi eq, %38, %c-1_i32_35 : i32
          %c0_i32_36 = arith.constant 0 : i32
          %40 = arith.select %39, %c0_i32_36, %38 : i32
          %true_37 = arith.constant true
          %c0_i32_38 = arith.constant 0 : i32
          %c1_i32_39 = arith.constant 1 : i32
          %41 = arith.select %true_37, %c1_i32_39, %c0_i32_38 : i32
          %c1_i32_40 = arith.constant 1 : i32
          %42 = arith.cmpi eq, %41, %c1_i32_40 : i32
          %c0_i32_41 = arith.constant 0 : i32
          %43 = arith.select %42, %c0_i32_41, %41 : i32
          %true_42 = arith.constant true
          %c0_i32_43 = arith.constant 0 : i32
          %c1_i32_44 = arith.constant 1 : i32
          %44 = arith.select %true_42, %c1_i32_44, %c0_i32_43 : i32
          %c1_i32_45 = arith.constant 1 : i32
          %45 = arith.cmpi eq, %44, %c1_i32_45 : i32
          %c0_i32_46 = arith.constant 0 : i32
          %46 = arith.select %45, %c0_i32_46, %44 : i32
          "tpu.region"() ({
            %68 = tpu.sem_alloc : memref<!tpu.dma_semaphore, #tpu.memory_space<semaphore_mem>>
            tpu.enqueue_dma source(%arg2 : memref<2x64x128xbf16, #tpu.memory_space<any>>) target(%alloca : memref<2x64x128xbf16, #tpu.memory_space<vmem>>) target_semaphore(%68 : memref<!tpu.dma_semaphore, #tpu.memory_space<semaphore_mem>>)
            tpu.wait_dma2 semaphore(%68 : memref<!tpu.dma_semaphore, #tpu.memory_space<semaphore_mem>>) src(%arg2 : memref<2x64x128xbf16, #tpu.memory_space<any>>) dst(%alloca : memref<2x64x128xbf16, #tpu.memory_space<vmem>>)
            tpu.yield
          }) : () -> ()
          %c0_i32_47 = arith.constant 0 : i32
          %c0_i32_48 = arith.constant 0 : i32
          %c0_i32_49 = arith.constant 0 : i32
          %c0_i32_50 = arith.constant 0 : i32
          %47 = arith.subi %12, %c0_i32_48 : i32
          %48 = arith.addi %c0_i32_48, %47 : i32
          %c1_i32_51 = arith.constant 1 : i32
          %49:2 = scf.for %arg20 = %c0_i32_48 to %48 step %c1_i32_51 iter_args(%arg21 = %c0_i32_49, %arg22 = %c0_i32_50) -> (i32, i32)  : i32 {
            %c1_i32_76 = arith.constant 1 : i32
            %c1_i32_77 = arith.constant 1 : i32
            %68 = arith.muli %c1_i32_76, %c1_i32_77 : i32
            %c0_i32_78 = arith.constant 0 : i32
            %69 = arith.cmpi eq, %arg20, %c0_i32_78 : i32
            %c1_i32_79 = arith.constant 1 : i32
            %70 = arith.subi %68, %c1_i32_79 : i32
            %71 = arith.cmpi eq, %arg20, %70 : i32
            %true_80 = arith.constant true
            %c0_i32_81 = arith.constant 0 : i32
            %c-1_i32_82 = arith.constant -1 : i32
            %72 = arith.select %true_80, %c-1_i32_82, %c0_i32_81 : i32
            %c-1_i32_83 = arith.constant -1 : i32
            %73 = arith.cmpi eq, %72, %c-1_i32_83 : i32
            %c0_i32_84 = arith.constant 0 : i32
            %74 = arith.select %73, %c0_i32_84, %72 : i32
            %true_85 = arith.constant true
            %c0_i32_86 = arith.constant 0 : i32
            %c1_i32_87 = arith.constant 1 : i32
            %75 = arith.select %true_85, %c1_i32_87, %c0_i32_86 : i32
            %c1_i32_88 = arith.constant 1 : i32
            %76 = arith.cmpi eq, %75, %c1_i32_88 : i32
            %c0_i32_89 = arith.constant 0 : i32
            %77 = arith.select %76, %c0_i32_89, %75 : i32
            %true_90 = arith.constant true
            %c0_i32_91 = arith.constant 0 : i32
            %c1_i32_92 = arith.constant 1 : i32
            %78 = arith.select %true_90, %c1_i32_92, %c0_i32_91 : i32
            %c1_i32_93 = arith.constant 1 : i32
            %79 = arith.cmpi eq, %78, %c1_i32_93 : i32
            %c0_i32_94 = arith.constant 0 : i32
            %80 = arith.select %79, %c0_i32_94, %78 : i32
            "tpu.trace_start"() <{level = 10 : i32, message = "ep_run_kernel"}> : () -> ()
            %c0_95 = arith.constant 0 : index
            %c0_96 = arith.constant 0 : index
            %c0_97 = arith.constant 0 : index
            %81 = vector.load %alloca[%c0_95, %c0_96, %c0_97] : memref<2x64x128xbf16, #tpu.memory_space<vmem>>, vector<2x64x128xbf16>
            %82 = vector.shape_cast %81 : vector<2x64x128xbf16> to vector<128x128xbf16>
            %c0_98 = arith.constant 0 : index
            %c0_99 = arith.constant 0 : index
            %83 = vector.load %arg3[%c0_98, %c0_99] : memref<128x128xbf16, #tpu.memory_space<vmem>>, vector<128x128xbf16>
            %cst_100 = arith.constant dense<0.000000e+00> : vector<128x128xf32>
            %84 = tpu.matmul %82, %83, %cst_100 {dimension_numbers = #tpu.dot_dimension_numbers<[1], [0], [0], [1], [0, 0, 1, 1], [], []>} : vector<128x128xbf16>, vector<128x128xbf16>, vector<128x128xf32> -> vector<128x128xf32>
            %c0_101 = arith.constant 0 : index
            %c0_102 = arith.constant 0 : index
            %85 = vector.load %arg4[%c0_101, %c0_102] : memref<1x128xf32, #tpu.memory_space<vmem>>, vector<1x128xf32>
            %86 = vector.broadcast %85 : vector<1x128xf32> to vector<128x128xf32>
            %87 = arith.addf %84, %86 : vector<128x128xf32>
            %cst_103 = arith.constant 0.000000e+00 : f32
            %88 = vector.broadcast %cst_103 : f32 to vector<128x128xf32>
            %89 = arith.maximumf %87, %88 : vector<128x128xf32>
            %90 = arith.truncf %89 : vector<128x128xf32> to vector<128x128xbf16>
            %c0_104 = arith.constant 0 : index
            %c0_105 = arith.constant 0 : index
            %91 = vector.load %arg5[%c0_104, %c0_105] : memref<128x256xbf16, #tpu.memory_space<vmem>>, vector<128x256xbf16>
            %cst_106 = arith.constant dense<0.000000e+00> : vector<128x256xf32>
            %92 = tpu.matmul %90, %91, %cst_106 {dimension_numbers = #tpu.dot_dimension_numbers<[1], [0], [0], [1], [0, 0, 1, 1], [], []>} : vector<128x128xbf16>, vector<128x256xbf16>, vector<128x256xf32> -> vector<128x256xf32>
            %c0_107 = arith.constant 0 : index
            %c0_108 = arith.constant 0 : index
            %93 = vector.load %arg6[%c0_107, %c0_108] : memref<1x256xf32, #tpu.memory_space<vmem>>, vector<1x256xf32>
            %94 = vector.broadcast %93 : vector<1x256xf32> to vector<128x256xf32>
            %95 = arith.addf %92, %94 : vector<128x256xf32>
            %cst_109 = arith.constant 0.000000e+00 : f32
            %96 = vector.broadcast %cst_109 : f32 to vector<128x256xf32>
            %97 = arith.maximumf %95, %96 : vector<128x256xf32>
            %98 = arith.truncf %97 : vector<128x256xf32> to vector<128x256xbf16>
            %c0_110 = arith.constant 0 : index
            %c0_111 = arith.constant 0 : index
            %99 = vector.load %arg7[%c0_110, %c0_111] : memref<256x512xbf16, #tpu.memory_space<vmem>>, vector<256x512xbf16>
            %cst_112 = arith.constant dense<0.000000e+00> : vector<128x512xf32>
            %100 = tpu.matmul %98, %99, %cst_112 {dimension_numbers = #tpu.dot_dimension_numbers<[1], [0], [0], [1], [0, 0, 1, 1], [], []>} : vector<128x256xbf16>, vector<256x512xbf16>, vector<128x512xf32> -> vector<128x512xf32>
            %c0_113 = arith.constant 0 : index
            %c0_114 = arith.constant 0 : index
            %101 = vector.load %arg8[%c0_113, %c0_114] : memref<1x512xf32, #tpu.memory_space<vmem>>, vector<1x512xf32>
            %102 = vector.broadcast %101 : vector<1x512xf32> to vector<128x512xf32>
            %103 = arith.addf %100, %102 : vector<128x512xf32>
            %cst_115 = arith.constant 0.000000e+00 : f32
            %104 = vector.broadcast %cst_115 : f32 to vector<128x512xf32>
            %105 = arith.maximumf %103, %104 : vector<128x512xf32>
            %106 = vector.shape_cast %105 : vector<128x512xf32> to vector<2x64x512xf32>
            %cst_116 = arith.constant dense<0xFF800000> : vector<2x512xf32>
            %107 = vector.multi_reduction <maximumf>, %106, %cst_116 [1] : vector<2x64x512xf32> to vector<2x512xf32>
            %c0_117 = arith.constant 0 : index
            %c0_118 = arith.constant 0 : index
            %108 = vector.load %arg19[%c0_117, %c0_118] : memref<2x512xf32, #tpu.memory_space<vmem>>, vector<2x512xf32>
            %109 = arith.maximumf %108, %107 : vector<2x512xf32>
            %c0_119 = arith.constant 0 : index
            %c0_120 = arith.constant 0 : index
            %110 = vector.load %arg19[%c0_119, %c0_120] : memref<2x512xf32, #tpu.memory_space<vmem>>, vector<2x512xf32>
            tpu.vector_store %arg19[%c0_119, %c0_120], %109 {strides = array<i32>} : memref<2x512xf32, #tpu.memory_space<vmem>>, vector<2x512xf32>,
            "tpu.trace_stop"() : () -> ()
            %false = arith.constant false
            %111 = arith.ori %false, %71 : i1
            %c1_i32_121 = arith.constant 1 : i32
            %112 = arith.addi %arg21, %c1_i32_121 : i32
            %113 = arith.select %111, %112, %arg21 : i32
            %true_122 = arith.constant true
            %c0_i32_123 = arith.constant 0 : i32
            %c1_i32_124 = arith.constant 1 : i32
            %114 = arith.select %true_122, %c1_i32_124, %c0_i32_123 : i32
            %c1_i32_125 = arith.constant 1 : i32
            %115 = arith.cmpi eq, %114, %c1_i32_125 : i32
            %c0_i32_126 = arith.constant 0 : i32
            %116 = arith.select %115, %c0_i32_126, %114 : i32
            %c0_i32_127 = arith.constant 0 : i32
            scf.yield %113, %c0_i32_127 : i32, i32
          }
          %c1_i32_52 = arith.constant 1 : i32
          %50 = arith.subi %49#1, %c1_i32_52 : i32
          %true_53 = arith.constant true
          %51 = arith.select %true_53, %50, %49#1 : i32
          %c-1_i32_54 = arith.constant -1 : i32
          %52 = arith.cmpi eq, %51, %c-1_i32_54 : i32
          %c0_i32_55 = arith.constant 0 : i32
          %53 = arith.select %52, %c0_i32_55, %51 : i32
          %c1_i32_56 = arith.constant 1 : i32
          %54 = arith.subi %12, %c1_i32_56 : i32
          %c1_i32_57 = arith.constant 1 : i32
          %c1_i32_58 = arith.constant 1 : i32
          %55 = arith.muli %c1_i32_57, %c1_i32_58 : i32
          %c0_i32_59 = arith.constant 0 : i32
          %56 = arith.cmpi eq, %54, %c0_i32_59 : i32
          %c1_i32_60 = arith.constant 1 : i32
          %57 = arith.subi %55, %c1_i32_60 : i32
          %58 = arith.cmpi eq, %54, %57 : i32
          %true_61 = arith.constant true
          %c0_i32_62 = arith.constant 0 : i32
          %c-1_i32_63 = arith.constant -1 : i32
          %59 = arith.select %true_61, %c-1_i32_63, %c0_i32_62 : i32
          %c-1_i32_64 = arith.constant -1 : i32
          %60 = arith.cmpi eq, %59, %c-1_i32_64 : i32
          %c0_i32_65 = arith.constant 0 : i32
          %61 = arith.select %60, %c0_i32_65, %59 : i32
          %true_66 = arith.constant true
          %c0_i32_67 = arith.constant 0 : i32
          %c1_i32_68 = arith.constant 1 : i32
          %62 = arith.select %true_66, %c1_i32_68, %c0_i32_67 : i32
          %c1_i32_69 = arith.constant 1 : i32
          %63 = arith.cmpi eq, %62, %c1_i32_69 : i32
          %c0_i32_70 = arith.constant 0 : i32
          %64 = arith.select %63, %c0_i32_70, %62 : i32
          %true_71 = arith.constant true
          %c0_i32_72 = arith.constant 0 : i32
          %c1_i32_73 = arith.constant 1 : i32
          %65 = arith.select %true_71, %c1_i32_73, %c0_i32_72 : i32
          %c1_i32_74 = arith.constant 1 : i32
          %66 = arith.cmpi eq, %65, %c1_i32_74 : i32
          %c0_i32_75 = arith.constant 0 : i32
          %67 = arith.select %66, %c0_i32_75, %65 : i32
        } else {
        }
        tpu.yield
      }) : () -> ()
      %c0_12 = arith.constant 0 : index
      %c0_13 = arith.constant 0 : index
      %13 = vector.load %arg19[%c0_12, %c0_13] : memref<2x512xf32, #tpu.memory_space<vmem>>, vector<2x512xf32>
      %14 = arith.truncf %13 : vector<2x512xf32> to vector<2x512xbf16>
      %c0_14 = arith.constant 0 : index
      %c0_15 = arith.constant 0 : index
      %15 = vector.load %arg11[%c0_14, %c0_15] : memref<512x64xbf16, #tpu.memory_space<vmem>>, vector<512x64xbf16>
      %cst_16 = arith.constant dense<0.000000e+00> : vector<2x64xf32>
      %16 = tpu.matmul %14, %15, %cst_16 {dimension_numbers = #tpu.dot_dimension_numbers<[1], [0], [0], [1], [0, 0, 1, 1], [], []>} : vector<2x512xbf16>, vector<512x64xbf16>, vector<2x64xf32> -> vector<2x64xf32>
      %c0_17 = arith.constant 0 : index
      %c0_18 = arith.constant 0 : index
      %17 = vector.load %arg12[%c0_17, %c0_18] : memref<1x64xf32, #tpu.memory_space<vmem>>, vector<1x64xf32>
      %18 = vector.broadcast %17 : vector<1x64xf32> to vector<2x64xf32>
      %19 = arith.addf %16, %18 : vector<2x64xf32>
      %cst_19 = arith.constant 0.000000e+00 : f32
      %20 = vector.broadcast %cst_19 : f32 to vector<2x64xf32>
      %21 = arith.maximumf %19, %20 : vector<2x64xf32>
      %22 = arith.truncf %21 : vector<2x64xf32> to vector<2x64xbf16>
      %c0_20 = arith.constant 0 : index
      %c0_21 = arith.constant 0 : index
      %23 = vector.load %arg13[%c0_20, %c0_21] : memref<64x2048xbf16, #tpu.memory_space<vmem>>, vector<64x2048xbf16>
      %cst_22 = arith.constant dense<0.000000e+00> : vector<2x2048xf32>
      %24 = tpu.matmul %22, %23, %cst_22 {dimension_numbers = #tpu.dot_dimension_numbers<[1], [0], [0], [1], [0, 0, 1, 1], [], []>} : vector<2x64xbf16>, vector<64x2048xbf16>, vector<2x2048xf32> -> vector<2x2048xf32>
      %c0_23 = arith.constant 0 : index
      %c0_24 = arith.constant 0 : index
      %25 = vector.load %arg14[%c0_23, %c0_24] : memref<1x2048xf32, #tpu.memory_space<vmem>>, vector<1x2048xf32>
      %26 = vector.broadcast %25 : vector<1x2048xf32> to vector<2x2048xf32>
      %27 = arith.addf %24, %26 : vector<2x2048xf32>
      %cst_25 = arith.constant 0.000000e+00 : f32
      %28 = vector.broadcast %cst_25 : f32 to vector<2x2048xf32>
      %29 = arith.maximumf %27, %28 : vector<2x2048xf32>
      %30 = arith.truncf %29 : vector<2x2048xf32> to vector<2x2048xbf16>
      %c0_26 = arith.constant 0 : index
      %c0_27 = arith.constant 0 : index
      %31 = vector.load %arg18[%c0_26, %c0_27] : memref<2x2048xbf16, #tpu.memory_space<vmem>>, vector<2x2048xbf16>
      tpu.vector_store %arg18[%c0_26, %c0_27], %30 {strides = array<i32>} : memref<2x2048xbf16, #tpu.memory_space<vmem>>, vector<2x2048xbf16>,
    } else {
    }
    %c0 = arith.constant 0 : index
    %c0_1 = arith.constant 0 : index
    %3 = vector.load %arg18[%c0, %c0_1] : memref<2x2048xbf16, #tpu.memory_space<vmem>>, vector<2x2048xbf16>
    %c0_2 = arith.constant 0 : index
    %c0_3 = arith.constant 0 : index
    %4 = vector.load %arg15[%c0_2, %c0_3] : memref<2048x192xbf16, #tpu.memory_space<vmem>>, vector<2048x192xbf16>
    %cst = arith.constant dense<0.000000e+00> : vector<2x192xf32>
    %5 = tpu.matmul %3, %4, %cst {dimension_numbers = #tpu.dot_dimension_numbers<[1], [0], [0], [1], [0, 0, 1, 1], [], []>} : vector<2x2048xbf16>, vector<2048x192xbf16>, vector<2x192xf32> -> vector<2x192xf32>
    %c0_4 = arith.constant 0 : index
    %c0_5 = arith.constant 0 : index
    %6 = vector.load %arg16[%c0_4, %c0_5] : memref<1x192xf32, #tpu.memory_space<vmem>>, vector<1x192xf32>
    %7 = vector.broadcast %6 : vector<1x192xf32> to vector<2x192xf32>
    %8 = arith.addf %5, %7 : vector<2x192xf32>
    %c0_6 = arith.constant 0 : index
    %c0_7 = arith.constant 0 : index
    %9 = vector.load %arg17[%c0_6, %c0_7] : memref<2x192xf32, #tpu.memory_space<vmem>>, vector<2x192xf32>
    tpu.vector_store %arg17[%c0_6, %c0_7], %8 {strides = array<i32>} : memref<2x192xf32, #tpu.memory_space<vmem>>, vector<2x192xf32>,
    return
  }
  func.func @transform_1(%arg0: i32, %arg1: i32) -> (i32, i32) {
    %c0_i32 = arith.constant 0 : i32
    %c0_i32_0 = arith.constant 0 : i32
    %c0_i32_1 = arith.constant 0 : i32
    return %c0_i32, %c0_i32_0 : i32, i32
  }
  func.func @transform_2(%arg0: i32, %arg1: i32) -> (i32, i32) {
    %c0_i32 = arith.constant 0 : i32
    %c0_i32_0 = arith.constant 0 : i32
    %c0_i32_1 = arith.constant 0 : i32
    return %c0_i32, %c0_i32_0 : i32, i32
  }
  func.func @transform_3(%arg0: i32, %arg1: i32) -> (i32, i32) {
    %c0_i32 = arith.constant 0 : i32
    %c0_i32_0 = arith.constant 0 : i32
    %c0_i32_1 = arith.constant 0 : i32
    return %c0_i32, %c0_i32_0 : i32, i32
  }
  func.func @transform_4(%arg0: i32, %arg1: i32) -> (i32, i32) {
    %c0_i32 = arith.constant 0 : i32
    %c0_i32_0 = arith.constant 0 : i32
    %c0_i32_1 = arith.constant 0 : i32
    return %c0_i32, %c0_i32_0 : i32, i32
  }
  func.func @transform_5(%arg0: i32, %arg1: i32) -> (i32, i32) {
    %c0_i32 = arith.constant 0 : i32
    %c0_i32_0 = arith.constant 0 : i32
    %c0_i32_1 = arith.constant 0 : i32
    return %c0_i32, %c0_i32_0 : i32, i32
  }
  func.func @transform_6(%arg0: i32, %arg1: i32) -> (i32, i32) {
    %c0_i32 = arith.constant 0 : i32
    %c0_i32_0 = arith.constant 0 : i32
    %c0_i32_1 = arith.constant 0 : i32
    return %c0_i32, %c0_i32_0 : i32, i32
  }
  func.func @transform_7(%arg0: i32, %arg1: i32) -> (i32, i32) {
    %c0_i32 = arith.constant 0 : i32
    %c0_i32_0 = arith.constant 0 : i32
    %c0_i32_1 = arith.constant 0 : i32
    return %c0_i32, %c0_i32_0 : i32, i32
  }
  func.func @transform_8(%arg0: i32, %arg1: i32) -> (i32, i32) {
    %c0_i32 = arith.constant 0 : i32
    %c0_i32_0 = arith.constant 0 : i32
    %c0_i32_1 = arith.constant 0 : i32
    return %c0_i32, %c0_i32_0 : i32, i32
  }
  func.func @transform_9(%arg0: i32, %arg1: i32) -> (i32, i32) {
    %c0_i32 = arith.constant 0 : i32
    %c0_i32_0 = arith.constant 0 : i32
    %c0_i32_1 = arith.constant 0 : i32
    return %c0_i32, %c0_i32_0 : i32, i32
  }
  func.func @transform_10(%arg0: i32, %arg1: i32) -> (i32, i32) {
    %c0_i32 = arith.constant 0 : i32
    %c0_i32_0 = arith.constant 0 : i32
    %c0_i32_1 = arith.constant 0 : i32
    return %c0_i32, %c0_i32_0 : i32, i32
  }
  func.func @transform_11(%arg0: i32, %arg1: i32) -> (i32, i32) {
    %c0_i32 = arith.constant 0 : i32
    %c0_i32_0 = arith.constant 0 : i32
    %c0_i32_1 = arith.constant 0 : i32
    return %c0_i32, %c0_i32_0 : i32, i32
  }
  func.func @transform_12(%arg0: i32, %arg1: i32) -> (i32, i32) {
    %c0_i32 = arith.constant 0 : i32
    %c0_i32_0 = arith.constant 0 : i32
    %c0_i32_1 = arith.constant 0 : i32
    return %c0_i32, %c0_i32_0 : i32, i32
  }
  func.func @transform_13(%arg0: i32, %arg1: i32) -> (i32, i32) {
    %c0_i32 = arith.constant 0 : i32
    %c0_i32_0 = arith.constant 0 : i32
    return %c0_i32, %arg1 : i32, i32
  }
  func.func @transform_14(%arg0: i32, %arg1: i32) -> (i32, i32) {
    %c0_i32 = arith.constant 0 : i32
    %c0_i32_0 = arith.constant 0 : i32
    return %c0_i32, %arg1 : i32, i32
  }
  func.func @transform_15(%arg0: i32, %arg1: i32) -> (i32, i32) {
    %c0_i32 = arith.constant 0 : i32
    return %arg0, %arg1 : i32, i32
  }
}

</mosaic_0001>

<llo_original>
// kernel: tpu_custom_call.1
$region0: #{tpu_custom_call.1}
  #allocation0 [shape = 'u32[]', space=smem, size = 0x4, offset = 0x4, fixed_abs, tag = 'smem constant byte address 0x4 - core index']
  #allocation1 [shape = 'u32[144,128]{1,0:T(1,128)}', space=vmem, size = 0x12000, scoped, tag = 'internal scratch']
  #allocation2 [shape = 'bf16[2,2048]{1,0:T(2,128)(2,1)}', space=vmem, size = 0x2000, scoped, tag = 'scratch operand']
  #allocation3 [shape = 'f32[2,512]{1,0:T(2,128)}', space=vmem, size = 0x1000, scoped, tag = 'scratch operand']
  #allocation8 [shape = 's32[]', space=sflag, size = 0x4, offset = 0, fixed_abs, tag = 'sflag constant byte address 0x0 - dummy sync flag']
  %s0 = inlined_call_operand.vmem [shape: bf16[2,64,128], index: 0, kind: input, shape index: {}]
  %s1 = inlined_call_operand.vmem [shape: bf16[128,128], index: 1, kind: input, shape index: {}]
  %s2 = inlined_call_operand.vmem [shape: f32[1,128], index: 2, kind: input, shape index: {}]
  %s3 = inlined_call_operand.vmem [shape: bf16[128,256], index: 3, kind: input, shape index: {}]
  %s4 = inlined_call_operand.vmem [shape: f32[1,256], index: 4, kind: input, shape index: {}]
  %s5 = inlined_call_operand.vmem [shape: bf16[256,512], index: 5, kind: input, shape index: {}]
  %s6 = inlined_call_operand.vmem [shape: f32[1,512], index: 6, kind: input, shape index: {}]
  %s7 = inlined_call_operand.vmem [shape: f32[1,512], index: 7, kind: input, shape index: {}]
  %s8 = inlined_call_operand.vmem [shape: f32[1,512], index: 8, kind: input, shape index: {}]
  %s9 = inlined_call_operand.vmem [shape: bf16[512,64], index: 9, kind: input, shape index: {}]
  %s10 = inlined_call_operand.vmem [shape: f32[1,64], index: 10, kind: input, shape index: {}]
  %s11 = inlined_call_operand.vmem [shape: bf16[64,2048], index: 11, kind: input, shape index: {}]
  %s12 = inlined_call_operand.vmem [shape: f32[1,2048], index: 12, kind: input, shape index: {}]
  %s13 = inlined_call_operand.vmem [shape: bf16[2048,192], index: 13, kind: input, shape index: {}]
  %s14 = inlined_call_operand.vmem [shape: f32[1,192], index: 14, kind: input, shape index: {}]
  %s15 = inlined_call_operand.hbm [shape: f32[2,192], index: 15, kind: output, shape index: {}]
  %s16 = sld [smem:[#allocation0]]
  $region106: #{tpu_custom_call.1} parent=0
    _
  %s18 = ssub.s32 1, %s16
  %s19 = scalar_select 0, %s18, %s16
  $region1: #{tpu_custom_call.1} parent=0
    #allocation4 [shape = 'u8[2048]{0}', space=vmem, size = 0x800, scoped, tag = 'output window, operand 0, single buffered']
    #allocation5 [shape = 's32[1]{0}', space=sflag, size = 0x4, scoped, tag = 'scoped memory for tpu_custom_call.1']
    %20 = vsyncpa [#allocation5], 0
    // Predicated region
    $region2: #{tpu_custom_call.1} parent=1 // pred_check
      _
    $region3: #{tpu_custom_call.1} parent=1 // pred_check_branch
      %22 = sbr.rel (0) target = $region5
    $region4: #{tpu_custom_call.1} parent=1 // pred_region
      _
    $region5: #{tpu_custom_call.1} parent=1 // pred_fallthru
      _
    // Predicated region
    $region6: #{tpu_custom_call.1} parent=1 // pred_check
      _
    $region7: #{tpu_custom_call.1} parent=1 // pred_check_branch
      %24 = sbr.rel (0) target = $region9
    $region8: #{tpu_custom_call.1} parent=1 // pred_region
      _
    $region9: #{tpu_custom_call.1} parent=1 // pred_fallthru
      _
    // Predicated region
    $region10: #{tpu_custom_call.1} parent=1 // pred_check
      _
    $region11: #{tpu_custom_call.1} parent=1 // pred_check_branch
      %26 = sbr.rel (0) target = $region13
    $region12: #{tpu_custom_call.1} parent=1 // pred_region
      _
    $region13: #{tpu_custom_call.1} parent=1 // pred_fallthru
      _
    // Predicated region
    $region14: #{tpu_custom_call.1} parent=1 // pred_check
      _
    $region15: #{tpu_custom_call.1} parent=1 // pred_check_branch
      %28 = sbr.rel (0) target = $region17
    $region16: #{tpu_custom_call.1} parent=1 // pred_region
      _
    $region17: #{tpu_custom_call.1} parent=1 // pred_fallthru
      _
    // Predicated region
    $region18: #{tpu_custom_call.1} parent=1 // pred_check
      _
    $region19: #{tpu_custom_call.1} parent=1 // pred_check_branch
      %30 = sbr.rel (0) target = $region21
    $region20: #{tpu_custom_call.1} parent=1 // pred_region
      _
    $region21: #{tpu_custom_call.1} parent=1 // pred_fallthru
      _
    // Predicated region
    $region22: #{tpu_custom_call.1} parent=1 // pred_check
      _
    $region23: #{tpu_custom_call.1} parent=1 // pred_check_branch
      %32 = sbr.rel (0) target = $region25
    $region24: #{tpu_custom_call.1} parent=1 // pred_region
      _
    $region25: #{tpu_custom_call.1} parent=1 // pred_fallthru
      _
    // Predicated region
    $region26: #{tpu_custom_call.1} parent=1 // pred_check
      _
    $region27: #{tpu_custom_call.1} parent=1 // pred_check_branch
      %34 = sbr.rel (0) target = $region29
    $region28: #{tpu_custom_call.1} parent=1 // pred_region
      _
    $region29: #{tpu_custom_call.1} parent=1 // pred_fallthru
      _
    // Predicated region
    $region30: #{tpu_custom_call.1} parent=1 // pred_check
      _
    $region31: #{tpu_custom_call.1} parent=1 // pred_check_branch
      %36 = sbr.rel (0) target = $region33
    $region32: #{tpu_custom_call.1} parent=1 // pred_region
      _
    $region33: #{tpu_custom_call.1} parent=1 // pred_fallthru
      _
    // Predicated region
    $region34: #{tpu_custom_call.1} parent=1 // pred_check
      _
    $region35: #{tpu_custom_call.1} parent=1 // pred_check_branch
      %38 = sbr.rel (0) target = $region37
    $region36: #{tpu_custom_call.1} parent=1 // pred_region
      _
    $region37: #{tpu_custom_call.1} parent=1 // pred_fallthru
      _
    // Predicated region
    $region38: #{tpu_custom_call.1} parent=1 // pred_check
      _
    $region39: #{tpu_custom_call.1} parent=1 // pred_check_branch
      %40 = sbr.rel (0) target = $region41
    $region40: #{tpu_custom_call.1} parent=1 // pred_region
      _
    $region41: #{tpu_custom_call.1} parent=1 // pred_fallthru
      _
    // Predicated region
    $region42: #{tpu_custom_call.1} parent=1 // pred_check
      _
    $region43: #{tpu_custom_call.1} parent=1 // pred_check_branch
      %42 = sbr.rel (0) target = $region45
    $region44: #{tpu_custom_call.1} parent=1 // pred_region
      _
    $region45: #{tpu_custom_call.1} parent=1 // pred_fallthru
      _
    // Predicated region
    $region46: #{tpu_custom_call.1} parent=1 // pred_check
      _
    $region47: #{tpu_custom_call.1} parent=1 // pred_check_branch
      %44 = sbr.rel (0) target = $region49
    $region48: #{tpu_custom_call.1} parent=1 // pred_region
      _
    $region49: #{tpu_custom_call.1} parent=1 // pred_fallthru
      _
    // Predicated region
    $region50: #{tpu_custom_call.1} parent=1 // pred_check
      _
    $region51: #{tpu_custom_call.1} parent=1 // pred_check_branch
      %46 = sbr.rel (0) target = $region53
    $region52: #{tpu_custom_call.1} parent=1 // pred_region
      _
    $region53: #{tpu_custom_call.1} parent=1 // pred_fallthru
      _
    // Predicated region
    $region54: #{tpu_custom_call.1} parent=1 // pred_check
      _
    $region55: #{tpu_custom_call.1} parent=1 // pred_check_branch
      %48 = sbr.rel (0) target = $region57
    $region56: #{tpu_custom_call.1} parent=1 // pred_region
      _
    $region57: #{tpu_custom_call.1} parent=1 // pred_fallthru
      _
    %p50 = scmp.eq.s32.totalorder 0, 0
    // Predicated region
    $region58: #{tpu_custom_call.1} parent=1 // pred_check
      %p51 = pneg %p50
    $region59: #{tpu_custom_call.1} parent=1 // pred_check_branch
      %53 = sbr.rel (%p51) target = $region61
    $region60: #{tpu_custom_call.1} parent=1 // pred_region
      %54 = vst [vmem:[#allocation3] sm:$0xff] -inf
      $region62: #{tpu_custom_call.1} parent=60
        #allocation6 [shape = 'u8[32768]{0}', space=vmem, size = 0x8000, scoped, tag = 'scoped memory for tpu_custom_call.1']
        $region63: #{tpu_custom_call.1} parent=62
          #allocation7 [shape = 's32[1]{0}', space=sflag, size = 0x4, scoped, tag = 'scoped memory for tpu_custom_call.1']
          %p56 = scmp.lt.u32.totalorder 64, 8
          %p57 = pneg %p56
          // Predicated region
          $region64: #{tpu_custom_call.1} parent=63 // pred_check
            _
          $region65: #{tpu_custom_call.1} parent=63 // pred_check_branch
            %59 = sbr.rel (%p56) target = $region67
          $region66: #{tpu_custom_call.1} parent=63 // pred_region
            %s74 = sand.u32 64, 7
            %p75 = scmp.eq.s32.totalorder %s74, 0
            // Predicated region
            $region79: #{tpu_custom_call.1} parent=66 // pred_check
              %p76 = pneg %p75
            $region80: #{tpu_custom_call.1} parent=66 // pred_check_branch
              %78 = sbr.rel (%p76) target = $region82
            $region81: #{tpu_custom_call.1} parent=66 // pred_region
              loop: start=0, step=1, limit=1
              $region83: #{tpu_custom_call.1} parent=81 // loop_pre_header
                _
              $region84: #{tpu_custom_call.1} parent=81 // loop_header
                %s80 = sphi 0, %s84
                %p81 = scmp.ge.s32.totalorder %s80, 1
                %s85 = sphi %s0, %s0
                %s86 = sphi [#allocation6], [#allocation6]
              $region85: #{tpu_custom_call.1} parent=81 // loop_header_branch
                %83 = sbr.rel (%p81) target = $region89
              $region86: #{tpu_custom_call.1} parent=81 // loop_body
                %v87 = vld [vmem:[%s85] sm:$0xff]
                %88 = vst [vmem:[%s86] sm:$0xff] %v87
                %v89 = vld [vmem:[%s85 + $0x8] sm:$0xff]
                %90 = vst [vmem:[%s86 + $0x8] sm:$0xff] %v89
                %v91 = vld [vmem:[%s85 + $0x10] sm:$0xff]
                %92 = vst [vmem:[%s86 + $0x10] sm:$0xff] %v91
                %v93 = vld [vmem:[%s85 + $0x18] sm:$0xff]
                %94 = vst [vmem:[%s86 + $0x18] sm:$0xff] %v93
                %v95 = vld [vmem:[%s85 + $0x20] sm:$0xff]
                %96 = vst [vmem:[%s86 + $0x20] sm:$0xff] %v95
                %v97 = vld [vmem:[%s85 + $0x28] sm:$0xff]
                %98 = vst [vmem:[%s86 + $0x28] sm:$0xff] %v97
                %v99 = vld [vmem:[%s85 + $0x30] sm:$0xff]
                %100 = vst [vmem:[%s86 + $0x30] sm:$0xff] %v99
                %v101 = vld [vmem:[%s85 + $0x38] sm:$0xff]
                %102 = vst [vmem:[%s86 + $0x38] sm:$0xff] %v101
              $region87: #{tpu_custom_call.1} parent=81 // loop_footer
                %s84 = sadd.s32 1, %s80
              $region88: #{tpu_custom_call.1} parent=81 // loop_footer_branch
                %79 = sbr.rel target = $region84
              $region89: #{tpu_custom_call.1} parent=81 // loop_exit
                _
            $region82: #{tpu_custom_call.1} parent=66 // pred_fallthru
              _
            %p103 = pneg %p75
            // Predicated region
            $region90: #{tpu_custom_call.1} parent=66 // pred_check
              _
            $region91: #{tpu_custom_call.1} parent=66 // pred_check_branch
              %105 = sbr.rel (%p75) target = $region93
            $region92: #{tpu_custom_call.1} parent=66 // pred_region
              %s106 = sand.u32 64, 7
            $region93: #{tpu_custom_call.1} parent=66 // pred_fallthru
              _
          $region67: #{tpu_custom_call.1} parent=63 // pred_fallthru
            _
          // Predicated region
          $region68: #{tpu_custom_call.1} parent=63 // pred_check
            %p60 = pneg %p56
          $region69: #{tpu_custom_call.1} parent=63 // pred_check_branch
            %62 = sbr.rel (%p60) target = $region71
          $region70: #{tpu_custom_call.1} parent=63 // pred_region
            %s63 = sshllo.u32 0, 64
            loop: start=0, step=1, limit=1
            $region72: #{tpu_custom_call.1} parent=70 // loop_pre_header
              _
            $region73: #{tpu_custom_call.1} parent=70 // loop_header
              %s65 = sphi 0, %s69
              %p66 = scmp.ge.s32.totalorder %s65, 1
              %s70 = sphi %s0, %s0
              %s71 = sphi [#allocation6], [#allocation6]
            $region74: #{tpu_custom_call.1} parent=70 // loop_header_branch
              %68 = sbr.rel (%p66) target = $region78
            $region75: #{tpu_custom_call.1} parent=70 // loop_body
              %v72 = vld [vmem:[%s70] sm:%s63]
              %73 = vst [vmem:[%s71] sm:%s63] %v72
            $region76: #{tpu_custom_call.1} parent=70 // loop_footer
              %s69 = sadd.s32 1, %s65
            $region77: #{tpu_custom_call.1} parent=70 // loop_footer_branch
              %64 = sbr.rel target = $region73
            $region78: #{tpu_custom_call.1} parent=70 // loop_exit
              _
          $region71: #{tpu_custom_call.1} parent=63 // pred_fallthru
            _
          // Predicated region
          $region94: #{tpu_custom_call.1} parent=63 // pred_check
            _
          $region95: #{tpu_custom_call.1} parent=63 // pred_check_branch
            %109 = sbr.rel (0) target = $region97
          $region96: #{tpu_custom_call.1} parent=63 // pred_region
            %110 = vsyncadd [#allocation7], 1024
          $region97: #{tpu_custom_call.1} parent=63 // pred_fallthru
            _
          %s111 = smul.u32 4, 2
          %s112 = smul.u32 %s111, 8
          %s113 = smul.u32 %s112, 1
          %s114 = sshll.u32 %s113, 4
          %115 = dma.done [#allocation7], %s114
        %v116 = vld [vmem:[#allocation6] sm:$0xff]
        %v117 = vld [vmem:[#allocation6 + $0x8] sm:$0xff]
        %v118 = vld [vmem:[#allocation6 + $0x10] sm:$0xff]
        %v119 = vld [vmem:[#allocation6 + $0x18] sm:$0xff]
        %v120 = vld [vmem:[#allocation6 + $0x20] sm:$0xff]
        %v121 = vld [vmem:[#allocation6 + $0x28] sm:$0xff]
        %v122 = vld [vmem:[#allocation6 + $0x30] sm:$0xff]
        %v123 = vld [vmem:[#allocation6 + $0x38] sm:$0xff]
        %v124 = vld [vmem:[%s1] sm:$0xf]
        %v125 = vld [vmem:[%s1 + $0x4] sm:$0xf]
        %v126 = vld [vmem:[%s1 + $0x8] sm:$0xf]
        %v127 = vld [vmem:[%s1 + $0xc] sm:$0xf]
        %v128 = vld [vmem:[%s1 + $0x10] sm:$0xf]
        %v129 = vld [vmem:[%s1 + $0x14] sm:$0xf]
        %v130 = vld [vmem:[%s1 + $0x18] sm:$0xf]
        %v131 = vld [vmem:[%s1 + $0x1c] sm:$0xf]
        %v132 = vld [vmem:[%s1 + $0x20] sm:$0xf]
        %v133 = vld [vmem:[%s1 + $0x24] sm:$0xf]
        %v134 = vld [vmem:[%s1 + $0x28] sm:$0xf]
        %v135 = vld [vmem:[%s1 + $0x2c] sm:$0xf]
        %v136 = vld [vmem:[%s1 + $0x30] sm:$0xf]
        %v137 = vld [vmem:[%s1 + $0x34] sm:$0xf]
        %v138 = vld [vmem:[%s1 + $0x38] sm:$0xf]
        %v139 = vld [vmem:[%s1 + $0x3c] sm:$0xf]
        %v140 = vld [vmem:[%s2] sm:$0x1]
        %v142 = vlaneseq
        %v143 = vshrl.u32 %v142, 7
        %v144 = vsub.s32 0, %v143
        %v145 = vrot.slane %v140, %v144
        %v163 = vunpack.c.l.b16 %v124
        %v164 = vunpack.c.l.b16 %v125
        %v165 = vunpack.c.l.b16 %v126
        %v166 = vunpack.c.l.b16 %v127
        %v167 = vunpack.c.l.b16 %v128
        %v168 = vunpack.c.l.b16 %v129
        %v169 = vunpack.c.l.b16 %v130
        %v170 = vunpack.c.l.b16 %v131
        %v171 = vunpack.c.l.b16 %v132
        %v172 = vunpack.c.l.b16 %v133
        %v173 = vunpack.c.l.b16 %v134
        %v174 = vunpack.c.l.b16 %v135
        %v175 = vunpack.c.l.b16 %v136
        %v176 = vunpack.c.l.b16 %v137
        %v177 = vunpack.c.l.b16 %v138
        %v178 = vunpack.c.l.b16 %v139
        %v179 = vpack.c.b16 %v164, %v163
        %v180 = vpack.c.b16 %v166, %v165
        %v181 = vpack.c.b16 %v168, %v167
        %v182 = vpack.c.b16 %v170, %v169
        %v183 = vpack.c.b16 %v172, %v171
        %v184 = vpack.c.b16 %v174, %v173
        %v185 = vpack.c.b16 %v176, %v175
        %v186 = vpack.c.b16 %v178, %v177
        %195 = vmatprep.subr.bf16.mxu0 0
        %196 = vmatpush1.bf16.msra.mxu0 %v179
        %197 = vmatprep.subr.bf16.mxu0 0
        %198 = vmatpush1.bf16.msra.mxu0 %v180
        %199 = vmatprep.subr.bf16.mxu0 0
        %200 = vmatpush1.bf16.msra.mxu0 %v181
        %201 = vmatprep.subr.bf16.mxu0 0
        %202 = vmatpush1.bf16.msra.mxu0 %v182
        %203 = vmatprep.subr.bf16.mxu0 0
        %204 = vmatpush1.bf16.msra.mxu0 %v183
        %205 = vmatprep.subr.bf16.mxu0 0
        %206 = vmatpush1.bf16.msra.mxu0 %v184
        %207 = vmatprep.subr.bf16.mxu0 0
        %208 = vmatpush1.bf16.msra.mxu0 %v185
        %209 = vmatprep.subr.bf16.mxu0 0
        %210 = vmatpush1.bf16.msra.mxu0 %v186
        %211 = vmatprep.subr.bf16.mxu0 0
        %212 = vmatpush1.bf16.msra.mxu0 0
        %213 = vmatprep.subr.bf16.mxu0 0
        %214 = vmatpush1.bf16.msra.mxu0 0
        %215 = vmatprep.subr.bf16.mxu0 0
        %216 = vmatpush1.bf16.msra.mxu0 0
        %217 = vmatprep.subr.bf16.mxu0 0
        %218 = vmatpush1.bf16.msra.mxu0 0
        %219 = vmatprep.subr.bf16.mxu0 0
        %220 = vmatpush1.bf16.msra.mxu0 0
        %221 = vmatprep.subr.bf16.mxu0 0
        %222 = vmatpush1.bf16.msra.mxu0 0
        %223 = vmatprep.subr.bf16.mxu0 0
        %224 = vmatpush1.bf16.msra.mxu0 0
        %225 = vmatprep.subr.bf16.mxu0 0
        %226 = vmatpush1.bf16.msra.mxu0 0
        %227 = vmatprep.mubr.bf16.mxu0 0
        %228 = vmatmul.mubr.bf16.gmra.mrb[0].mxu0 %v116
        %v229 = vpop.f32.mrb[0].mxu0
        %v230 = vadd.f32 %v145, %v229
        %v231 = vpop.f32.mrb[0].mxu0
        %v232 = vpop.f32.mrb[0].mxu0
        %v233 = vadd.f32 %v145, %v232
        %v234 = vpop.f32.mrb[0].mxu0
        %235 = vmatprep.mubr.bf16.mxu0 0
        %236 = vmatmul.mubr.bf16.gmra.mrb[0].mxu0 %v117
        %v237 = vpop.f32.mrb[0].mxu0
        %v238 = vadd.f32 %v145, %v237
        %v239 = vpop.f32.mrb[0].mxu0
        %v240 = vpop.f32.mrb[0].mxu0
        %v241 = vadd.f32 %v145, %v240
        %v242 = vpop.f32.mrb[0].mxu0
        %243 = vmatprep.mubr.bf16.mxu0 0
        %244 = vmatmul.mubr.bf16.gmra.mrb[0].mxu0 %v118
        %v245 = vpop.f32.mrb[0].mxu0
        %v246 = vadd.f32 %v145, %v245
        %v247 = vpop.f32.mrb[0].mxu0
        %v248 = vpop.f32.mrb[0].mxu0
        %v249 = vadd.f32 %v145, %v248
        %v250 = vpop.f32.mrb[0].mxu0
        %251 = vmatprep.mubr.bf16.mxu0 0
        %252 = vmatmul.mubr.bf16.gmra.mrb[0].mxu0 %v119
        %v253 = vpop.f32.mrb[0].mxu0
        %v254 = vadd.f32 %v145, %v253
        %v255 = vpop.f32.mrb[0].mxu0
        %v256 = vpop.f32.mrb[0].mxu0
        %v257 = vadd.f32 %v145, %v256
        %v258 = vpop.f32.mrb[0].mxu0
        %259 = vmatprep.mubr.bf16.mxu0 0
        %260 = vmatmul.mubr.bf16.gmra.mrb[0].mxu0 %v120
        %v261 = vpop.f32.mrb[0].mxu0
        %v262 = vadd.f32 %v145, %v261
        %v263 = vpop.f32.mrb[0].mxu0
        %v264 = vpop.f32.mrb[0].mxu0
        %v265 = vadd.f32 %v145, %v264
        %v266 = vpop.f32.mrb[0].mxu0
        %267 = vmatprep.mubr.bf16.mxu0 0
        %268 = vmatmul.mubr.bf16.gmra.mrb[0].mxu0 %v121
        %v269 = vpop.f32.mrb[0].mxu0
        %v270 = vadd.f32 %v145, %v269
        %v271 = vpop.f32.mrb[0].mxu0
        %v272 = vpop.f32.mrb[0].mxu0
        %v273 = vadd.f32 %v145, %v272
        %v274 = vpop.f32.mrb[0].mxu0
        %275 = vmatprep.mubr.bf16.mxu0 0
        %276 = vmatmul.mubr.bf16.gmra.mrb[0].mxu0 %v122
        %v277 = vpop.f32.mrb[0].mxu0
        %v278 = vadd.f32 %v145, %v277
        %v279 = vpop.f32.mrb[0].mxu0
        %v280 = vpop.f32.mrb[0].mxu0
        %v281 = vadd.f32 %v145, %v280
        %v282 = vpop.f32.mrb[0].mxu0
        %283 = vmatprep.mubr.bf16.mxu0 0
        %284 = vmatmul.mubr.bf16.gmra.mrb[0].mxu0 %v123
        %v285 = vpop.f32.mrb[0].mxu0
        %v286 = vadd.f32 %v145, %v285
        %v287 = vpop.f32.mrb[0].mxu0
        %v288 = vpop.f32.mrb[0].mxu0
        %v289 = vadd.f32 %v145, %v288
        %v290 = vpop.f32.mrb[0].mxu0
        %291 = vdwg.mxu0
        %v292 = vmax.f32 %v230, 0.0
        %v293 = vmax.f32 %v233, 0.0
        %v294 = vmax.f32 %v238, 0.0
        %v295 = vmax.f32 %v241, 0.0
        %v296 = vmax.f32 %v246, 0.0
        %v297 = vmax.f32 %v249, 0.0
        %v298 = vmax.f32 %v254, 0.0
        %v299 = vmax.f32 %v257, 0.0
        %v300 = vmax.f32 %v262, 0.0
        %v301 = vmax.f32 %v265, 0.0
        %v302 = vmax.f32 %v270, 0.0
        %v303 = vmax.f32 %v273, 0.0
        %v304 = vmax.f32 %v278, 0.0
        %v305 = vmax.f32 %v281, 0.0
        %v306 = vmax.f32 %v286, 0.0
        %v307 = vmax.f32 %v289, 0.0
        %v308 = vpack.c.bf16 %v293, %v292
        %v309 = vpack.c.bf16 %v295, %v294
        %v310 = vpack.c.bf16 %v297, %v296
        %v311 = vpack.c.bf16 %v299, %v298
        %v312 = vpack.c.bf16 %v301, %v300
        %v313 = vpack.c.bf16 %v303, %v302
        %v314 = vpack.c.bf16 %v305, %v304
        %v315 = vpack.c.bf16 %v307, %v306
        %v316 = vld [vmem:[%s3] sm:$0xff]
        %v317 = vld [vmem:[%s3 + $0x8] sm:$0xff]
        %v318 = vld [vmem:[%s3 + $0x10] sm:$0xff]
        %v319 = vld [vmem:[%s3 + $0x18] sm:$0xff]
        %v320 = vld [vmem:[%s3 + $0x20] sm:$0xff]
        %v321 = vld [vmem:[%s3 + $0x28] sm:$0xff]
        %v322 = vld [vmem:[%s3 + $0x30] sm:$0xff]
        %v323 = vld [vmem:[%s3 + $0x38] sm:$0xff]
        %v324 = vld [vmem:[%s3 + $0x40] sm:$0xff]
        %v325 = vld [vmem:[%s3 + $0x48] sm:$0xff]
        %v326 = vld [vmem:[%s3 + $0x50] sm:$0xff]
        %v327 = vld [vmem:[%s3 + $0x58] sm:$0xff]
        %v328 = vld [vmem:[%s3 + $0x60] sm:$0xff]
        %v329 = vld [vmem:[%s3 + $0x68] sm:$0xff]
        %v330 = vld [vmem:[%s3 + $0x70] sm:$0xff]
        %v331 = vld [vmem:[%s3 + $0x78] sm:$0xff]
        %v332 = vld [vmem:[%s4] sm:$0x3]
        %v334 = vlaneseq
        %v335 = vshrl.u32 %v334, 7
        %v336 = vsub.s32 0, %v335
        %v337 = vrot.slane %v332, %v336
        %v338 = vlaneseq
        %v339 = vshrl.u32 %v338, 7
        %v340 = vsub.s32 1, %v339
        %v341 = vrot.slane %v332, %v340
        %v360 = vunpack.c.l.b16 %v316
        %v361 = vunpack.c.h.b16 %v316
        %v362 = vunpack.c.l.b16 %v317
        %v363 = vunpack.c.h.b16 %v317
        %v364 = vunpack.c.l.b16 %v318
        %v365 = vunpack.c.h.b16 %v318
        %v366 = vunpack.c.l.b16 %v319
        %v367 = vunpack.c.h.b16 %v319
        %v368 = vunpack.c.l.b16 %v320
        %v369 = vunpack.c.h.b16 %v320
        %v370 = vunpack.c.l.b16 %v321
        %v371 = vunpack.c.h.b16 %v321
        %v372 = vunpack.c.l.b16 %v322
        %v373 = vunpack.c.h.b16 %v322
        %v374 = vunpack.c.l.b16 %v323
        %v375 = vunpack.c.h.b16 %v323
        %v376 = vunpack.c.l.b16 %v324
        %v377 = vunpack.c.h.b16 %v324
        %v378 = vunpack.c.l.b16 %v325
        %v379 = vunpack.c.h.b16 %v325
        %v380 = vunpack.c.l.b16 %v326
        %v381 = vunpack.c.h.b16 %v326
        %v382 = vunpack.c.l.b16 %v327
        %v383 = vunpack.c.h.b16 %v327
        %v384 = vunpack.c.l.b16 %v328
        %v385 = vunpack.c.h.b16 %v328
        %v386 = vunpack.c.l.b16 %v329
        %v387 = vunpack.c.h.b16 %v329
        %v388 = vunpack.c.l.b16 %v330
        %v389 = vunpack.c.h.b16 %v330
        %v390 = vunpack.c.l.b16 %v331
        %v391 = vunpack.c.h.b16 %v331
        %v392 = vpack.c.b16 %v362, %v360
        %v393 = vpack.c.b16 %v363, %v361
        %v394 = vpack.c.b16 %v366, %v364
        %v395 = vpack.c.b16 %v367, %v365
        %v396 = vpack.c.b16 %v370, %v368
        %v397 = vpack.c.b16 %v371, %v369
        %v398 = vpack.c.b16 %v374, %v372
        %v399 = vpack.c.b16 %v375, %v373
        %v400 = vpack.c.b16 %v378, %v376
        %v401 = vpack.c.b16 %v379, %v377
        %v402 = vpack.c.b16 %v382, %v380
        %v403 = vpack.c.b16 %v383, %v381
        %v404 = vpack.c.b16 %v386, %v384
        %v405 = vpack.c.b16 %v387, %v385
        %v406 = vpack.c.b16 %v390, %v388
        %v407 = vpack.c.b16 %v391, %v389
        %424 = vmatprep.subr.bf16.mxu0 %v393
        %425 = vmatpush1.bf16.msra.mxu0 %v392
        %426 = vmatprep.subr.bf16.mxu0 %v395
        %427 = vmatpush1.bf16.msra.mxu0 %v394
        %428 = vmatprep.subr.bf16.mxu0 %v397
        %429 = vmatpush1.bf16.msra.mxu0 %v396
        %430 = vmatprep.subr.bf16.mxu0 %v399
        %431 = vmatpush1.bf16.msra.mxu0 %v398
        %432 = vmatprep.subr.bf16.mxu0 %v401
        %433 = vmatpush1.bf16.msra.mxu0 %v400
        %434 = vmatprep.subr.bf16.mxu0 %v403
        %435 = vmatpush1.bf16.msra.mxu0 %v402
        %436 = vmatprep.subr.bf16.mxu0 %v405
        %437 = vmatpush1.bf16.msra.mxu0 %v404
        %438 = vmatprep.subr.bf16.mxu0 %v407
        %439 = vmatpush1.bf16.msra.mxu0 %v406
        %440 = vmatprep.subr.bf16.mxu0 0
        %441 = vmatpush1.bf16.msra.mxu0 0
        %442 = vmatprep.subr.bf16.mxu0 0
        %443 = vmatpush1.bf16.msra.mxu0 0
        %444 = vmatprep.subr.bf16.mxu0 0
        %445 = vmatpush1.bf16.msra.mxu0 0
        %446 = vmatprep.subr.bf16.mxu0 0
        %447 = vmatpush1.bf16.msra.mxu0 0
        %448 = vmatprep.subr.bf16.mxu0 0
        %449 = vmatpush1.bf16.msra.mxu0 0
        %450 = vmatprep.subr.bf16.mxu0 0
        %451 = vmatpush1.bf16.msra.mxu0 0
        %452 = vmatprep.subr.bf16.mxu0 0
        %453 = vmatpush1.bf16.msra.mxu0 0
        %454 = vmatprep.subr.bf16.mxu0 0
        %455 = vmatpush1.bf16.msra.mxu0 0
        %456 = vmatprep.mubr.bf16.mxu0 0
        %457 = vmatmul.mubr.bf16.gmra.mrb[0].mxu0 %v308
        %v458 = vpop.f32.mrb[0].mxu0
        %v459 = vadd.f32 %v337, %v458
        %v460 = vpop.f32.mrb[0].mxu0
        %v461 = vadd.f32 %v341, %v460
        %v462 = vpop.f32.mrb[0].mxu0
        %v463 = vadd.f32 %v337, %v462
        %v464 = vpop.f32.mrb[0].mxu0
        %v465 = vadd.f32 %v341, %v464
        %466 = vmatprep.mubr.bf16.mxu0 0
        %467 = vmatmul.mubr.bf16.gmra.mrb[0].mxu0 %v309
        %v468 = vpop.f32.mrb[0].mxu0
        %v469 = vadd.f32 %v337, %v468
        %v470 = vpop.f32.mrb[0].mxu0
        %v471 = vadd.f32 %v341, %v470
        %v472 = vpop.f32.mrb[0].mxu0
        %v473 = vadd.f32 %v337, %v472
        %v474 = vpop.f32.mrb[0].mxu0
        %v475 = vadd.f32 %v341, %v474
        %476 = vmatprep.mubr.bf16.mxu0 0
        %477 = vmatmul.mubr.bf16.gmra.mrb[0].mxu0 %v310
        %v478 = vpop.f32.mrb[0].mxu0
        %v479 = vadd.f32 %v337, %v478
        %v480 = vpop.f32.mrb[0].mxu0
        %v481 = vadd.f32 %v341, %v480
        %v482 = vpop.f32.mrb[0].mxu0
        %v483 = vadd.f32 %v337, %v482
        %v484 = vpop.f32.mrb[0].mxu0
        %v485 = vadd.f32 %v341, %v484
        %486 = vmatprep.mubr.bf16.mxu0 0
        %487 = vmatmul.mubr.bf16.gmra.mrb[0].mxu0 %v311
        %v488 = vpop.f32.mrb[0].mxu0
        %v489 = vadd.f32 %v337, %v488
        %v490 = vpop.f32.mrb[0].mxu0
        %v491 = vadd.f32 %v341, %v490
        %v492 = vpop.f32.mrb[0].mxu0
        %v493 = vadd.f32 %v337, %v492
        %v494 = vpop.f32.mrb[0].mxu0
        %v495 = vadd.f32 %v341, %v494
        %496 = vmatprep.mubr.bf16.mxu0 0
        %497 = vmatmul.mubr.bf16.gmra.mrb[0].mxu0 %v312
        %v498 = vpop.f32.mrb[0].mxu0
        %v499 = vadd.f32 %v337, %v498
        %v500 = vpop.f32.mrb[0].mxu0
        %v501 = vadd.f32 %v341, %v500
        %v502 = vpop.f32.mrb[0].mxu0
        %v503 = vadd.f32 %v337, %v502
        %v504 = vpop.f32.mrb[0].mxu0
        %v505 = vadd.f32 %v341, %v504
        %506 = vmatprep.mubr.bf16.mxu0 0
        %507 = vmatmul.mubr.bf16.gmra.mrb[0].mxu0 %v313
        %v508 = vpop.f32.mrb[0].mxu0
        %v509 = vadd.f32 %v337, %v508
        %v510 = vpop.f32.mrb[0].mxu0
        %v511 = vadd.f32 %v341, %v510
        %v512 = vpop.f32.mrb[0].mxu0
        %v513 = vadd.f32 %v337, %v512
        %v514 = vpop.f32.mrb[0].mxu0
        %v515 = vadd.f32 %v341, %v514
        %516 = vmatprep.mubr.bf16.mxu0 0
        %517 = vmatmul.mubr.bf16.gmra.mrb[0].mxu0 %v314
        %v518 = vpop.f32.mrb[0].mxu0
        %v519 = vadd.f32 %v337, %v518
        %v520 = vpop.f32.mrb[0].mxu0
        %v521 = vadd.f32 %v341, %v520
        %v522 = vpop.f32.mrb[0].mxu0
        %v523 = vadd.f32 %v337, %v522
        %v524 = vpop.f32.mrb[0].mxu0
        %v525 = vadd.f32 %v341, %v524
        %526 = vmatprep.mubr.bf16.mxu0 0
        %527 = vmatmul.mubr.bf16.gmra.mrb[0].mxu0 %v315
        %v528 = vpop.f32.mrb[0].mxu0
        %v529 = vadd.f32 %v337, %v528
        %v530 = vpop.f32.mrb[0].mxu0
        %v531 = vadd.f32 %v341, %v530
        %v532 = vpop.f32.mrb[0].mxu0
        %v533 = vadd.f32 %v337, %v532
        %v534 = vpop.f32.mrb[0].mxu0
        %v535 = vadd.f32 %v341, %v534
        %536 = vdwg.mxu0
        %v537 = vmax.f32 %v459, 0.0
        %v538 = vmax.f32 %v461, 0.0
        %v539 = vmax.f32 %v463, 0.0
        %v540 = vmax.f32 %v465, 0.0
        %v541 = vmax.f32 %v469, 0.0
        %v542 = vmax.f32 %v471, 0.0
        %v543 = vmax.f32 %v473, 0.0
        %v544 = vmax.f32 %v475, 0.0
        %v545 = vmax.f32 %v479, 0.0
        %v546 = vmax.f32 %v481, 0.0
        %v547 = vmax.f32 %v483, 0.0
        %v548 = vmax.f32 %v485, 0.0
        %v549 = vmax.f32 %v489, 0.0
        %v550 = vmax.f32 %v491, 0.0
        %v551 = vmax.f32 %v493, 0.0
        %v552 = vmax.f32 %v495, 0.0
        %v553 = vmax.f32 %v499, 0.0
        %v554 = vmax.f32 %v501, 0.0
        %v555 = vmax.f32 %v503, 0.0
        %v556 = vmax.f32 %v505, 0.0
        %v557 = vmax.f32 %v509, 0.0
        %v558 = vmax.f32 %v511, 0.0
        %v559 = vmax.f32 %v513, 0.0
        %v560 = vmax.f32 %v515, 0.0
        %v561 = vmax.f32 %v519, 0.0
        %v562 = vmax.f32 %v521, 0.0
        %v563 = vmax.f32 %v523, 0.0
        %v564 = vmax.f32 %v525, 0.0
        %v565 = vmax.f32 %v529, 0.0
        %v566 = vmax.f32 %v531, 0.0
        %v567 = vmax.f32 %v533, 0.0
        %v568 = vmax.f32 %v535, 0.0
        %v569 = vpack.c.bf16 %v539, %v537
        %v570 = vpack.c.bf16 %v540, %v538
        %v571 = vpack.c.bf16 %v543, %v541
        %v572 = vpack.c.bf16 %v544, %v542
        %v573 = vpack.c.bf16 %v547, %v545
        %v574 = vpack.c.bf16 %v548, %v546
        %v575 = vpack.c.bf16 %v551, %v549
        %v576 = vpack.c.bf16 %v552, %v550
        %v577 = vpack.c.bf16 %v555, %v553
        %v578 = vpack.c.bf16 %v556, %v554
        %v579 = vpack.c.bf16 %v559, %v557
        %v580 = vpack.c.bf16 %v560, %v558
        %v581 = vpack.c.bf16 %v563, %v561
        %v582 = vpack.c.bf16 %v564, %v562
        %v583 = vpack.c.bf16 %v567, %v565
        %v584 = vpack.c.bf16 %v568, %v566
        %v585 = vld [vmem:[%s5] sm:$0xff]
        %v586 = vld [vmem:[%s5 + $0x8] sm:$0xff]
        %v587 = vld [vmem:[%s5 + $0x10] sm:$0xff]
        %v588 = vld [vmem:[%s5 + $0x18] sm:$0xff]
        %v589 = vld [vmem:[%s5 + $0x20] sm:$0xff]
        %v590 = vld [vmem:[%s5 + $0x28] sm:$0xff]
        %v591 = vld [vmem:[%s5 + $0x30] sm:$0xff]
        %v592 = vld [vmem:[%s5 + $0x38] sm:$0xff]
        %v593 = vld [vmem:[%s5 + $0x40] sm:$0xff]
        %v594 = vld [vmem:[%s5 + $0x48] sm:$0xff]
        %v595 = vld [vmem:[%s5 + $0x50] sm:$0xff]
        %v596 = vld [vmem:[%s5 + $0x58] sm:$0xff]
        %v597 = vld [vmem:[%s5 + $0x60] sm:$0xff]
        %v598 = vld [vmem:[%s5 + $0x68] sm:$0xff]
        %v599 = vld [vmem:[%s5 + $0x70] sm:$0xff]
        %v600 = vld [vmem:[%s5 + $0x78] sm:$0xff]
        %v601 = vld [vmem:[%s5 + $0x80] sm:$0xff]
        %v602 = vld [vmem:[%s5 + $0x88] sm:$0xff]
        %v603 = vld [vmem:[%s5 + $0x90] sm:$0xff]
        %v604 = vld [vmem:[%s5 + $0x98] sm:$0xff]
        %v605 = vld [vmem:[%s5 + $0xa0] sm:$0xff]
        %v606 = vld [vmem:[%s5 + $0xa8] sm:$0xff]
        %v607 = vld [vmem:[%s5 + $0xb0] sm:$0xff]
        %v608 = vld [vmem:[%s5 + $0xb8] sm:$0xff]
        %v609 = vld [vmem:[%s5 + $0xc0] sm:$0xff]
        %v610 = vld [vmem:[%s5 + $0xc8] sm:$0xff]
        %v611 = vld [vmem:[%s5 + $0xd0] sm:$0xff]
        %v612 = vld [vmem:[%s5 + $0xd8] sm:$0xff]
        %v613 = vld [vmem:[%s5 + $0xe0] sm:$0xff]
        %v614 = vld [vmem:[%s5 + $0xe8] sm:$0xff]
        %v615 = vld [vmem:[%s5 + $0xf0] sm:$0xff]
        %v616 = vld [vmem:[%s5 + $0xf8] sm:$0xff]
        %v617 = vld [vmem:[%s5 + $0x100] sm:$0xff]
        %v618 = vld [vmem:[%s5 + $0x108] sm:$0xff]
        %v619 = vld [vmem:[%s5 + $0x110] sm:$0xff]
        %v620 = vld [vmem:[%s5 + $0x118] sm:$0xff]
        %v621 = vld [vmem:[%s5 + $0x120] sm:$0xff]
        %v622 = vld [vmem:[%s5 + $0x128] sm:$0xff]
        %v623 = vld [vmem:[%s5 + $0x130] sm:$0xff]
        %v624 = vld [vmem:[%s5 + $0x138] sm:$0xff]
        %v625 = vld [vmem:[%s5 + $0x140] sm:$0xff]
        %v626 = vld [vmem:[%s5 + $0x148] sm:$0xff]
        %v627 = vld [vmem:[%s5 + $0x150] sm:$0xff]
        %v628 = vld [vmem:[%s5 + $0x158] sm:$0xff]
        %v629 = vld [vmem:[%s5 + $0x160] sm:$0xff]
        %v630 = vld [vmem:[%s5 + $0x168] sm:$0xff]
        %v631 = vld [vmem:[%s5 + $0x170] sm:$0xff]
        %v632 = vld [vmem:[%s5 + $0x178] sm:$0xff]
        %v633 = vld [vmem:[%s5 + $0x180] sm:$0xff]
        %v634 = vld [vmem:[%s5 + $0x188] sm:$0xff]
        %v635 = vld [vmem:[%s5 + $0x190] sm:$0xff]
        %v636 = vld [vmem:[%s5 + $0x198] sm:$0xff]
        %v637 = vld [vmem:[%s5 + $0x1a0] sm:$0xff]
        %v638 = vld [vmem:[%s5 + $0x1a8] sm:$0xff]
        %v639 = vld [vmem:[%s5 + $0x1b0] sm:$0xff]
        %v640 = vld [vmem:[%s5 + $0x1b8] sm:$0xff]
        %v641 = vld [vmem:[%s5 + $0x1c0] sm:$0xff]
        %v642 = vld [vmem:[%s5 + $0x1c8] sm:$0xff]
        %v643 = vld [vmem:[%s5 + $0x1d0] sm:$0xff]
        %v644 = vld [vmem:[%s5 + $0x1d8] sm:$0xff]
        %v645 = vld [vmem:[%s5 + $0x1e0] sm:$0xff]
        %v646 = vld [vmem:[%s5 + $0x1e8] sm:$0xff]
        %v647 = vld [vmem:[%s5 + $0x1f0] sm:$0xff]
        %v648 = vld [vmem:[%s5 + $0x1f8] sm:$0xff]
        %v649 = vld [vmem:[%s6] sm:$0xf]
        %v651 = vlaneseq
        %v652 = vshrl.u32 %v651, 7
        %v653 = vsub.s32 0, %v652
        %v654 = vrot.slane %v649, %v653
        %v655 = vlaneseq
        %v656 = vshrl.u32 %v655, 7
        %v657 = vsub.s32 1, %v656
        %v658 = vrot.slane %v649, %v657
        %v659 = vlaneseq
        %v660 = vshrl.u32 %v659, 7
        %v661 = vsub.s32 2, %v660
        %v662 = vrot.slane %v649, %v661
        %v663 = vlaneseq
        %v664 = vshrl.u32 %v663, 7
        %v665 = vsub.s32 3, %v664
        %v666 = vrot.slane %v649, %v665
        %v735 = vunpack.c.l.b16 %v585
        %v736 = vunpack.c.h.b16 %v585
        %v737 = vunpack.c.l.b16 %v586
        %v738 = vunpack.c.h.b16 %v586
        %v739 = vunpack.c.l.b16 %v587
        %v740 = vunpack.c.h.b16 %v587
        %v741 = vunpack.c.l.b16 %v588
        %v742 = vunpack.c.h.b16 %v588
        %v743 = vunpack.c.l.b16 %v589
        %v744 = vunpack.c.h.b16 %v589
        %v745 = vunpack.c.l.b16 %v590
        %v746 = vunpack.c.h.b16 %v590
        %v747 = vunpack.c.l.b16 %v591
        %v748 = vunpack.c.h.b16 %v591
        %v749 = vunpack.c.l.b16 %v592
        %v750 = vunpack.c.h.b16 %v592
        %v751 = vunpack.c.l.b16 %v593
        %v752 = vunpack.c.h.b16 %v593
        %v753 = vunpack.c.l.b16 %v594
        %v754 = vunpack.c.h.b16 %v594
        %v755 = vunpack.c.l.b16 %v595
        %v756 = vunpack.c.h.b16 %v595
        %v757 = vunpack.c.l.b16 %v596
        %v758 = vunpack.c.h.b16 %v596
        %v759 = vunpack.c.l.b16 %v597
        %v760 = vunpack.c.h.b16 %v597
        %v761 = vunpack.c.l.b16 %v598
        %v762 = vunpack.c.h.b16 %v598
        %v763 = vunpack.c.l.b16 %v599
        %v764 = vunpack.c.h.b16 %v599
        %v765 = vunpack.c.l.b16 %v600
        %v766 = vunpack.c.h.b16 %v600
        %v767 = vunpack.c.l.b16 %v601
        %v768 = vunpack.c.h.b16 %v601
        %v769 = vunpack.c.l.b16 %v602
        %v770 = vunpack.c.h.b16 %v602
        %v771 = vunpack.c.l.b16 %v603
        %v772 = vunpack.c.h.b16 %v603
        %v773 = vunpack.c.l.b16 %v604
        %v774 = vunpack.c.h.b16 %v604
        %v775 = vunpack.c.l.b16 %v605
        %v776 = vunpack.c.h.b16 %v605
        %v777 = vunpack.c.l.b16 %v606
        %v778 = vunpack.c.h.b16 %v606
        %v779 = vunpack.c.l.b16 %v607
        %v780 = vunpack.c.h.b16 %v607
        %v781 = vunpack.c.l.b16 %v608
        %v782 = vunpack.c.h.b16 %v608
        %v783 = vunpack.c.l.b16 %v609
        %v784 = vunpack.c.h.b16 %v609
        %v785 = vunpack.c.l.b16 %v610
        %v786 = vunpack.c.h.b16 %v610
        %v787 = vunpack.c.l.b16 %v611
        %v788 = vunpack.c.h.b16 %v611
        %v789 = vunpack.c.l.b16 %v612
        %v790 = vunpack.c.h.b16 %v612
        %v791 = vunpack.c.l.b16 %v613
        %v792 = vunpack.c.h.b16 %v613
        %v793 = vunpack.c.l.b16 %v614
        %v794 = vunpack.c.h.b16 %v614
        %v795 = vunpack.c.l.b16 %v615
        %v796 = vunpack.c.h.b16 %v615
        %v797 = vunpack.c.l.b16 %v616
        %v798 = vunpack.c.h.b16 %v616
        %v799 = vunpack.c.l.b16 %v617
        %v800 = vunpack.c.h.b16 %v617
        %v801 = vunpack.c.l.b16 %v618
        %v802 = vunpack.c.h.b16 %v618
        %v803 = vunpack.c.l.b16 %v619
        %v804 = vunpack.c.h.b16 %v619
        %v805 = vunpack.c.l.b16 %v620
        %v806 = vunpack.c.h.b16 %v620
        %v807 = vunpack.c.l.b16 %v621
        %v808 = vunpack.c.h.b16 %v621
        %v809 = vunpack.c.l.b16 %v622
        %v810 = vunpack.c.h.b16 %v622
        %v811 = vunpack.c.l.b16 %v623
        %v812 = vunpack.c.h.b16 %v623
        %v813 = vunpack.c.l.b16 %v624
        %v814 = vunpack.c.h.b16 %v624
        %v815 = vunpack.c.l.b16 %v625
        %v816 = vunpack.c.h.b16 %v625
        %v817 = vunpack.c.l.b16 %v626
        %v818 = vunpack.c.h.b16 %v626
        %v819 = vunpack.c.l.b16 %v627
        %v820 = vunpack.c.h.b16 %v627
        %v821 = vunpack.c.l.b16 %v628
        %v822 = vunpack.c.h.b16 %v628
        %v823 = vunpack.c.l.b16 %v629
        %v824 = vunpack.c.h.b16 %v629
        %v825 = vunpack.c.l.b16 %v630
        %v826 = vunpack.c.h.b16 %v630
        %v827 = vunpack.c.l.b16 %v631
        %v828 = vunpack.c.h.b16 %v631
        %v829 = vunpack.c.l.b16 %v632
        %v830 = vunpack.c.h.b16 %v632
        %v831 = vunpack.c.l.b16 %v633
        %v832 = vunpack.c.h.b16 %v633
        %v833 = vunpack.c.l.b16 %v634
        %v834 = vunpack.c.h.b16 %v634
        %v835 = vunpack.c.l.b16 %v635
        %v836 = vunpack.c.h.b16 %v635
        %v837 = vunpack.c.l.b16 %v636
        %v838 = vunpack.c.h.b16 %v636
        %v839 = vunpack.c.l.b16 %v637
        %v840 = vunpack.c.h.b16 %v637
        %v841 = vunpack.c.l.b16 %v638
        %v842 = vunpack.c.h.b16 %v638
        %v843 = vunpack.c.l.b16 %v639
        %v844 = vunpack.c.h.b16 %v639
        %v845 = vunpack.c.l.b16 %v640
        %v846 = vunpack.c.h.b16 %v640
        %v847 = vunpack.c.l.b16 %v641
        %v848 = vunpack.c.h.b16 %v641
        %v849 = vunpack.c.l.b16 %v642
        %v850 = vunpack.c.h.b16 %v642
        %v851 = vunpack.c.l.b16 %v643
        %v852 = vunpack.c.h.b16 %v643
        %v853 = vunpack.c.l.b16 %v644
        %v854 = vunpack.c.h.b16 %v644
        %v855 = vunpack.c.l.b16 %v645
        %v856 = vunpack.c.h.b16 %v645
        %v857 = vunpack.c.l.b16 %v646
        %v858 = vunpack.c.h.b16 %v646
        %v859 = vunpack.c.l.b16 %v647
        %v860 = vunpack.c.h.b16 %v647
        %v861 = vunpack.c.l.b16 %v648
        %v862 = vunpack.c.h.b16 %v648
        %v863 = vpack.c.b16 %v739, %v735
        %v864 = vpack.c.b16 %v740, %v736
        %v865 = vpack.c.b16 %v741, %v737
        %v866 = vpack.c.b16 %v742, %v738
        %v867 = vpack.c.b16 %v747, %v743
        %v868 = vpack.c.b16 %v748, %v744
        %v869 = vpack.c.b16 %v749, %v745
        %v870 = vpack.c.b16 %v750, %v746
        %v871 = vpack.c.b16 %v755, %v751
        %v872 = vpack.c.b16 %v756, %v752
        %v873 = vpack.c.b16 %v757, %v753
        %v874 = vpack.c.b16 %v758, %v754
        %v875 = vpack.c.b16 %v763, %v759
        %v876 = vpack.c.b16 %v764, %v760
        %v877 = vpack.c.b16 %v765, %v761
        %v878 = vpack.c.b16 %v766, %v762
        %v879 = vpack.c.b16 %v771, %v767
        %v880 = vpack.c.b16 %v772, %v768
        %v881 = vpack.c.b16 %v773, %v769
        %v882 = vpack.c.b16 %v774, %v770
        %v883 = vpack.c.b16 %v779, %v775
        %v884 = vpack.c.b16 %v780, %v776
        %v885 = vpack.c.b16 %v781, %v777
        %v886 = vpack.c.b16 %v782, %v778
        %v887 = vpack.c.b16 %v787, %v783
        %v888 = vpack.c.b16 %v788, %v784
        %v889 = vpack.c.b16 %v789, %v785
        %v890 = vpack.c.b16 %v790, %v786
        %v891 = vpack.c.b16 %v795, %v791
        %v892 = vpack.c.b16 %v796, %v792
        %v893 = vpack.c.b16 %v797, %v793
        %v894 = vpack.c.b16 %v798, %v794
        %v895 = vpack.c.b16 %v803, %v799
        %v896 = vpack.c.b16 %v804, %v800
        %v897 = vpack.c.b16 %v805, %v801
        %v898 = vpack.c.b16 %v806, %v802
        %v899 = vpack.c.b16 %v811, %v807
        %v900 = vpack.c.b16 %v812, %v808
        %v901 = vpack.c.b16 %v813, %v809
        %v902 = vpack.c.b16 %v814, %v810
        %v903 = vpack.c.b16 %v819, %v815
        %v904 = vpack.c.b16 %v820, %v816
        %v905 = vpack.c.b16 %v821, %v817
        %v906 = vpack.c.b16 %v822, %v818
        %v907 = vpack.c.b16 %v827, %v823
        %v908 = vpack.c.b16 %v828, %v824
        %v909 = vpack.c.b16 %v829, %v825
        %v910 = vpack.c.b16 %v830, %v826
        %v911 = vpack.c.b16 %v835, %v831
        %v912 = vpack.c.b16 %v836, %v832
        %v913 = vpack.c.b16 %v837, %v833
        %v914 = vpack.c.b16 %v838, %v834
        %v915 = vpack.c.b16 %v843, %v839
        %v916 = vpack.c.b16 %v844, %v840
        %v917 = vpack.c.b16 %v845, %v841
        %v918 = vpack.c.b16 %v846, %v842
        %v919 = vpack.c.b16 %v851, %v847
        %v920 = vpack.c.b16 %v852, %v848
        %v921 = vpack.c.b16 %v853, %v849
        %v922 = vpack.c.b16 %v854, %v850
        %v923 = vpack.c.b16 %v859, %v855
        %v924 = vpack.c.b16 %v860, %v856
        %v925 = vpack.c.b16 %v861, %v857
        %v926 = vpack.c.b16 %v862, %v858
        %991 = vmatprep.subr.bf16.mxu0 %v864
        %992 = vmatpush1.bf16.msra.mxu0 %v863
        %993 = vmatprep.subr.bf16.mxu0 %v868
        %994 = vmatpush1.bf16.msra.mxu0 %v867
        %995 = vmatprep.subr.bf16.mxu0 %v872
        %996 = vmatpush1.bf16.msra.mxu0 %v871
        %997 = vmatprep.subr.bf16.mxu0 %v876
        %998 = vmatpush1.bf16.msra.mxu0 %v875
        %999 = vmatprep.subr.bf16.mxu0 %v880
        %1000 = vmatpush1.bf16.msra.mxu0 %v879
        %1001 = vmatprep.subr.bf16.mxu0 %v884
        %1002 = vmatpush1.bf16.msra.mxu0 %v883
        %1003 = vmatprep.subr.bf16.mxu0 %v888
        %1004 = vmatpush1.bf16.msra.mxu0 %v887
        %1005 = vmatprep.subr.bf16.mxu0 %v892
        %1006 = vmatpush1.bf16.msra.mxu0 %v891
        %1007 = vmatprep.subr.bf16.mxu0 %v896
        %1008 = vmatpush1.bf16.msra.mxu0 %v895
        %1009 = vmatprep.subr.bf16.mxu0 %v900
        %1010 = vmatpush1.bf16.msra.mxu0 %v899
        %1011 = vmatprep.subr.bf16.mxu0 %v904
        %1012 = vmatpush1.bf16.msra.mxu0 %v903
        %1013 = vmatprep.subr.bf16.mxu0 %v908
        %1014 = vmatpush1.bf16.msra.mxu0 %v907
        %1015 = vmatprep.subr.bf16.mxu0 %v912
        %1016 = vmatpush1.bf16.msra.mxu0 %v911
        %1017 = vmatprep.subr.bf16.mxu0 %v916
        %1018 = vmatpush1.bf16.msra.mxu0 %v915
        %1019 = vmatprep.subr.bf16.mxu0 %v920
        %1020 = vmatpush1.bf16.msra.mxu0 %v919
        %1021 = vmatprep.subr.bf16.mxu0 %v924
        %1022 = vmatpush1.bf16.msra.mxu0 %v923
        %1023 = vmatprep.mubr.bf16.mxu0 %v570
        %1024 = vmatmul.mubr.bf16.gmra.mrb[0].mxu0 %v569
        %v1025 = vpop.f32.mrb[0].mxu0
        %v1026 = vadd.f32 %v654, %v1025
        %v1027 = vpop.f32.mrb[0].mxu0
        %v1028 = vadd.f32 %v658, %v1027
        %v1029 = vpop.f32.mrb[0].mxu0
        %v1030 = vadd.f32 %v654, %v1029
        %v1031 = vpop.f32.mrb[0].mxu0
        %v1032 = vadd.f32 %v658, %v1031
        %1033 = vmatprep.mubr.bf16.mxu0 %v572
        %1034 = vmatmul.mubr.bf16.gmra.mrb[0].mxu0 %v571
        %v1035 = vpop.f32.mrb[0].mxu0
        %v1036 = vadd.f32 %v654, %v1035
        %v1037 = vpop.f32.mrb[0].mxu0
        %v1038 = vadd.f32 %v658, %v1037
        %v1039 = vpop.f32.mrb[0].mxu0
        %v1040 = vadd.f32 %v654, %v1039
        %v1041 = vpop.f32.mrb[0].mxu0
        %v1042 = vadd.f32 %v658, %v1041
        %1043 = vmatprep.mubr.bf16.mxu0 %v574
        %1044 = vmatmul.mubr.bf16.gmra.mrb[0].mxu0 %v573
        %v1045 = vpop.f32.mrb[0].mxu0
        %v1046 = vadd.f32 %v654, %v1045
        %v1047 = vpop.f32.mrb[0].mxu0
        %v1048 = vadd.f32 %v658, %v1047
        %v1049 = vpop.f32.mrb[0].mxu0
        %v1050 = vadd.f32 %v654, %v1049
        %v1051 = vpop.f32.mrb[0].mxu0
        %v1052 = vadd.f32 %v658, %v1051
        %1053 = vmatprep.mubr.bf16.mxu0 %v576
        %1054 = vmatmul.mubr.bf16.gmra.mrb[0].mxu0 %v575
        %v1055 = vpop.f32.mrb[0].mxu0
        %v1056 = vadd.f32 %v654, %v1055
        %v1057 = vpop.f32.mrb[0].mxu0
        %v1058 = vadd.f32 %v658, %v1057
        %v1059 = vpop.f32.mrb[0].mxu0
        %v1060 = vadd.f32 %v654, %v1059
        %v1061 = vpop.f32.mrb[0].mxu0
        %v1062 = vadd.f32 %v658, %v1061
        %1063 = vmatprep.mubr.bf16.mxu0 %v578
        %1064 = vmatmul.mubr.bf16.gmra.mrb[0].mxu0 %v577
        %v1065 = vpop.f32.mrb[0].mxu0
        %v1066 = vadd.f32 %v654, %v1065
        %v1067 = vpop.f32.mrb[0].mxu0
        %v1068 = vadd.f32 %v658, %v1067
        %v1069 = vpop.f32.mrb[0].mxu0
        %v1070 = vadd.f32 %v654, %v1069
        %v1071 = vpop.f32.mrb[0].mxu0
        %v1072 = vadd.f32 %v658, %v1071
        %1073 = vmatprep.mubr.bf16.mxu0 %v580
        %1074 = vmatmul.mubr.bf16.gmra.mrb[0].mxu0 %v579
        %v1075 = vpop.f32.mrb[0].mxu0
        %v1076 = vadd.f32 %v654, %v1075
        %v1077 = vpop.f32.mrb[0].mxu0
        %v1078 = vadd.f32 %v658, %v1077
        %v1079 = vpop.f32.mrb[0].mxu0
        %v1080 = vadd.f32 %v654, %v1079
        %v1081 = vpop.f32.mrb[0].mxu0
        %v1082 = vadd.f32 %v658, %v1081
        %1083 = vmatprep.mubr.bf16.mxu0 %v582
        %1084 = vmatmul.mubr.bf16.gmra.mrb[0].mxu0 %v581
        %v1085 = vpop.f32.mrb[0].mxu0
        %v1086 = vadd.f32 %v654, %v1085
        %v1087 = vpop.f32.mrb[0].mxu0
        %v1088 = vadd.f32 %v658, %v1087
        %v1089 = vpop.f32.mrb[0].mxu0
        %v1090 = vadd.f32 %v654, %v1089
        %v1091 = vpop.f32.mrb[0].mxu0
        %v1092 = vadd.f32 %v658, %v1091
        %1093 = vmatprep.mubr.bf16.mxu0 %v584
        %1094 = vmatmul.mubr.bf16.gmra.mrb[0].mxu0 %v583
        %v1095 = vpop.f32.mrb[0].mxu0
        %v1096 = vadd.f32 %v654, %v1095
        %v1097 = vpop.f32.mrb[0].mxu0
        %v1098 = vadd.f32 %v658, %v1097
        %v1099 = vpop.f32.mrb[0].mxu0
        %v1100 = vadd.f32 %v654, %v1099
        %v1101 = vpop.f32.mrb[0].mxu0
        %v1102 = vadd.f32 %v658, %v1101
        %1103 = vdwg.mxu0
        %1104 = vmatprep.subr.bf16.mxu0 %v866
        %1105 = vmatpush1.bf16.msra.mxu0 %v865
        %1106 = vmatprep.subr.bf16.mxu0 %v870
        %1107 = vmatpush1.bf16.msra.mxu0 %v869
        %1108 = vmatprep.subr.bf16.mxu0 %v874
        %1109 = vmatpush1.bf16.msra.mxu0 %v873
        %1110 = vmatprep.subr.bf16.mxu0 %v878
        %1111 = vmatpush1.bf16.msra.mxu0 %v877
        %1112 = vmatprep.subr.bf16.mxu0 %v882
        %1113 = vmatpush1.bf16.msra.mxu0 %v881
        %1114 = vmatprep.subr.bf16.mxu0 %v886
        %1115 = vmatpush1.bf16.msra.mxu0 %v885
        %1116 = vmatprep.subr.bf16.mxu0 %v890
        %1117 = vmatpush1.bf16.msra.mxu0 %v889
        %1118 = vmatprep.subr.bf16.mxu0 %v894
        %1119 = vmatpush1.bf16.msra.mxu0 %v893
        %1120 = vmatprep.subr.bf16.mxu0 %v898
        %1121 = vmatpush1.bf16.msra.mxu0 %v897
        %1122 = vmatprep.subr.bf16.mxu0 %v902
        %1123 = vmatpush1.bf16.msra.mxu0 %v901
        %1124 = vmatprep.subr.bf16.mxu0 %v906
        %1125 = vmatpush1.bf16.msra.mxu0 %v905
        %1126 = vmatprep.subr.bf16.mxu0 %v910
        %1127 = vmatpush1.bf16.msra.mxu0 %v909
        %1128 = vmatprep.subr.bf16.mxu0 %v914
        %1129 = vmatpush1.bf16.msra.mxu0 %v913
        %1130 = vmatprep.subr.bf16.mxu0 %v918
        %1131 = vmatpush1.bf16.msra.mxu0 %v917
        %1132 = vmatprep.subr.bf16.mxu0 %v922
        %1133 = vmatpush1.bf16.msra.mxu0 %v921
        %1134 = vmatprep.subr.bf16.mxu0 %v926
        %1135 = vmatpush1.bf16.msra.mxu0 %v925
        %1136 = vmatprep.mubr.bf16.mxu0 %v570
        %1137 = vmatmul.mubr.bf16.gmra.mrb[0].mxu0 %v569
        %v1138 = vpop.f32.mrb[0].mxu0
        %v1139 = vadd.f32 %v662, %v1138
        %v1140 = vpop.f32.mrb[0].mxu0
        %v1141 = vadd.f32 %v666, %v1140
        %v1142 = vpop.f32.mrb[0].mxu0
        %v1143 = vadd.f32 %v662, %v1142
        %v1144 = vpop.f32.mrb[0].mxu0
        %v1145 = vadd.f32 %v666, %v1144
        %1146 = vmatprep.mubr.bf16.mxu0 %v572
        %1147 = vmatmul.mubr.bf16.gmra.mrb[0].mxu0 %v571
        %v1148 = vpop.f32.mrb[0].mxu0
        %v1149 = vadd.f32 %v662, %v1148
        %v1150 = vpop.f32.mrb[0].mxu0
        %v1151 = vadd.f32 %v666, %v1150
        %v1152 = vpop.f32.mrb[0].mxu0
        %v1153 = vadd.f32 %v662, %v1152
        %v1154 = vpop.f32.mrb[0].mxu0
        %v1155 = vadd.f32 %v666, %v1154
        %1156 = vmatprep.mubr.bf16.mxu0 %v574
        %1157 = vmatmul.mubr.bf16.gmra.mrb[0].mxu0 %v573
        %v1158 = vpop.f32.mrb[0].mxu0
        %v1159 = vadd.f32 %v662, %v1158
        %v1160 = vpop.f32.mrb[0].mxu0
        %v1161 = vadd.f32 %v666, %v1160
        %v1162 = vpop.f32.mrb[0].mxu0
        %v1163 = vadd.f32 %v662, %v1162
        %v1164 = vpop.f32.mrb[0].mxu0
        %v1165 = vadd.f32 %v666, %v1164
        %1166 = vmatprep.mubr.bf16.mxu0 %v576
        %1167 = vmatmul.mubr.bf16.gmra.mrb[0].mxu0 %v575
        %v1168 = vpop.f32.mrb[0].mxu0
        %v1169 = vadd.f32 %v662, %v1168
        %v1170 = vpop.f32.mrb[0].mxu0
        %v1171 = vadd.f32 %v666, %v1170
        %v1172 = vpop.f32.mrb[0].mxu0
        %v1173 = vadd.f32 %v662, %v1172
        %v1174 = vpop.f32.mrb[0].mxu0
        %v1175 = vadd.f32 %v666, %v1174
        %1176 = vmatprep.mubr.bf16.mxu0 %v578
        %1177 = vmatmul.mubr.bf16.gmra.mrb[0].mxu0 %v577
        %v1178 = vpop.f32.mrb[0].mxu0
        %v1179 = vadd.f32 %v662, %v1178
        %v1180 = vpop.f32.mrb[0].mxu0
        %v1181 = vadd.f32 %v666, %v1180
        %v1182 = vpop.f32.mrb[0].mxu0
        %v1183 = vadd.f32 %v662, %v1182
        %v1184 = vpop.f32.mrb[0].mxu0
        %v1185 = vadd.f32 %v666, %v1184
        %1186 = vmatprep.mubr.bf16.mxu0 %v580
        %1187 = vmatmul.mubr.bf16.gmra.mrb[0].mxu0 %v579
        %v1188 = vpop.f32.mrb[0].mxu0
        %v1189 = vadd.f32 %v662, %v1188
        %v1190 = vpop.f32.mrb[0].mxu0
        %v1191 = vadd.f32 %v666, %v1190
        %v1192 = vpop.f32.mrb[0].mxu0
        %v1193 = vadd.f32 %v662, %v1192
        %v1194 = vpop.f32.mrb[0].mxu0
        %v1195 = vadd.f32 %v666, %v1194
        %1196 = vmatprep.mubr.bf16.mxu0 %v582
        %1197 = vmatmul.mubr.bf16.gmra.mrb[0].mxu0 %v581
        %v1198 = vpop.f32.mrb[0].mxu0
        %v1199 = vadd.f32 %v662, %v1198
        %v1200 = vpop.f32.mrb[0].mxu0
        %v1201 = vadd.f32 %v666, %v1200
        %v1202 = vpop.f32.mrb[0].mxu0
        %v1203 = vadd.f32 %v662, %v1202
        %v1204 = vpop.f32.mrb[0].mxu0
        %v1205 = vadd.f32 %v666, %v1204
        %1206 = vmatprep.mubr.bf16.mxu0 %v584
        %1207 = vmatmul.mubr.bf16.gmra.mrb[0].mxu0 %v583
        %v1208 = vpop.f32.mrb[0].mxu0
        %v1209 = vadd.f32 %v662, %v1208
        %v1210 = vpop.f32.mrb[0].mxu0
        %v1211 = vadd.f32 %v666, %v1210
        %v1212 = vpop.f32.mrb[0].mxu0
        %v1213 = vadd.f32 %v662, %v1212
        %v1214 = vpop.f32.mrb[0].mxu0
        %v1215 = vadd.f32 %v666, %v1214
        %1216 = vdwg.mxu0
        %v1217 = vmax.f32 %v1026, 0.0
        %v1218 = vmax.f32 %v1028, 0.0
        %v1219 = vmax.f32 %v1139, 0.0
        %v1220 = vmax.f32 %v1141, 0.0
        %v1221 = vmax.f32 %v1030, 0.0
        %v1222 = vmax.f32 %v1032, 0.0
        %v1223 = vmax.f32 %v1143, 0.0
        %v1224 = vmax.f32 %v1145, 0.0
        %v1225 = vmax.f32 %v1036, 0.0
        %v1226 = vmax.f32 %v1038, 0.0
        %v1227 = vmax.f32 %v1149, 0.0
        %v1228 = vmax.f32 %v1151, 0.0
        %v1229 = vmax.f32 %v1040, 0.0
        %v1230 = vmax.f32 %v1042, 0.0
        %v1231 = vmax.f32 %v1153, 0.0
        %v1232 = vmax.f32 %v1155, 0.0
        %v1233 = vmax.f32 %v1046, 0.0
        %v1234 = vmax.f32 %v1048, 0.0
        %v1235 = vmax.f32 %v1159, 0.0
        %v1236 = vmax.f32 %v1161, 0.0
        %v1237 = vmax.f32 %v1050, 0.0
        %v1238 = vmax.f32 %v1052, 0.0
        %v1239 = vmax.f32 %v1163, 0.0
        %v1240 = vmax.f32 %v1165, 0.0
        %v1241 = vmax.f32 %v1056, 0.0
        %v1242 = vmax.f32 %v1058, 0.0
        %v1243 = vmax.f32 %v1169, 0.0
        %v1244 = vmax.f32 %v1171, 0.0
        %v1245 = vmax.f32 %v1060, 0.0
        %v1246 = vmax.f32 %v1062, 0.0
        %v1247 = vmax.f32 %v1173, 0.0
        %v1248 = vmax.f32 %v1175, 0.0
        %v1249 = vmax.f32 %v1066, 0.0
        %v1250 = vmax.f32 %v1068, 0.0
        %v1251 = vmax.f32 %v1179, 0.0
        %v1252 = vmax.f32 %v1181, 0.0
        %v1253 = vmax.f32 %v1070, 0.0
        %v1254 = vmax.f32 %v1072, 0.0
        %v1255 = vmax.f32 %v1183, 0.0
        %v1256 = vmax.f32 %v1185, 0.0
        %v1257 = vmax.f32 %v1076, 0.0
        %v1258 = vmax.f32 %v1078, 0.0
        %v1259 = vmax.f32 %v1189, 0.0
        %v1260 = vmax.f32 %v1191, 0.0
        %v1261 = vmax.f32 %v1080, 0.0
        %v1262 = vmax.f32 %v1082, 0.0
        %v1263 = vmax.f32 %v1193, 0.0
        %v1264 = vmax.f32 %v1195, 0.0
        %v1265 = vmax.f32 %v1086, 0.0
        %v1266 = vmax.f32 %v1088, 0.0
        %v1267 = vmax.f32 %v1199, 0.0
        %v1268 = vmax.f32 %v1201, 0.0
        %v1269 = vmax.f32 %v1090, 0.0
        %v1270 = vmax.f32 %v1092, 0.0
        %v1271 = vmax.f32 %v1203, 0.0
        %v1272 = vmax.f32 %v1205, 0.0
        %v1273 = vmax.f32 %v1096, 0.0
        %v1274 = vmax.f32 %v1098, 0.0
        %v1275 = vmax.f32 %v1209, 0.0
        %v1276 = vmax.f32 %v1211, 0.0
        %v1277 = vmax.f32 %v1100, 0.0
        %v1278 = vmax.f32 %v1102, 0.0
        %v1279 = vmax.f32 %v1213, 0.0
        %v1280 = vmax.f32 %v1215, 0.0
        %v1281 = vmax.f32 %v1217, %v1221
        %v1282 = vmax.f32 %v1281, %v1225
        %v1283 = vmax.f32 %v1282, %v1229
        %v1284 = vmax.f32 %v1283, %v1233
        %v1285 = vmax.f32 %v1284, %v1237
        %v1286 = vmax.f32 %v1285, %v1241
        %v1287 = vmax.f32 %v1286, %v1245
        %v1288 = vrot.slane %v1287, 4
        %v1289 = vmax.f32 %v1287, %v1288
        %v1290 = vrot.slane %v1289, 2
        %v1291 = vmax.f32 %v1289, %v1290
        %v1292 = vrot.slane %v1291, 1
        %v1293 = vmax.f32 %v1291, %v1292
        %v1294 = vmax.f32 %v1218, %v1222
        %v1295 = vmax.f32 %v1294, %v1226
        %v1296 = vmax.f32 %v1295, %v1230
        %v1297 = vmax.f32 %v1296, %v1234
        %v1298 = vmax.f32 %v1297, %v1238
        %v1299 = vmax.f32 %v1298, %v1242
        %v1300 = vmax.f32 %v1299, %v1246
        %v1301 = vrot.slane %v1300, 4
        %v1302 = vmax.f32 %v1300, %v1301
        %v1303 = vrot.slane %v1302, 2
        %v1304 = vmax.f32 %v1302, %v1303
        %v1305 = vrot.slane %v1304, 1
        %v1306 = vmax.f32 %v1304, %v1305
        %v1307 = vmax.f32 %v1219, %v1223
        %v1308 = vmax.f32 %v1307, %v1227
        %v1309 = vmax.f32 %v1308, %v1231
        %v1310 = vmax.f32 %v1309, %v1235
        %v1311 = vmax.f32 %v1310, %v1239
        %v1312 = vmax.f32 %v1311, %v1243
        %v1313 = vmax.f32 %v1312, %v1247
        %v1314 = vrot.slane %v1313, 4
        %v1315 = vmax.f32 %v1313, %v1314
        %v1316 = vrot.slane %v1315, 2
        %v1317 = vmax.f32 %v1315, %v1316
        %v1318 = vrot.slane %v1317, 1
        %v1319 = vmax.f32 %v1317, %v1318
        %v1320 = vmax.f32 %v1220, %v1224
        %v1321 = vmax.f32 %v1320, %v1228
        %v1322 = vmax.f32 %v1321, %v1232
        %v1323 = vmax.f32 %v1322, %v1236
        %v1324 = vmax.f32 %v1323, %v1240
        %v1325 = vmax.f32 %v1324, %v1244
        %v1326 = vmax.f32 %v1325, %v1248
        %v1327 = vrot.slane %v1326, 4
        %v1328 = vmax.f32 %v1326, %v1327
        %v1329 = vrot.slane %v1328, 2
        %v1330 = vmax.f32 %v1328, %v1329
        %v1331 = vrot.slane %v1330, 1
        %v1332 = vmax.f32 %v1330, %v1331
        %v1333 = vmax.f32 %v1249, %v1253
        %v1334 = vmax.f32 %v1333, %v1257
        %v1335 = vmax.f32 %v1334, %v1261
        %v1336 = vmax.f32 %v1335, %v1265
        %v1337 = vmax.f32 %v1336, %v1269
        %v1338 = vmax.f32 %v1337, %v1273
        %v1339 = vmax.f32 %v1338, %v1277
        %v1340 = vrot.slane %v1339, 4
        %v1341 = vmax.f32 %v1339, %v1340
        %v1342 = vrot.slane %v1341, 2
        %v1343 = vmax.f32 %v1341, %v1342
        %v1344 = vrot.slane %v1343, 1
        %v1345 = vmax.f32 %v1343, %v1344
        %v1346 = vmax.f32 %v1250, %v1254
        %v1347 = vmax.f32 %v1346, %v1258
        %v1348 = vmax.f32 %v1347, %v1262
        %v1349 = vmax.f32 %v1348, %v1266
        %v1350 = vmax.f32 %v1349, %v1270
        %v1351 = vmax.f32 %v1350, %v1274
        %v1352 = vmax.f32 %v1351, %v1278
        %v1353 = vrot.slane %v1352, 4
        %v1354 = vmax.f32 %v1352, %v1353
        %v1355 = vrot.slane %v1354, 2
        %v1356 = vmax.f32 %v1354, %v1355
        %v1357 = vrot.slane %v1356, 1
        %v1358 = vmax.f32 %v1356, %v1357
        %v1359 = vmax.f32 %v1251, %v1255
        %v1360 = vmax.f32 %v1359, %v1259
        %v1361 = vmax.f32 %v1360, %v1263
        %v1362 = vmax.f32 %v1361, %v1267
        %v1363 = vmax.f32 %v1362, %v1271
        %v1364 = vmax.f32 %v1363, %v1275
        %v1365 = vmax.f32 %v1364, %v1279
        %v1366 = vrot.slane %v1365, 4
        %v1367 = vmax.f32 %v1365, %v1366
        %v1368 = vrot.slane %v1367, 2
        %v1369 = vmax.f32 %v1367, %v1368
        %v1370 = vrot.slane %v1369, 1
        %v1371 = vmax.f32 %v1369, %v1370
        %v1372 = vmax.f32 %v1252, %v1256
        %v1373 = vmax.f32 %v1372, %v1260
        %v1374 = vmax.f32 %v1373, %v1264
        %v1375 = vmax.f32 %v1374, %v1268
        %v1376 = vmax.f32 %v1375, %v1272
        %v1377 = vmax.f32 %v1376, %v1276
        %v1378 = vmax.f32 %v1377, %v1280
        %v1379 = vrot.slane %v1378, 4
        %v1380 = vmax.f32 %v1378, %v1379
        %v1381 = vrot.slane %v1380, 2
        %v1382 = vmax.f32 %v1380, %v1381
        %v1383 = vrot.slane %v1382, 1
        %v1384 = vmax.f32 %v1382, %v1383
        %v1385 = vld [vmem:[#allocation3] sm:$0xff]
        %v1394 = vcombine.low %v1293, %v1306
        %v1395 = vcombine.low %v1319, %v1332
        %v1397 = vunpack.c.l.s4 1983009808
        %v1398 = vunpack.c.0.s8 %v1397
        %v1399 = vlaneseq
        %v1400 = vshrl.u32 %v1399, 7
        %v1401 = vsub.s32 %v1398, %v1400
        %v1402 = vrot.slane %v1394, %v1401
        %v1404 = vunpack.c.l.s4 1983009808
        %v1405 = vunpack.c.0.s8 %v1404
        %v1406 = vlaneseq
        %v1407 = vshrl.u32 %v1406, 7
        %v1408 = vsub.s32 %v1405, %v1407
        %v1409 = vrot.slane %v1395, %v1408
        %v1410 = vcombine.low %v1402, %v1409
        %v1411 = vcombine.low %v1345, %v1358
        %v1412 = vcombine.low %v1371, %v1384
        %v1414 = vunpack.c.l.s4 1983009808
        %v1415 = vunpack.c.0.s8 %v1414
        %v1416 = vlaneseq
        %v1417 = vshrl.u32 %v1416, 7
        %v1418 = vsub.s32 %v1415, %v1417
        %v1419 = vrot.slane %v1411, %v1418
        %v1421 = vunpack.c.l.s4 1983009808
        %v1422 = vunpack.c.0.s8 %v1421
        %v1423 = vlaneseq
        %v1424 = vshrl.u32 %v1423, 7
        %v1425 = vsub.s32 %v1422, %v1424
        %v1426 = vrot.slane %v1412, %v1425
        %v1427 = vcombine.low %v1419, %v1426
        %vm1428 = vcmask 1044484
        %v1429 = vsel %vm1428, %v1410, %v1410
        %vm1430 = vcmask 1046534
        %v1431 = vsel %vm1430, %v1410, %v1429
        %v1432 = vrot.slane %v1427, 7
        %vm1433 = vcmask 1041409
        %v1434 = vsel %vm1433, %v1432, %v1431
        %vm1435 = vcmask 1043459
        %v1436 = vsel %vm1435, %v1432, %v1434
        %vm1437 = vcmask 1045509
        %v1438 = vsel %vm1437, %v1432, %v1436
        %vm1439 = vcmask 1047559
        %v1440 = vsel %vm1439, %v1432, %v1438
        %v1442 = vmax.f32 %v1385, %v1440
        %1443 = vst [vmem:[#allocation3] sm:$0xff] %v1442
      %v1444 = vld [vmem:[#allocation3] sm:$0xff]
      %v1446 = vcombine.high %v1444, %v1444
      %v1448 = vunpack.c.l.s4 1983009808
      %v1449 = vunpack.c.0.s8 %v1448
      %v1450 = vlaneseq
      %v1451 = vshrl.u32 %v1450, 7
      %v1452 = vsub.s32 %v1449, %v1451
      %v1453 = vrot.slane %v1444, %v1452
      %v1455 = vunpack.c.l.s4 1983009808
      %v1456 = vunpack.c.0.s8 %v1455
      %v1457 = vlaneseq
      %v1458 = vshrl.u32 %v1457, 7
      %v1459 = vsub.s32 %v1456, %v1458
      %v1460 = vrot.slane %v1446, %v1459
      %v1461 = vcombine.high %v1453, %v1453
      %v1462 = vcombine.high %v1460, %v1460
      %v1467 = vpack.c.bf16 %v1453, %v1453
      %v1468 = vpack.c.bf16 %v1461, %v1461
      %v1469 = vpack.c.bf16 %v1460, %v1460
      %v1470 = vpack.c.bf16 %v1462, %v1462
      %v1471 = vld [vmem:[%s9] sm:$0xf]
      %v1472 = vld [vmem:[%s9 + $0x4] sm:$0xf]
      %v1473 = vld [vmem:[%s9 + $0x8] sm:$0xf]
      %v1474 = vld [vmem:[%s9 + $0xc] sm:$0xf]
      %v1475 = vld [vmem:[%s9 + $0x10] sm:$0xf]
      %v1476 = vld [vmem:[%s9 + $0x14] sm:$0xf]
      %v1477 = vld [vmem:[%s9 + $0x18] sm:$0xf]
      %v1478 = vld [vmem:[%s9 + $0x1c] sm:$0xf]
      %v1479 = vld [vmem:[%s9 + $0x20] sm:$0xf]
      %v1480 = vld [vmem:[%s9 + $0x24] sm:$0xf]
      %v1481 = vld [vmem:[%s9 + $0x28] sm:$0xf]
      %v1482 = vld [vmem:[%s9 + $0x2c] sm:$0xf]
      %v1483 = vld [vmem:[%s9 + $0x30] sm:$0xf]
      %v1484 = vld [vmem:[%s9 + $0x34] sm:$0xf]
      %v1485 = vld [vmem:[%s9 + $0x38] sm:$0xf]
      %v1486 = vld [vmem:[%s9 + $0x3c] sm:$0xf]
      %v1487 = vld [vmem:[%s9 + $0x40] sm:$0xf]
      %v1488 = vld [vmem:[%s9 + $0x44] sm:$0xf]
      %v1489 = vld [vmem:[%s9 + $0x48] sm:$0xf]
      %v1490 = vld [vmem:[%s9 + $0x4c] sm:$0xf]
      %v1491 = vld [vmem:[%s9 + $0x50] sm:$0xf]
      %v1492 = vld [vmem:[%s9 + $0x54] sm:$0xf]
      %v1493 = vld [vmem:[%s9 + $0x58] sm:$0xf]
      %v1494 = vld [vmem:[%s9 + $0x5c] sm:$0xf]
      %v1495 = vld [vmem:[%s9 + $0x60] sm:$0xf]
      %v1496 = vld [vmem:[%s9 + $0x64] sm:$0xf]
      %v1497 = vld [vmem:[%s9 + $0x68] sm:$0xf]
      %v1498 = vld [vmem:[%s9 + $0x6c] sm:$0xf]
      %v1499 = vld [vmem:[%s9 + $0x70] sm:$0xf]
      %v1500 = vld [vmem:[%s9 + $0x74] sm:$0xf]
      %v1501 = vld [vmem:[%s9 + $0x78] sm:$0xf]
      %v1502 = vld [vmem:[%s9 + $0x7c] sm:$0xf]
      %v1503 = vld [vmem:[%s9 + $0x80] sm:$0xf]
      %v1504 = vld [vmem:[%s9 + $0x84] sm:$0xf]
      %v1505 = vld [vmem:[%s9 + $0x88] sm:$0xf]
      %v1506 = vld [vmem:[%s9 + $0x8c] sm:$0xf]
      %v1507 = vld [vmem:[%s9 + $0x90] sm:$0xf]
      %v1508 = vld [vmem:[%s9 + $0x94] sm:$0xf]
      %v1509 = vld [vmem:[%s9 + $0x98] sm:$0xf]
      %v1510 = vld [vmem:[%s9 + $0x9c] sm:$0xf]
      %v1511 = vld [vmem:[%s9 + $0xa0] sm:$0xf]
      %v1512 = vld [vmem:[%s9 + $0xa4] sm:$0xf]
      %v1513 = vld [vmem:[%s9 + $0xa8] sm:$0xf]
      %v1514 = vld [vmem:[%s9 + $0xac] sm:$0xf]
      %v1515 = vld [vmem:[%s9 + $0xb0] sm:$0xf]
      %v1516 = vld [vmem:[%s9 + $0xb4] sm:$0xf]
      %v1517 = vld [vmem:[%s9 + $0xb8] sm:$0xf]
      %v1518 = vld [vmem:[%s9 + $0xbc] sm:$0xf]
      %v1519 = vld [vmem:[%s9 + $0xc0] sm:$0xf]
      %v1520 = vld [vmem:[%s9 + $0xc4] sm:$0xf]
      %v1521 = vld [vmem:[%s9 + $0xc8] sm:$0xf]
      %v1522 = vld [vmem:[%s9 + $0xcc] sm:$0xf]
      %v1523 = vld [vmem:[%s9 + $0xd0] sm:$0xf]
      %v1524 = vld [vmem:[%s9 + $0xd4] sm:$0xf]
      %v1525 = vld [vmem:[%s9 + $0xd8] sm:$0xf]
      %v1526 = vld [vmem:[%s9 + $0xdc] sm:$0xf]
      %v1527 = vld [vmem:[%s9 + $0xe0] sm:$0xf]
      %v1528 = vld [vmem:[%s9 + $0xe4] sm:$0xf]
      %v1529 = vld [vmem:[%s9 + $0xe8] sm:$0xf]
      %v1530 = vld [vmem:[%s9 + $0xec] sm:$0xf]
      %v1531 = vld [vmem:[%s9 + $0xf0] sm:$0xf]
      %v1532 = vld [vmem:[%s9 + $0xf4] sm:$0xf]
      %v1533 = vld [vmem:[%s9 + $0xf8] sm:$0xf]
      %v1534 = vld [vmem:[%s9 + $0xfc] sm:$0xf]
      %v1535 = vld [vmem:[%s10] sm:$0x1]
      %v1537 = vlaneseq
      %v1538 = vshrl.u32 %v1537, 7
      %v1539 = vsub.s32 0, %v1538
      %v1540 = vrot.slane %v1535, %v1539
      %v1606 = vunpack.c.l.b16 %v1471
      %v1607 = vunpack.c.l.b16 %v1472
      %v1608 = vunpack.c.l.b16 %v1473
      %v1609 = vunpack.c.l.b16 %v1474
      %v1610 = vunpack.c.l.b16 %v1475
      %v1611 = vunpack.c.l.b16 %v1476
      %v1612 = vunpack.c.l.b16 %v1477
      %v1613 = vunpack.c.l.b16 %v1478
      %v1614 = vunpack.c.l.b16 %v1479
      %v1615 = vunpack.c.l.b16 %v1480
      %v1616 = vunpack.c.l.b16 %v1481
      %v1617 = vunpack.c.l.b16 %v1482
      %v1618 = vunpack.c.l.b16 %v1483
      %v1619 = vunpack.c.l.b16 %v1484
      %v1620 = vunpack.c.l.b16 %v1485
      %v1621 = vunpack.c.l.b16 %v1486
      %v1622 = vunpack.c.l.b16 %v1487
      %v1623 = vunpack.c.l.b16 %v1488
      %v1624 = vunpack.c.l.b16 %v1489
      %v1625 = vunpack.c.l.b16 %v1490
      %v1626 = vunpack.c.l.b16 %v1491
      %v1627 = vunpack.c.l.b16 %v1492
      %v1628 = vunpack.c.l.b16 %v1493
      %v1629 = vunpack.c.l.b16 %v1494
      %v1630 = vunpack.c.l.b16 %v1495
      %v1631 = vunpack.c.l.b16 %v1496
      %v1632 = vunpack.c.l.b16 %v1497
      %v1633 = vunpack.c.l.b16 %v1498
      %v1634 = vunpack.c.l.b16 %v1499
      %v1635 = vunpack.c.l.b16 %v1500
      %v1636 = vunpack.c.l.b16 %v1501
      %v1637 = vunpack.c.l.b16 %v1502
      %v1638 = vunpack.c.l.b16 %v1503
      %v1639 = vunpack.c.l.b16 %v1504
      %v1640 = vunpack.c.l.b16 %v1505
      %v1641 = vunpack.c.l.b16 %v1506
      %v1642 = vunpack.c.l.b16 %v1507
      %v1643 = vunpack.c.l.b16 %v1508
      %v1644 = vunpack.c.l.b16 %v1509
      %v1645 = vunpack.c.l.b16 %v1510
      %v1646 = vunpack.c.l.b16 %v1511
      %v1647 = vunpack.c.l.b16 %v1512
      %v1648 = vunpack.c.l.b16 %v1513
      %v1649 = vunpack.c.l.b16 %v1514
      %v1650 = vunpack.c.l.b16 %v1515
      %v1651 = vunpack.c.l.b16 %v1516
      %v1652 = vunpack.c.l.b16 %v1517
      %v1653 = vunpack.c.l.b16 %v1518
      %v1654 = vunpack.c.l.b16 %v1519
      %v1655 = vunpack.c.l.b16 %v1520
      %v1656 = vunpack.c.l.b16 %v1521
      %v1657 = vunpack.c.l.b16 %v1522
      %v1658 = vunpack.c.l.b16 %v1523
      %v1659 = vunpack.c.l.b16 %v1524
      %v1660 = vunpack.c.l.b16 %v1525
      %v1661 = vunpack.c.l.b16 %v1526
      %v1662 = vunpack.c.l.b16 %v1527
      %v1663 = vunpack.c.l.b16 %v1528
      %v1664 = vunpack.c.l.b16 %v1529
      %v1665 = vunpack.c.l.b16 %v1530
      %v1666 = vunpack.c.l.b16 %v1531
      %v1667 = vunpack.c.l.b16 %v1532
      %v1668 = vunpack.c.l.b16 %v1533
      %v1669 = vunpack.c.l.b16 %v1534
      %v1670 = vpack.c.b16 %v1607, %v1606
      %v1671 = vpack.c.b16 %v1609, %v1608
      %v1672 = vpack.c.b16 %v1611, %v1610
      %v1673 = vpack.c.b16 %v1613, %v1612
      %v1674 = vpack.c.b16 %v1615, %v1614
      %v1675 = vpack.c.b16 %v1617, %v1616
      %v1676 = vpack.c.b16 %v1619, %v1618
      %v1677 = vpack.c.b16 %v1621, %v1620
      %v1678 = vpack.c.b16 %v1623, %v1622
      %v1679 = vpack.c.b16 %v1625, %v1624
      %v1680 = vpack.c.b16 %v1627, %v1626
      %v1681 = vpack.c.b16 %v1629, %v1628
      %v1682 = vpack.c.b16 %v1631, %v1630
      %v1683 = vpack.c.b16 %v1633, %v1632
      %v1684 = vpack.c.b16 %v1635, %v1634
      %v1685 = vpack.c.b16 %v1637, %v1636
      %v1686 = vpack.c.b16 %v1639, %v1638
      %v1687 = vpack.c.b16 %v1641, %v1640
      %v1688 = vpack.c.b16 %v1643, %v1642
      %v1689 = vpack.c.b16 %v1645, %v1644
      %v1690 = vpack.c.b16 %v1647, %v1646
      %v1691 = vpack.c.b16 %v1649, %v1648
      %v1692 = vpack.c.b16 %v1651, %v1650
      %v1693 = vpack.c.b16 %v1653, %v1652
      %v1694 = vpack.c.b16 %v1655, %v1654
      %v1695 = vpack.c.b16 %v1657, %v1656
      %v1696 = vpack.c.b16 %v1659, %v1658
      %v1697 = vpack.c.b16 %v1661, %v1660
      %v1698 = vpack.c.b16 %v1663, %v1662
      %v1699 = vpack.c.b16 %v1665, %v1664
      %v1700 = vpack.c.b16 %v1667, %v1666
      %v1701 = vpack.c.b16 %v1669, %v1668
      %1734 = vmatprep.subr.bf16.mxu0 0
      %1735 = vmatpush1.bf16.msra.mxu0 %v1670
      %1736 = vmatprep.subr.bf16.mxu0 0
      %1737 = vmatpush1.bf16.msra.mxu0 %v1671
      %1738 = vmatprep.subr.bf16.mxu0 0
      %1739 = vmatpush1.bf16.msra.mxu0 %v1672
      %1740 = vmatprep.subr.bf16.mxu0 0
      %1741 = vmatpush1.bf16.msra.mxu0 %v1673
      %1742 = vmatprep.subr.bf16.mxu0 0
      %1743 = vmatpush1.bf16.msra.mxu0 %v1674
      %1744 = vmatprep.subr.bf16.mxu0 0
      %1745 = vmatpush1.bf16.msra.mxu0 %v1675
      %1746 = vmatprep.subr.bf16.mxu0 0
      %1747 = vmatpush1.bf16.msra.mxu0 %v1676
      %1748 = vmatprep.subr.bf16.mxu0 0
      %1749 = vmatpush1.bf16.msra.mxu0 %v1677
      %1750 = vmatprep.subr.bf16.mxu0 0
      %1751 = vmatpush1.bf16.msra.mxu0 %v1678
      %1752 = vmatprep.subr.bf16.mxu0 0
      %1753 = vmatpush1.bf16.msra.mxu0 %v1679
      %1754 = vmatprep.subr.bf16.mxu0 0
      %1755 = vmatpush1.bf16.msra.mxu0 %v1680
      %1756 = vmatprep.subr.bf16.mxu0 0
      %1757 = vmatpush1.bf16.msra.mxu0 %v1681
      %1758 = vmatprep.subr.bf16.mxu0 0
      %1759 = vmatpush1.bf16.msra.mxu0 %v1682
      %1760 = vmatprep.subr.bf16.mxu0 0
      %1761 = vmatpush1.bf16.msra.mxu0 %v1683
      %1762 = vmatprep.subr.bf16.mxu0 0
      %1763 = vmatpush1.bf16.msra.mxu0 %v1684
      %1764 = vmatprep.subr.bf16.mxu0 0
      %1765 = vmatpush1.bf16.msra.mxu0 %v1685
      %1766 = vmatprep.mubr.bf16.mxu0 %v1468
      %1767 = vmatmul.mubr.bf16.gmra.mrb[0].mxu0 %v1467
      %v1768 = vpop.f32.mrb[0].mxu0
      %v1769 = vadd.f32 %v1540, %v1768
      %v1770 = vpop.f32.mrb[0].mxu0
      %v1771 = vpop.f32.mrb[0].mxu0
      %v1772 = vpop.f32.mrb[0].mxu0
      %1773 = vdwg.mxu0
      %1774 = vmatprep.subr.bf16.mxu0 0
      %1775 = vmatpush1.bf16.msra.mxu0 %v1686
      %1776 = vmatprep.subr.bf16.mxu0 0
      %1777 = vmatpush1.bf16.msra.mxu0 %v1687
      %1778 = vmatprep.subr.bf16.mxu0 0
      %1779 = vmatpush1.bf16.msra.mxu0 %v1688
      %1780 = vmatprep.subr.bf16.mxu0 0
      %1781 = vmatpush1.bf16.msra.mxu0 %v1689
      %1782 = vmatprep.subr.bf16.mxu0 0
      %1783 = vmatpush1.bf16.msra.mxu0 %v1690
      %1784 = vmatprep.subr.bf16.mxu0 0
      %1785 = vmatpush1.bf16.msra.mxu0 %v1691
      %1786 = vmatprep.subr.bf16.mxu0 0
      %1787 = vmatpush1.bf16.msra.mxu0 %v1692
      %1788 = vmatprep.subr.bf16.mxu0 0
      %1789 = vmatpush1.bf16.msra.mxu0 %v1693
      %1790 = vmatprep.subr.bf16.mxu0 0
      %1791 = vmatpush1.bf16.msra.mxu0 %v1694
      %1792 = vmatprep.subr.bf16.mxu0 0
      %1793 = vmatpush1.bf16.msra.mxu0 %v1695
      %1794 = vmatprep.subr.bf16.mxu0 0
      %1795 = vmatpush1.bf16.msra.mxu0 %v1696
      %1796 = vmatprep.subr.bf16.mxu0 0
      %1797 = vmatpush1.bf16.msra.mxu0 %v1697
      %1798 = vmatprep.subr.bf16.mxu0 0
      %1799 = vmatpush1.bf16.msra.mxu0 %v1698
      %1800 = vmatprep.subr.bf16.mxu0 0
      %1801 = vmatpush1.bf16.msra.mxu0 %v1699
      %1802 = vmatprep.subr.bf16.mxu0 0
      %1803 = vmatpush1.bf16.msra.mxu0 %v1700
      %1804 = vmatprep.subr.bf16.mxu0 0
      %1805 = vmatpush1.bf16.msra.mxu0 %v1701
      %1806 = vmatprep.mubr.bf16.mxu0 %v1470
      %1807 = vmatmul.mubr.bf16.gmra.mrb[0].mxu0 %v1469
      %v1808 = vpop.f32.mrb[0].mxu0
      %v1809 = vadd.f32 %v1769, %v1808
      %v1810 = vpop.f32.mrb[0].mxu0
      %v1811 = vpop.f32.mrb[0].mxu0
      %v1812 = vpop.f32.mrb[0].mxu0
      %1813 = vdwg.mxu0
      %v1814 = vmax.f32 %v1809, 0.0
      %v1815 = vpack.c.bf16 %v1814, %v1814
      %v1816 = vld [vmem:[%s11] sm:$0xff]
      %v1817 = vld [vmem:[%s11 + $0x8] sm:$0xff]
      %v1818 = vld [vmem:[%s11 + $0x10] sm:$0xff]
      %v1819 = vld [vmem:[%s11 + $0x18] sm:$0xff]
      %v1820 = vld [vmem:[%s11 + $0x20] sm:$0xff]
      %v1821 = vld [vmem:[%s11 + $0x28] sm:$0xff]
      %v1822 = vld [vmem:[%s11 + $0x30] sm:$0xff]
      %v1823 = vld [vmem:[%s11 + $0x38] sm:$0xff]
      %v1824 = vld [vmem:[%s11 + $0x40] sm:$0xff]
      %v1825 = vld [vmem:[%s11 + $0x48] sm:$0xff]
      %v1826 = vld [vmem:[%s11 + $0x50] sm:$0xff]
      %v1827 = vld [vmem:[%s11 + $0x58] sm:$0xff]
      %v1828 = vld [vmem:[%s11 + $0x60] sm:$0xff]
      %v1829 = vld [vmem:[%s11 + $0x68] sm:$0xff]
      %v1830 = vld [vmem:[%s11 + $0x70] sm:$0xff]
      %v1831 = vld [vmem:[%s11 + $0x78] sm:$0xff]
      %v1832 = vld [vmem:[%s11 + $0x80] sm:$0xff]
      %v1833 = vld [vmem:[%s11 + $0x88] sm:$0xff]
      %v1834 = vld [vmem:[%s11 + $0x90] sm:$0xff]
      %v1835 = vld [vmem:[%s11 + $0x98] sm:$0xff]
      %v1836 = vld [vmem:[%s11 + $0xa0] sm:$0xff]
      %v1837 = vld [vmem:[%s11 + $0xa8] sm:$0xff]
      %v1838 = vld [vmem:[%s11 + $0xb0] sm:$0xff]
      %v1839 = vld [vmem:[%s11 + $0xb8] sm:$0xff]
      %v1840 = vld [vmem:[%s11 + $0xc0] sm:$0xff]
      %v1841 = vld [vmem:[%s11 + $0xc8] sm:$0xff]
      %v1842 = vld [vmem:[%s11 + $0xd0] sm:$0xff]
      %v1843 = vld [vmem:[%s11 + $0xd8] sm:$0xff]
      %v1844 = vld [vmem:[%s11 + $0xe0] sm:$0xff]
      %v1845 = vld [vmem:[%s11 + $0xe8] sm:$0xff]
      %v1846 = vld [vmem:[%s11 + $0xf0] sm:$0xff]
      %v1847 = vld [vmem:[%s11 + $0xf8] sm:$0xff]
      %v1848 = vld [vmem:[%s11 + $0x100] sm:$0xff]
      %v1849 = vld [vmem:[%s11 + $0x108] sm:$0xff]
      %v1850 = vld [vmem:[%s11 + $0x110] sm:$0xff]
      %v1851 = vld [vmem:[%s11 + $0x118] sm:$0xff]
      %v1852 = vld [vmem:[%s11 + $0x120] sm:$0xff]
      %v1853 = vld [vmem:[%s11 + $0x128] sm:$0xff]
      %v1854 = vld [vmem:[%s11 + $0x130] sm:$0xff]
      %v1855 = vld [vmem:[%s11 + $0x138] sm:$0xff]
      %v1856 = vld [vmem:[%s11 + $0x140] sm:$0xff]
      %v1857 = vld [vmem:[%s11 + $0x148] sm:$0xff]
      %v1858 = vld [vmem:[%s11 + $0x150] sm:$0xff]
      %v1859 = vld [vmem:[%s11 + $0x158] sm:$0xff]
      %v1860 = vld [vmem:[%s11 + $0x160] sm:$0xff]
      %v1861 = vld [vmem:[%s11 + $0x168] sm:$0xff]
      %v1862 = vld [vmem:[%s11 + $0x170] sm:$0xff]
      %v1863 = vld [vmem:[%s11 + $0x178] sm:$0xff]
      %v1864 = vld [vmem:[%s11 + $0x180] sm:$0xff]
      %v1865 = vld [vmem:[%s11 + $0x188] sm:$0xff]
      %v1866 = vld [vmem:[%s11 + $0x190] sm:$0xff]
      %v1867 = vld [vmem:[%s11 + $0x198] sm:$0xff]
      %v1868 = vld [vmem:[%s11 + $0x1a0] sm:$0xff]
      %v1869 = vld [vmem:[%s11 + $0x1a8] sm:$0xff]
      %v1870 = vld [vmem:[%s11 + $0x1b0] sm:$0xff]
      %v1871 = vld [vmem:[%s11 + $0x1b8] sm:$0xff]
      %v1872 = vld [vmem:[%s11 + $0x1c0] sm:$0xff]
      %v1873 = vld [vmem:[%s11 + $0x1c8] sm:$0xff]
      %v1874 = vld [vmem:[%s11 + $0x1d0] sm:$0xff]
      %v1875 = vld [vmem:[%s11 + $0x1d8] sm:$0xff]
      %v1876 = vld [vmem:[%s11 + $0x1e0] sm:$0xff]
      %v1877 = vld [vmem:[%s11 + $0x1e8] sm:$0xff]
      %v1878 = vld [vmem:[%s11 + $0x1f0] sm:$0xff]
      %v1879 = vld [vmem:[%s11 + $0x1f8] sm:$0xff]
      %v1880 = vld [vmem:[%s12] sm:$0xff]
      %v1881 = vld [vmem:[%s12 + $0x8] sm:$0xff]
      %v1884 = vlaneseq
      %v1885 = vshrl.u32 %v1884, 7
      %v1886 = vsub.s32 0, %v1885
      %v1887 = vrot.slane %v1880, %v1886
      %v1888 = vlaneseq
      %v1889 = vshrl.u32 %v1888, 7
      %v1890 = vsub.s32 1, %v1889
      %v1891 = vrot.slane %v1880, %v1890
      %v1892 = vlaneseq
      %v1893 = vshrl.u32 %v1892, 7
      %v1894 = vsub.s32 2, %v1893
      %v1895 = vrot.slane %v1880, %v1894
      %v1896 = vlaneseq
      %v1897 = vshrl.u32 %v1896, 7
      %v1898 = vsub.s32 3, %v1897
      %v1899 = vrot.slane %v1880, %v1898
      %v1900 = vlaneseq
      %v1901 = vshrl.u32 %v1900, 7
      %v1902 = vsub.s32 4, %v1901
      %v1903 = vrot.slane %v1880, %v1902
      %v1904 = vlaneseq
      %v1905 = vshrl.u32 %v1904, 7
      %v1906 = vsub.s32 5, %v1905
      %v1907 = vrot.slane %v1880, %v1906
      %v1908 = vlaneseq
      %v1909 = vshrl.u32 %v1908, 7
      %v1910 = vsub.s32 6, %v1909
      %v1911 = vrot.slane %v1880, %v1910
      %v1912 = vlaneseq
      %v1913 = vshrl.u32 %v1912, 7
      %v1914 = vsub.s32 7, %v1913
      %v1915 = vrot.slane %v1880, %v1914
      %v1916 = vlaneseq
      %v1917 = vshrl.u32 %v1916, 7
      %v1918 = vsub.s32 0, %v1917
      %v1919 = vrot.slane %v1881, %v1918
      %v1920 = vlaneseq
      %v1921 = vshrl.u32 %v1920, 7
      %v1922 = vsub.s32 1, %v1921
      %v1923 = vrot.slane %v1881, %v1922
      %v1924 = vlaneseq
      %v1925 = vshrl.u32 %v1924, 7
      %v1926 = vsub.s32 2, %v1925
      %v1927 = vrot.slane %v1881, %v1926
      %v1928 = vlaneseq
      %v1929 = vshrl.u32 %v1928, 7
      %v1930 = vsub.s32 3, %v1929
      %v1931 = vrot.slane %v1881, %v1930
      %v1932 = vlaneseq
      %v1933 = vshrl.u32 %v1932, 7
      %v1934 = vsub.s32 4, %v1933
      %v1935 = vrot.slane %v1881, %v1934
      %v1936 = vlaneseq
      %v1937 = vshrl.u32 %v1936, 7
      %v1938 = vsub.s32 5, %v1937
      %v1939 = vrot.slane %v1881, %v1938
      %v1940 = vlaneseq
      %v1941 = vshrl.u32 %v1940, 7
      %v1942 = vsub.s32 6, %v1941
      %v1943 = vrot.slane %v1881, %v1942
      %v1944 = vlaneseq
      %v1945 = vshrl.u32 %v1944, 7
      %v1946 = vsub.s32 7, %v1945
      %v1947 = vrot.slane %v1881, %v1946
      %v2028 = vunpack.c.l.b16 %v1816
      %v2029 = vunpack.c.h.b16 %v1816
      %v2030 = vunpack.c.l.b16 %v1817
      %v2031 = vunpack.c.h.b16 %v1817
      %v2032 = vunpack.c.l.b16 %v1818
      %v2033 = vunpack.c.h.b16 %v1818
      %v2034 = vunpack.c.l.b16 %v1819
      %v2035 = vunpack.c.h.b16 %v1819
      %v2036 = vunpack.c.l.b16 %v1820
      %v2037 = vunpack.c.h.b16 %v1820
      %v2038 = vunpack.c.l.b16 %v1821
      %v2039 = vunpack.c.h.b16 %v1821
      %v2040 = vunpack.c.l.b16 %v1822
      %v2041 = vunpack.c.h.b16 %v1822
      %v2042 = vunpack.c.l.b16 %v1823
      %v2043 = vunpack.c.h.b16 %v1823
      %v2044 = vunpack.c.l.b16 %v1824
      %v2045 = vunpack.c.h.b16 %v1824
      %v2046 = vunpack.c.l.b16 %v1825
      %v2047 = vunpack.c.h.b16 %v1825
      %v2048 = vunpack.c.l.b16 %v1826
      %v2049 = vunpack.c.h.b16 %v1826
      %v2050 = vunpack.c.l.b16 %v1827
      %v2051 = vunpack.c.h.b16 %v1827
      %v2052 = vunpack.c.l.b16 %v1828
      %v2053 = vunpack.c.h.b16 %v1828
      %v2054 = vunpack.c.l.b16 %v1829
      %v2055 = vunpack.c.h.b16 %v1829
      %v2056 = vunpack.c.l.b16 %v1830
      %v2057 = vunpack.c.h.b16 %v1830
      %v2058 = vunpack.c.l.b16 %v1831
      %v2059 = vunpack.c.h.b16 %v1831
      %v2060 = vunpack.c.l.b16 %v1832
      %v2061 = vunpack.c.h.b16 %v1832
      %v2062 = vunpack.c.l.b16 %v1833
      %v2063 = vunpack.c.h.b16 %v1833
      %v2064 = vunpack.c.l.b16 %v1834
      %v2065 = vunpack.c.h.b16 %v1834
      %v2066 = vunpack.c.l.b16 %v1835
      %v2067 = vunpack.c.h.b16 %v1835
      %v2068 = vunpack.c.l.b16 %v1836
      %v2069 = vunpack.c.h.b16 %v1836
      %v2070 = vunpack.c.l.b16 %v1837
      %v2071 = vunpack.c.h.b16 %v1837
      %v2072 = vunpack.c.l.b16 %v1838
      %v2073 = vunpack.c.h.b16 %v1838
      %v2074 = vunpack.c.l.b16 %v1839
      %v2075 = vunpack.c.h.b16 %v1839
      %v2076 = vunpack.c.l.b16 %v1840
      %v2077 = vunpack.c.h.b16 %v1840
      %v2078 = vunpack.c.l.b16 %v1841
      %v2079 = vunpack.c.h.b16 %v1841
      %v2080 = vunpack.c.l.b16 %v1842
      %v2081 = vunpack.c.h.b16 %v1842
      %v2082 = vunpack.c.l.b16 %v1843
      %v2083 = vunpack.c.h.b16 %v1843
      %v2084 = vunpack.c.l.b16 %v1844
      %v2085 = vunpack.c.h.b16 %v1844
      %v2086 = vunpack.c.l.b16 %v1845
      %v2087 = vunpack.c.h.b16 %v1845
      %v2088 = vunpack.c.l.b16 %v1846
      %v2089 = vunpack.c.h.b16 %v1846
      %v2090 = vunpack.c.l.b16 %v1847
      %v2091 = vunpack.c.h.b16 %v1847
      %v2092 = vunpack.c.l.b16 %v1848
      %v2093 = vunpack.c.h.b16 %v1848
      %v2094 = vunpack.c.l.b16 %v1849
      %v2095 = vunpack.c.h.b16 %v1849
      %v2096 = vunpack.c.l.b16 %v1850
      %v2097 = vunpack.c.h.b16 %v1850
      %v2098 = vunpack.c.l.b16 %v1851
      %v2099 = vunpack.c.h.b16 %v1851
      %v2100 = vunpack.c.l.b16 %v1852
      %v2101 = vunpack.c.h.b16 %v1852
      %v2102 = vunpack.c.l.b16 %v1853
      %v2103 = vunpack.c.h.b16 %v1853
      %v2104 = vunpack.c.l.b16 %v1854
      %v2105 = vunpack.c.h.b16 %v1854
      %v2106 = vunpack.c.l.b16 %v1855
      %v2107 = vunpack.c.h.b16 %v1855
      %v2108 = vunpack.c.l.b16 %v1856
      %v2109 = vunpack.c.h.b16 %v1856
      %v2110 = vunpack.c.l.b16 %v1857
      %v2111 = vunpack.c.h.b16 %v1857
      %v2112 = vunpack.c.l.b16 %v1858
      %v2113 = vunpack.c.h.b16 %v1858
      %v2114 = vunpack.c.l.b16 %v1859
      %v2115 = vunpack.c.h.b16 %v1859
      %v2116 = vunpack.c.l.b16 %v1860
      %v2117 = vunpack.c.h.b16 %v1860
      %v2118 = vunpack.c.l.b16 %v1861
      %v2119 = vunpack.c.h.b16 %v1861
      %v2120 = vunpack.c.l.b16 %v1862
      %v2121 = vunpack.c.h.b16 %v1862
      %v2122 = vunpack.c.l.b16 %v1863
      %v2123 = vunpack.c.h.b16 %v1863
      %v2124 = vunpack.c.l.b16 %v1864
      %v2125 = vunpack.c.h.b16 %v1864
      %v2126 = vunpack.c.l.b16 %v1865
      %v2127 = vunpack.c.h.b16 %v1865
      %v2128 = vunpack.c.l.b16 %v1866
      %v2129 = vunpack.c.h.b16 %v1866
      %v2130 = vunpack.c.l.b16 %v1867
      %v2131 = vunpack.c.h.b16 %v1867
      %v2132 = vunpack.c.l.b16 %v1868
      %v2133 = vunpack.c.h.b16 %v1868
      %v2134 = vunpack.c.l.b16 %v1869
      %v2135 = vunpack.c.h.b16 %v1869
      %v2136 = vunpack.c.l.b16 %v1870
      %v2137 = vunpack.c.h.b16 %v1870
      %v2138 = vunpack.c.l.b16 %v1871
      %v2139 = vunpack.c.h.b16 %v1871
      %v2140 = vunpack.c.l.b16 %v1872
      %v2141 = vunpack.c.h.b16 %v1872
      %v2142 = vunpack.c.l.b16 %v1873
      %v2143 = vunpack.c.h.b16 %v1873
      %v2144 = vunpack.c.l.b16 %v1874
      %v2145 = vunpack.c.h.b16 %v1874
      %v2146 = vunpack.c.l.b16 %v1875
      %v2147 = vunpack.c.h.b16 %v1875
      %v2148 = vunpack.c.l.b16 %v1876
      %v2149 = vunpack.c.h.b16 %v1876
      %v2150 = vunpack.c.l.b16 %v1877
      %v2151 = vunpack.c.h.b16 %v1877
      %v2152 = vunpack.c.l.b16 %v1878
      %v2153 = vunpack.c.h.b16 %v1878
      %v2154 = vunpack.c.l.b16 %v1879
      %v2155 = vunpack.c.h.b16 %v1879
      %v2156 = vpack.c.b16 %v2044, %v2028
      %v2157 = vpack.c.b16 %v2045, %v2029
      %v2158 = vpack.c.b16 %v2046, %v2030
      %v2159 = vpack.c.b16 %v2047, %v2031
      %v2160 = vpack.c.b16 %v2048, %v2032
      %v2161 = vpack.c.b16 %v2049, %v2033
      %v2162 = vpack.c.b16 %v2050, %v2034
      %v2163 = vpack.c.b16 %v2051, %v2035
      %v2164 = vpack.c.b16 %v2052, %v2036
      %v2165 = vpack.c.b16 %v2053, %v2037
      %v2166 = vpack.c.b16 %v2054, %v2038
      %v2167 = vpack.c.b16 %v2055, %v2039
      %v2168 = vpack.c.b16 %v2056, %v2040
      %v2169 = vpack.c.b16 %v2057, %v2041
      %v2170 = vpack.c.b16 %v2058, %v2042
      %v2171 = vpack.c.b16 %v2059, %v2043
      %v2172 = vpack.c.b16 %v2076, %v2060
      %v2173 = vpack.c.b16 %v2077, %v2061
      %v2174 = vpack.c.b16 %v2078, %v2062
      %v2175 = vpack.c.b16 %v2079, %v2063
      %v2176 = vpack.c.b16 %v2080, %v2064
      %v2177 = vpack.c.b16 %v2081, %v2065
      %v2178 = vpack.c.b16 %v2082, %v2066
      %v2179 = vpack.c.b16 %v2083, %v2067
      %v2180 = vpack.c.b16 %v2084, %v2068
      %v2181 = vpack.c.b16 %v2085, %v2069
      %v2182 = vpack.c.b16 %v2086, %v2070
      %v2183 = vpack.c.b16 %v2087, %v2071
      %v2184 = vpack.c.b16 %v2088, %v2072
      %v2185 = vpack.c.b16 %v2089, %v2073
      %v2186 = vpack.c.b16 %v2090, %v2074
      %v2187 = vpack.c.b16 %v2091, %v2075
      %v2188 = vpack.c.b16 %v2108, %v2092
      %v2189 = vpack.c.b16 %v2109, %v2093
      %v2190 = vpack.c.b16 %v2110, %v2094
      %v2191 = vpack.c.b16 %v2111, %v2095
      %v2192 = vpack.c.b16 %v2112, %v2096
      %v2193 = vpack.c.b16 %v2113, %v2097
      %v2194 = vpack.c.b16 %v2114, %v2098
      %v2195 = vpack.c.b16 %v2115, %v2099
      %v2196 = vpack.c.b16 %v2116, %v2100
      %v2197 = vpack.c.b16 %v2117, %v2101
      %v2198 = vpack.c.b16 %v2118, %v2102
      %v2199 = vpack.c.b16 %v2119, %v2103
      %v2200 = vpack.c.b16 %v2120, %v2104
      %v2201 = vpack.c.b16 %v2121, %v2105
      %v2202 = vpack.c.b16 %v2122, %v2106
      %v2203 = vpack.c.b16 %v2123, %v2107
      %v2204 = vpack.c.b16 %v2140, %v2124
      %v2205 = vpack.c.b16 %v2141, %v2125
      %v2206 = vpack.c.b16 %v2142, %v2126
      %v2207 = vpack.c.b16 %v2143, %v2127
      %v2208 = vpack.c.b16 %v2144, %v2128
      %v2209 = vpack.c.b16 %v2145, %v2129
      %v2210 = vpack.c.b16 %v2146, %v2130
      %v2211 = vpack.c.b16 %v2147, %v2131
      %v2212 = vpack.c.b16 %v2148, %v2132
      %v2213 = vpack.c.b16 %v2149, %v2133
      %v2214 = vpack.c.b16 %v2150, %v2134
      %v2215 = vpack.c.b16 %v2151, %v2135
      %v2216 = vpack.c.b16 %v2152, %v2136
      %v2217 = vpack.c.b16 %v2153, %v2137
      %v2218 = vpack.c.b16 %v2154, %v2138
      %v2219 = vpack.c.b16 %v2155, %v2139
      %vm2284 = vcmask 523264
      %v2286 = vsel %vm2284, %v1815, 0
      %2288 = vmatprep.subr.bf16.mxu0 %v2157
      %2289 = vmatpush1.bf16.msra.mxu0 %v2156
      %2290 = vmatprep.subr.bf16.mxu0 %v2173
      %2291 = vmatpush1.bf16.msra.mxu0 %v2172
      %2292 = vmatprep.subr.bf16.mxu0 %v2189
      %2293 = vmatpush1.bf16.msra.mxu0 %v2188
      %2294 = vmatprep.subr.bf16.mxu0 %v2205
      %2295 = vmatpush1.bf16.msra.mxu0 %v2204
      %2296 = vmatprep.subr.bf16.mxu0 0
      %2297 = vmatpush1.bf16.msra.mxu0 0
      %2298 = vmatprep.subr.bf16.mxu0 0
      %2299 = vmatpush1.bf16.msra.mxu0 0
      %2300 = vmatprep.subr.bf16.mxu0 0
      %2301 = vmatpush1.bf16.msra.mxu0 0
      %2302 = vmatprep.subr.bf16.mxu0 0
      %2303 = vmatpush1.bf16.msra.mxu0 0
      %2304 = vmatprep.subr.bf16.mxu0 0
      %2305 = vmatpush1.bf16.msra.mxu0 0
      %2306 = vmatprep.subr.bf16.mxu0 0
      %2307 = vmatpush1.bf16.msra.mxu0 0
      %2308 = vmatprep.subr.bf16.mxu0 0
      %2309 = vmatpush1.bf16.msra.mxu0 0
      %2310 = vmatprep.subr.bf16.mxu0 0
      %2311 = vmatpush1.bf16.msra.mxu0 0
      %2312 = vmatprep.subr.bf16.mxu0 0
      %2313 = vmatpush1.bf16.msra.mxu0 0
      %2314 = vmatprep.subr.bf16.mxu0 0
      %2315 = vmatpush1.bf16.msra.mxu0 0
      %2316 = vmatprep.subr.bf16.mxu0 0
      %2317 = vmatpush1.bf16.msra.mxu0 0
      %2318 = vmatprep.subr.bf16.mxu0 0
      %2319 = vmatpush1.bf16.msra.mxu0 0
      %2320 = vmatprep.mubr.bf16.mxu0 0
      %2321 = vmatmul.mubr.bf16.gmra.mrb[0].mxu0 %v2286
      %v2322 = vpop.f32.mrb[0].mxu0
      %v2323 = vadd.f32 %v1887, %v2322
      %v2324 = vpop.f32.mrb[0].mxu0
      %v2325 = vadd.f32 %v1891, %v2324
      %v2326 = vpop.f32.mrb[0].mxu0
      %v2327 = vpop.f32.mrb[0].mxu0
      %2328 = vdwg.mxu0
      %2329 = vmatprep.subr.bf16.mxu0 %v2159
      %2330 = vmatpush1.bf16.msra.mxu0 %v2158
      %2331 = vmatprep.subr.bf16.mxu0 %v2175
      %2332 = vmatpush1.bf16.msra.mxu0 %v2174
      %2333 = vmatprep.subr.bf16.mxu0 %v2191
      %2334 = vmatpush1.bf16.msra.mxu0 %v2190
      %2335 = vmatprep.subr.bf16.mxu0 %v2207
      %2336 = vmatpush1.bf16.msra.mxu0 %v2206
      %2337 = vmatprep.subr.bf16.mxu0 0
      %2338 = vmatpush1.bf16.msra.mxu0 0
      %2339 = vmatprep.subr.bf16.mxu0 0
      %2340 = vmatpush1.bf16.msra.mxu0 0
      %2341 = vmatprep.subr.bf16.mxu0 0
      %2342 = vmatpush1.bf16.msra.mxu0 0
      %2343 = vmatprep.subr.bf16.mxu0 0
      %2344 = vmatpush1.bf16.msra.mxu0 0
      %2345 = vmatprep.subr.bf16.mxu0 0
      %2346 = vmatpush1.bf16.msra.mxu0 0
      %2347 = vmatprep.subr.bf16.mxu0 0
      %2348 = vmatpush1.bf16.msra.mxu0 0
      %2349 = vmatprep.subr.bf16.mxu0 0
      %2350 = vmatpush1.bf16.msra.mxu0 0
      %2351 = vmatprep.subr.bf16.mxu0 0
      %2352 = vmatpush1.bf16.msra.mxu0 0
      %2353 = vmatprep.subr.bf16.mxu0 0
      %2354 = vmatpush1.bf16.msra.mxu0 0
      %2355 = vmatprep.subr.bf16.mxu0 0
      %2356 = vmatpush1.bf16.msra.mxu0 0
      %2357 = vmatprep.subr.bf16.mxu0 0
      %2358 = vmatpush1.bf16.msra.mxu0 0
      %2359 = vmatprep.subr.bf16.mxu0 0
      %2360 = vmatpush1.bf16.msra.mxu0 0
      %2361 = vmatprep.mubr.bf16.mxu0 0
      %2362 = vmatmul.mubr.bf16.gmra.mrb[0].mxu0 %v2286
      %v2363 = vpop.f32.mrb[0].mxu0
      %v2364 = vadd.f32 %v1895, %v2363
      %v2365 = vpop.f32.mrb[0].mxu0
      %v2366 = vadd.f32 %v1899, %v2365
      %v2367 = vpop.f32.mrb[0].mxu0
      %v2368 = vpop.f32.mrb[0].mxu0
      %2369 = vdwg.mxu0
      %2370 = vmatprep.subr.bf16.mxu0 %v2161
      %2371 = vmatpush1.bf16.msra.mxu0 %v2160
      %2372 = vmatprep.subr.bf16.mxu0 %v2177
      %2373 = vmatpush1.bf16.msra.mxu0 %v2176
      %2374 = vmatprep.subr.bf16.mxu0 %v2193
      %2375 = vmatpush1.bf16.msra.mxu0 %v2192
      %2376 = vmatprep.subr.bf16.mxu0 %v2209
      %2377 = vmatpush1.bf16.msra.mxu0 %v2208
      %2378 = vmatprep.subr.bf16.mxu0 0
      %2379 = vmatpush1.bf16.msra.mxu0 0
      %2380 = vmatprep.subr.bf16.mxu0 0
      %2381 = vmatpush1.bf16.msra.mxu0 0
      %2382 = vmatprep.subr.bf16.mxu0 0
      %2383 = vmatpush1.bf16.msra.mxu0 0
      %2384 = vmatprep.subr.bf16.mxu0 0
      %2385 = vmatpush1.bf16.msra.mxu0 0
      %2386 = vmatprep.subr.bf16.mxu0 0
      %2387 = vmatpush1.bf16.msra.mxu0 0
      %2388 = vmatprep.subr.bf16.mxu0 0
      %2389 = vmatpush1.bf16.msra.mxu0 0
      %2390 = vmatprep.subr.bf16.mxu0 0
      %2391 = vmatpush1.bf16.msra.mxu0 0
      %2392 = vmatprep.subr.bf16.mxu0 0
      %2393 = vmatpush1.bf16.msra.mxu0 0
      %2394 = vmatprep.subr.bf16.mxu0 0
      %2395 = vmatpush1.bf16.msra.mxu0 0
      %2396 = vmatprep.subr.bf16.mxu0 0
      %2397 = vmatpush1.bf16.msra.mxu0 0
      %2398 = vmatprep.subr.bf16.mxu0 0
      %2399 = vmatpush1.bf16.msra.mxu0 0
      %2400 = vmatprep.subr.bf16.mxu0 0
      %2401 = vmatpush1.bf16.msra.mxu0 0
      %2402 = vmatprep.mubr.bf16.mxu0 0
      %2403 = vmatmul.mubr.bf16.gmra.mrb[0].mxu0 %v2286
      %v2404 = vpop.f32.mrb[0].mxu0
      %v2405 = vadd.f32 %v1903, %v2404
      %v2406 = vpop.f32.mrb[0].mxu0
      %v2407 = vadd.f32 %v1907, %v2406
      %v2408 = vpop.f32.mrb[0].mxu0
      %v2409 = vpop.f32.mrb[0].mxu0
      %2410 = vdwg.mxu0
      %2411 = vmatprep.subr.bf16.mxu0 %v2163
      %2412 = vmatpush1.bf16.msra.mxu0 %v2162
      %2413 = vmatprep.subr.bf16.mxu0 %v2179
      %2414 = vmatpush1.bf16.msra.mxu0 %v2178
      %2415 = vmatprep.subr.bf16.mxu0 %v2195
      %2416 = vmatpush1.bf16.msra.mxu0 %v2194
      %2417 = vmatprep.subr.bf16.mxu0 %v2211
      %2418 = vmatpush1.bf16.msra.mxu0 %v2210
      %2419 = vmatprep.subr.bf16.mxu0 0
      %2420 = vmatpush1.bf16.msra.mxu0 0
      %2421 = vmatprep.subr.bf16.mxu0 0
      %2422 = vmatpush1.bf16.msra.mxu0 0
      %2423 = vmatprep.subr.bf16.mxu0 0
      %2424 = vmatpush1.bf16.msra.mxu0 0
      %2425 = vmatprep.subr.bf16.mxu0 0
      %2426 = vmatpush1.bf16.msra.mxu0 0
      %2427 = vmatprep.subr.bf16.mxu0 0
      %2428 = vmatpush1.bf16.msra.mxu0 0
      %2429 = vmatprep.subr.bf16.mxu0 0
      %2430 = vmatpush1.bf16.msra.mxu0 0
      %2431 = vmatprep.subr.bf16.mxu0 0
      %2432 = vmatpush1.bf16.msra.mxu0 0
      %2433 = vmatprep.subr.bf16.mxu0 0
      %2434 = vmatpush1.bf16.msra.mxu0 0
      %2435 = vmatprep.subr.bf16.mxu0 0
      %2436 = vmatpush1.bf16.msra.mxu0 0
      %2437 = vmatprep.subr.bf16.mxu0 0
      %2438 = vmatpush1.bf16.msra.mxu0 0
      %2439 = vmatprep.subr.bf16.mxu0 0
      %2440 = vmatpush1.bf16.msra.mxu0 0
      %2441 = vmatprep.subr.bf16.mxu0 0
      %2442 = vmatpush1.bf16.msra.mxu0 0
      %2443 = vmatprep.mubr.bf16.mxu0 0
      %2444 = vmatmul.mubr.bf16.gmra.mrb[0].mxu0 %v2286
      %v2445 = vpop.f32.mrb[0].mxu0
      %v2446 = vadd.f32 %v1911, %v2445
      %v2447 = vpop.f32.mrb[0].mxu0
      %v2448 = vadd.f32 %v1915, %v2447
      %v2449 = vpop.f32.mrb[0].mxu0
      %v2450 = vpop.f32.mrb[0].mxu0
      %2451 = vdwg.mxu0
      %2452 = vmatprep.subr.bf16.mxu0 %v2165
      %2453 = vmatpush1.bf16.msra.mxu0 %v2164
      %2454 = vmatprep.subr.bf16.mxu0 %v2181
      %2455 = vmatpush1.bf16.msra.mxu0 %v2180
      %2456 = vmatprep.subr.bf16.mxu0 %v2197
      %2457 = vmatpush1.bf16.msra.mxu0 %v2196
      %2458 = vmatprep.subr.bf16.mxu0 %v2213
      %2459 = vmatpush1.bf16.msra.mxu0 %v2212
      %2460 = vmatprep.subr.bf16.mxu0 0
      %2461 = vmatpush1.bf16.msra.mxu0 0
      %2462 = vmatprep.subr.bf16.mxu0 0
      %2463 = vmatpush1.bf16.msra.mxu0 0
      %2464 = vmatprep.subr.bf16.mxu0 0
      %2465 = vmatpush1.bf16.msra.mxu0 0
      %2466 = vmatprep.subr.bf16.mxu0 0
      %2467 = vmatpush1.bf16.msra.mxu0 0
      %2468 = vmatprep.subr.bf16.mxu0 0
      %2469 = vmatpush1.bf16.msra.mxu0 0
      %2470 = vmatprep.subr.bf16.mxu0 0
      %2471 = vmatpush1.bf16.msra.mxu0 0
      %2472 = vmatprep.subr.bf16.mxu0 0
      %2473 = vmatpush1.bf16.msra.mxu0 0
      %2474 = vmatprep.subr.bf16.mxu0 0
      %2475 = vmatpush1.bf16.msra.mxu0 0
      %2476 = vmatprep.subr.bf16.mxu0 0
      %2477 = vmatpush1.bf16.msra.mxu0 0
      %2478 = vmatprep.subr.bf16.mxu0 0
      %2479 = vmatpush1.bf16.msra.mxu0 0
      %2480 = vmatprep.subr.bf16.mxu0 0
      %2481 = vmatpush1.bf16.msra.mxu0 0
      %2482 = vmatprep.subr.bf16.mxu0 0
      %2483 = vmatpush1.bf16.msra.mxu0 0
      %2484 = vmatprep.mubr.bf16.mxu0 0
      %2485 = vmatmul.mubr.bf16.gmra.mrb[0].mxu0 %v2286
      %v2486 = vpop.f32.mrb[0].mxu0
      %v2487 = vadd.f32 %v1919, %v2486
      %v2488 = vpop.f32.mrb[0].mxu0
      %v2489 = vadd.f32 %v1923, %v2488
      %v2490 = vpop.f32.mrb[0].mxu0
      %v2491 = vpop.f32.mrb[0].mxu0
      %2492 = vdwg.mxu0
      %2493 = vmatprep.subr.bf16.mxu0 %v2167
      %2494 = vmatpush1.bf16.msra.mxu0 %v2166
      %2495 = vmatprep.subr.bf16.mxu0 %v2183
      %2496 = vmatpush1.bf16.msra.mxu0 %v2182
      %2497 = vmatprep.subr.bf16.mxu0 %v2199
      %2498 = vmatpush1.bf16.msra.mxu0 %v2198
      %2499 = vmatprep.subr.bf16.mxu0 %v2215
      %2500 = vmatpush1.bf16.msra.mxu0 %v2214
      %2501 = vmatprep.subr.bf16.mxu0 0
      %2502 = vmatpush1.bf16.msra.mxu0 0
      %2503 = vmatprep.subr.bf16.mxu0 0
      %2504 = vmatpush1.bf16.msra.mxu0 0
      %2505 = vmatprep.subr.bf16.mxu0 0
      %2506 = vmatpush1.bf16.msra.mxu0 0
      %2507 = vmatprep.subr.bf16.mxu0 0
      %2508 = vmatpush1.bf16.msra.mxu0 0
      %2509 = vmatprep.subr.bf16.mxu0 0
      %2510 = vmatpush1.bf16.msra.mxu0 0
      %2511 = vmatprep.subr.bf16.mxu0 0
      %2512 = vmatpush1.bf16.msra.mxu0 0
      %2513 = vmatprep.subr.bf16.mxu0 0
      %2514 = vmatpush1.bf16.msra.mxu0 0
      %2515 = vmatprep.subr.bf16.mxu0 0
      %2516 = vmatpush1.bf16.msra.mxu0 0
      %2517 = vmatprep.subr.bf16.mxu0 0
      %2518 = vmatpush1.bf16.msra.mxu0 0
      %2519 = vmatprep.subr.bf16.mxu0 0
      %2520 = vmatpush1.bf16.msra.mxu0 0
      %2521 = vmatprep.subr.bf16.mxu0 0
      %2522 = vmatpush1.bf16.msra.mxu0 0
      %2523 = vmatprep.subr.bf16.mxu0 0
      %2524 = vmatpush1.bf16.msra.mxu0 0
      %2525 = vmatprep.mubr.bf16.mxu0 0
      %2526 = vmatmul.mubr.bf16.gmra.mrb[0].mxu0 %v2286
      %v2527 = vpop.f32.mrb[0].mxu0
      %v2528 = vadd.f32 %v1927, %v2527
      %v2529 = vpop.f32.mrb[0].mxu0
      %v2530 = vadd.f32 %v1931, %v2529
      %v2531 = vpop.f32.mrb[0].mxu0
      %v2532 = vpop.f32.mrb[0].mxu0
      %2533 = vdwg.mxu0
      %2534 = vmatprep.subr.bf16.mxu0 %v2169
      %2535 = vmatpush1.bf16.msra.mxu0 %v2168
      %2536 = vmatprep.subr.bf16.mxu0 %v2185
      %2537 = vmatpush1.bf16.msra.mxu0 %v2184
      %2538 = vmatprep.subr.bf16.mxu0 %v2201
      %2539 = vmatpush1.bf16.msra.mxu0 %v2200
      %2540 = vmatprep.subr.bf16.mxu0 %v2217
      %2541 = vmatpush1.bf16.msra.mxu0 %v2216
      %2542 = vmatprep.subr.bf16.mxu0 0
      %2543 = vmatpush1.bf16.msra.mxu0 0
      %2544 = vmatprep.subr.bf16.mxu0 0
      %2545 = vmatpush1.bf16.msra.mxu0 0
      %2546 = vmatprep.subr.bf16.mxu0 0
      %2547 = vmatpush1.bf16.msra.mxu0 0
      %2548 = vmatprep.subr.bf16.mxu0 0
      %2549 = vmatpush1.bf16.msra.mxu0 0
      %2550 = vmatprep.subr.bf16.mxu0 0
      %2551 = vmatpush1.bf16.msra.mxu0 0
      %2552 = vmatprep.subr.bf16.mxu0 0
      %2553 = vmatpush1.bf16.msra.mxu0 0
      %2554 = vmatprep.subr.bf16.mxu0 0
      %2555 = vmatpush1.bf16.msra.mxu0 0
      %2556 = vmatprep.subr.bf16.mxu0 0
      %2557 = vmatpush1.bf16.msra.mxu0 0
      %2558 = vmatprep.subr.bf16.mxu0 0
      %2559 = vmatpush1.bf16.msra.mxu0 0
      %2560 = vmatprep.subr.bf16.mxu0 0
      %2561 = vmatpush1.bf16.msra.mxu0 0
      %2562 = vmatprep.subr.bf16.mxu0 0
      %2563 = vmatpush1.bf16.msra.mxu0 0
      %2564 = vmatprep.subr.bf16.mxu0 0
      %2565 = vmatpush1.bf16.msra.mxu0 0
      %2566 = vmatprep.mubr.bf16.mxu0 0
      %2567 = vmatmul.mubr.bf16.gmra.mrb[0].mxu0 %v2286
      %v2568 = vpop.f32.mrb[0].mxu0
      %v2569 = vadd.f32 %v1935, %v2568
      %v2570 = vpop.f32.mrb[0].mxu0
      %v2571 = vadd.f32 %v1939, %v2570
      %v2572 = vpop.f32.mrb[0].mxu0
      %v2573 = vpop.f32.mrb[0].mxu0
      %2574 = vdwg.mxu0
      %2575 = vmatprep.subr.bf16.mxu0 %v2171
      %2576 = vmatpush1.bf16.msra.mxu0 %v2170
      %2577 = vmatprep.subr.bf16.mxu0 %v2187
      %2578 = vmatpush1.bf16.msra.mxu0 %v2186
      %2579 = vmatprep.subr.bf16.mxu0 %v2203
      %2580 = vmatpush1.bf16.msra.mxu0 %v2202
      %2581 = vmatprep.subr.bf16.mxu0 %v2219
      %2582 = vmatpush1.bf16.msra.mxu0 %v2218
      %2583 = vmatprep.subr.bf16.mxu0 0
      %2584 = vmatpush1.bf16.msra.mxu0 0
      %2585 = vmatprep.subr.bf16.mxu0 0
      %2586 = vmatpush1.bf16.msra.mxu0 0
      %2587 = vmatprep.subr.bf16.mxu0 0
      %2588 = vmatpush1.bf16.msra.mxu0 0
      %2589 = vmatprep.subr.bf16.mxu0 0
      %2590 = vmatpush1.bf16.msra.mxu0 0
      %2591 = vmatprep.subr.bf16.mxu0 0
      %2592 = vmatpush1.bf16.msra.mxu0 0
      %2593 = vmatprep.subr.bf16.mxu0 0
      %2594 = vmatpush1.bf16.msra.mxu0 0
      %2595 = vmatprep.subr.bf16.mxu0 0
      %2596 = vmatpush1.bf16.msra.mxu0 0
      %2597 = vmatprep.subr.bf16.mxu0 0
      %2598 = vmatpush1.bf16.msra.mxu0 0
      %2599 = vmatprep.subr.bf16.mxu0 0
      %2600 = vmatpush1.bf16.msra.mxu0 0
      %2601 = vmatprep.subr.bf16.mxu0 0
      %2602 = vmatpush1.bf16.msra.mxu0 0
      %2603 = vmatprep.subr.bf16.mxu0 0
      %2604 = vmatpush1.bf16.msra.mxu0 0
      %2605 = vmatprep.subr.bf16.mxu0 0
      %2606 = vmatpush1.bf16.msra.mxu0 0
      %2607 = vmatprep.mubr.bf16.mxu0 0
      %2608 = vmatmul.mubr.bf16.gmra.mrb[0].mxu0 %v2286
      %v2609 = vpop.f32.mrb[0].mxu0
      %v2610 = vadd.f32 %v1943, %v2609
      %v2611 = vpop.f32.mrb[0].mxu0
      %v2612 = vadd.f32 %v1947, %v2611
      %v2613 = vpop.f32.mrb[0].mxu0
      %v2614 = vpop.f32.mrb[0].mxu0
      %2615 = vdwg.mxu0
      %v2616 = vmax.f32 %v2323, 0.0
      %v2617 = vmax.f32 %v2325, 0.0
      %v2618 = vmax.f32 %v2364, 0.0
      %v2619 = vmax.f32 %v2366, 0.0
      %v2620 = vmax.f32 %v2405, 0.0
      %v2621 = vmax.f32 %v2407, 0.0
      %v2622 = vmax.f32 %v2446, 0.0
      %v2623 = vmax.f32 %v2448, 0.0
      %v2624 = vmax.f32 %v2487, 0.0
      %v2625 = vmax.f32 %v2489, 0.0
      %v2626 = vmax.f32 %v2528, 0.0
      %v2627 = vmax.f32 %v2530, 0.0
      %v2628 = vmax.f32 %v2569, 0.0
      %v2629 = vmax.f32 %v2571, 0.0
      %v2630 = vmax.f32 %v2610, 0.0
      %v2631 = vmax.f32 %v2612, 0.0
      %v2632 = vpack.c.bf16 %v2616, %v2616
      %v2633 = vpack.c.bf16 %v2617, %v2617
      %v2634 = vpack.c.bf16 %v2618, %v2618
      %v2635 = vpack.c.bf16 %v2619, %v2619
      %v2636 = vpack.c.bf16 %v2620, %v2620
      %v2637 = vpack.c.bf16 %v2621, %v2621
      %v2638 = vpack.c.bf16 %v2622, %v2622
      %v2639 = vpack.c.bf16 %v2623, %v2623
      %v2640 = vpack.c.bf16 %v2624, %v2624
      %v2641 = vpack.c.bf16 %v2625, %v2625
      %v2642 = vpack.c.bf16 %v2626, %v2626
      %v2643 = vpack.c.bf16 %v2627, %v2627
      %v2644 = vpack.c.bf16 %v2628, %v2628
      %v2645 = vpack.c.bf16 %v2629, %v2629
      %v2646 = vpack.c.bf16 %v2630, %v2630
      %v2647 = vpack.c.bf16 %v2631, %v2631
      %v2664 = vcombine.low %v2632, %v2633
      %v2665 = vcombine.low %v2634, %v2635
      %v2666 = vcombine.low %v2636, %v2637
      %v2667 = vcombine.low %v2638, %v2639
      %v2669 = vunpack.c.l.s4 1966171168
      %v2670 = vunpack.c.0.s8 %v2669
      %v2671 = vlaneseq
      %v2672 = vshrl.u32 %v2671, 7
      %v2673 = vsub.s32 %v2670, %v2672
      %v2674 = vrot.slane %v2664, %v2673
      %v2676 = vunpack.c.l.s4 1966171168
      %v2677 = vunpack.c.0.s8 %v2676
      %v2678 = vlaneseq
      %v2679 = vshrl.u32 %v2678, 7
      %v2680 = vsub.s32 %v2677, %v2679
      %v2681 = vrot.slane %v2665, %v2680
      %v2683 = vunpack.c.l.s4 1966171168
      %v2684 = vunpack.c.0.s8 %v2683
      %v2685 = vlaneseq
      %v2686 = vshrl.u32 %v2685, 7
      %v2687 = vsub.s32 %v2684, %v2686
      %v2688 = vrot.slane %v2666, %v2687
      %v2690 = vunpack.c.l.s4 1966171168
      %v2691 = vunpack.c.0.s8 %v2690
      %v2692 = vlaneseq
      %v2693 = vshrl.u32 %v2692, 7
      %v2694 = vsub.s32 %v2691, %v2693
      %v2695 = vrot.slane %v2667, %v2694
      %v2696 = vcombine.low %v2674, %v2681
      %v2697 = vcombine.low %v2688, %v2695
      %v2699 = vunpack.c.l.s4 1966171168
      %v2700 = vunpack.c.0.s8 %v2699
      %v2701 = vlaneseq
      %v2702 = vshrl.u32 %v2701, 7
      %v2703 = vsub.s32 %v2700, %v2702
      %v2704 = vrot.slane %v2696, %v2703
      %v2706 = vunpack.c.l.s4 1966171168
      %v2707 = vunpack.c.0.s8 %v2706
      %v2708 = vlaneseq
      %v2709 = vshrl.u32 %v2708, 7
      %v2710 = vsub.s32 %v2707, %v2709
      %v2711 = vrot.slane %v2697, %v2710
      %v2712 = vcombine.low %v2704, %v2711
      %v2713 = vcombine.low %v2640, %v2641
      %v2714 = vcombine.low %v2642, %v2643
      %v2715 = vcombine.low %v2644, %v2645
      %v2716 = vcombine.low %v2646, %v2647
      %v2718 = vunpack.c.l.s4 1966171168
      %v2719 = vunpack.c.0.s8 %v2718
      %v2720 = vlaneseq
      %v2721 = vshrl.u32 %v2720, 7
      %v2722 = vsub.s32 %v2719, %v2721
      %v2723 = vrot.slane %v2713, %v2722
      %v2725 = vunpack.c.l.s4 1966171168
      %v2726 = vunpack.c.0.s8 %v2725
      %v2727 = vlaneseq
      %v2728 = vshrl.u32 %v2727, 7
      %v2729 = vsub.s32 %v2726, %v2728
      %v2730 = vrot.slane %v2714, %v2729
      %v2732 = vunpack.c.l.s4 1966171168
      %v2733 = vunpack.c.0.s8 %v2732
      %v2734 = vlaneseq
      %v2735 = vshrl.u32 %v2734, 7
      %v2736 = vsub.s32 %v2733, %v2735
      %v2737 = vrot.slane %v2715, %v2736
      %v2739 = vunpack.c.l.s4 1966171168
      %v2740 = vunpack.c.0.s8 %v2739
      %v2741 = vlaneseq
      %v2742 = vshrl.u32 %v2741, 7
      %v2743 = vsub.s32 %v2740, %v2742
      %v2744 = vrot.slane %v2716, %v2743
      %v2745 = vcombine.low %v2723, %v2730
      %v2746 = vcombine.low %v2737, %v2744
      %v2748 = vunpack.c.l.s4 1966171168
      %v2749 = vunpack.c.0.s8 %v2748
      %v2750 = vlaneseq
      %v2751 = vshrl.u32 %v2750, 7
      %v2752 = vsub.s32 %v2749, %v2751
      %v2753 = vrot.slane %v2745, %v2752
      %v2755 = vunpack.c.l.s4 1966171168
      %v2756 = vunpack.c.0.s8 %v2755
      %v2757 = vlaneseq
      %v2758 = vshrl.u32 %v2757, 7
      %v2759 = vsub.s32 %v2756, %v2758
      %v2760 = vrot.slane %v2746, %v2759
      %v2761 = vcombine.low %v2753, %v2760
      %2764 = vst [vmem:[#allocation2] sm:$0xff] %v2712
      %2765 = vst [vmem:[#allocation2 + $0x8] sm:$0xff] %v2761
    $region61: #{tpu_custom_call.1} parent=1 // pred_fallthru
      _
    %v2766 = vld [vmem:[#allocation2] sm:$0xff]
    %v2767 = vld [vmem:[#allocation2 + $0x8] sm:$0xff]
    %v2768 = vld [vmem:[%s13] sm:$0xff]
    %v2769 = vld [vmem:[%s13 + $0x8] sm:$0xff]
    %v2770 = vld [vmem:[%s13 + $0x10] sm:$0xff]
    %v2771 = vld [vmem:[%s13 + $0x18] sm:$0xff]
    %v2772 = vld [vmem:[%s13 + $0x20] sm:$0xff]
    %v2773 = vld [vmem:[%s13 + $0x28] sm:$0xff]
    %v2774 = vld [vmem:[%s13 + $0x30] sm:$0xff]
    %v2775 = vld [vmem:[%s13 + $0x38] sm:$0xff]
    %v2776 = vld [vmem:[%s13 + $0x40] sm:$0xff]
    %v2777 = vld [vmem:[%s13 + $0x48] sm:$0xff]
    %v2778 = vld [vmem:[%s13 + $0x50] sm:$0xff]
    %v2779 = vld [vmem:[%s13 + $0x58] sm:$0xff]
    %v2780 = vld [vmem:[%s13 + $0x60] sm:$0xff]
    %v2781 = vld [vmem:[%s13 + $0x68] sm:$0xff]
    %v2782 = vld [vmem:[%s13 + $0x70] sm:$0xff]
    %v2783 = vld [vmem:[%s13 + $0x78] sm:$0xff]
    %v2784 = vld [vmem:[%s13 + $0x80] sm:$0xff]
    %v2785 = vld [vmem:[%s13 + $0x88] sm:$0xff]
    %v2786 = vld [vmem:[%s13 + $0x90] sm:$0xff]
    %v2787 = vld [vmem:[%s13 + $0x98] sm:$0xff]
    %v2788 = vld [vmem:[%s13 + $0xa0] sm:$0xff]
    %v2789 = vld [vmem:[%s13 + $0xa8] sm:$0xff]
    %v2790 = vld [vmem:[%s13 + $0xb0] sm:$0xff]
    %v2791 = vld [vmem:[%s13 + $0xb8] sm:$0xff]
    %v2792 = vld [vmem:[%s13 + $0xc0] sm:$0xff]
    %v2793 = vld [vmem:[%s13 + $0xc8] sm:$0xff]
    %v2794 = vld [vmem:[%s13 + $0xd0] sm:$0xff]
    %v2795 = vld [vmem:[%s13 + $0xd8] sm:$0xff]
    %v2796 = vld [vmem:[%s13 + $0xe0] sm:$0xff]
    %v2797 = vld [vmem:[%s13 + $0xe8] sm:$0xff]
    %v2798 = vld [vmem:[%s13 + $0xf0] sm:$0xff]
    %v2799 = vld [vmem:[%s13 + $0xf8] sm:$0xff]
    %v2800 = vld [vmem:[%s13 + $0x100] sm:$0xff]
    %v2801 = vld [vmem:[%s13 + $0x108] sm:$0xff]
    %v2802 = vld [vmem:[%s13 + $0x110] sm:$0xff]
    %v2803 = vld [vmem:[%s13 + $0x118] sm:$0xff]
    %v2804 = vld [vmem:[%s13 + $0x120] sm:$0xff]
    %v2805 = vld [vmem:[%s13 + $0x128] sm:$0xff]
    %v2806 = vld [vmem:[%s13 + $0x130] sm:$0xff]
    %v2807 = vld [vmem:[%s13 + $0x138] sm:$0xff]
    %v2808 = vld [vmem:[%s13 + $0x140] sm:$0xff]
    %v2809 = vld [vmem:[%s13 + $0x148] sm:$0xff]
    %v2810 = vld [vmem:[%s13 + $0x150] sm:$0xff]
    %v2811 = vld [vmem:[%s13 + $0x158] sm:$0xff]
    %v2812 = vld [vmem:[%s13 + $0x160] sm:$0xff]
    %v2813 = vld [vmem:[%s13 + $0x168] sm:$0xff]
    %v2814 = vld [vmem:[%s13 + $0x170] sm:$0xff]
    %v2815 = vld [vmem:[%s13 + $0x178] sm:$0xff]
    %v2816 = vld [vmem:[%s13 + $0x180] sm:$0xff]
    %v2817 = vld [vmem:[%s13 + $0x188] sm:$0xff]
    %v2818 = vld [vmem:[%s13 + $0x190] sm:$0xff]
    %v2819 = vld [vmem:[%s13 + $0x198] sm:$0xff]
    %v2820 = vld [vmem:[%s13 + $0x1a0] sm:$0xff]
    %v2821 = vld [vmem:[%s13 + $0x1a8] sm:$0xff]
    %v2822 = vld [vmem:[%s13 + $0x1b0] sm:$0xff]
    %v2823 = vld [vmem:[%s13 + $0x1b8] sm:$0xff]
    %v2824 = vld [vmem:[%s13 + $0x1c0] sm:$0xff]
    %v2825 = vld [vmem:[%s13 + $0x1c8] sm:$0xff]
    %v2826 = vld [vmem:[%s13 + $0x1d0] sm:$0xff]
    %v2827 = vld [vmem:[%s13 + $0x1d8] sm:$0xff]
    %v2828 = vld [vmem:[%s13 + $0x1e0] sm:$0xff]
    %v2829 = vld [vmem:[%s13 + $0x1e8] sm:$0xff]
    %v2830 = vld [vmem:[%s13 + $0x1f0] sm:$0xff]
    %v2831 = vld [vmem:[%s13 + $0x1f8] sm:$0xff]
    %v2832 = vld [vmem:[%s13 + $0x200] sm:$0xff]
    %v2833 = vld [vmem:[%s13 + $0x208] sm:$0xff]
    %v2834 = vld [vmem:[%s13 + $0x210] sm:$0xff]
    %v2835 = vld [vmem:[%s13 + $0x218] sm:$0xff]
    %v2836 = vld [vmem:[%s13 + $0x220] sm:$0xff]
    %v2837 = vld [vmem:[%s13 + $0x228] sm:$0xff]
    %v2838 = vld [vmem:[%s13 + $0x230] sm:$0xff]
    %v2839 = vld [vmem:[%s13 + $0x238] sm:$0xff]
    %v2840 = vld [vmem:[%s13 + $0x240] sm:$0xff]
    %v2841 = vld [vmem:[%s13 + $0x248] sm:$0xff]
    %v2842 = vld [vmem:[%s13 + $0x250] sm:$0xff]
    %v2843 = vld [vmem:[%s13 + $0x258] sm:$0xff]
    %v2844 = vld [vmem:[%s13 + $0x260] sm:$0xff]
    %v2845 = vld [vmem:[%s13 + $0x268] sm:$0xff]
    %v2846 = vld [vmem:[%s13 + $0x270] sm:$0xff]
    %v2847 = vld [vmem:[%s13 + $0x278] sm:$0xff]
    %v2848 = vld [vmem:[%s13 + $0x280] sm:$0xff]
    %v2849 = vld [vmem:[%s13 + $0x288] sm:$0xff]
    %v2850 = vld [vmem:[%s13 + $0x290] sm:$0xff]
    %v2851 = vld [vmem:[%s13 + $0x298] sm:$0xff]
    %v2852 = vld [vmem:[%s13 + $0x2a0] sm:$0xff]
    %v2853 = vld [vmem:[%s13 + $0x2a8] sm:$0xff]
    %v2854 = vld [vmem:[%s13 + $0x2b0] sm:$0xff]
    %v2855 = vld [vmem:[%s13 + $0x2b8] sm:$0xff]
    %v2856 = vld [vmem:[%s13 + $0x2c0] sm:$0xff]
    %v2857 = vld [vmem:[%s13 + $0x2c8] sm:$0xff]
    %v2858 = vld [vmem:[%s13 + $0x2d0] sm:$0xff]
    %v2859 = vld [vmem:[%s13 + $0x2d8] sm:$0xff]
    %v2860 = vld [vmem:[%s13 + $0x2e0] sm:$0xff]
    %v2861 = vld [vmem:[%s13 + $0x2e8] sm:$0xff]
    %v2862 = vld [vmem:[%s13 + $0x2f0] sm:$0xff]
    %v2863 = vld [vmem:[%s13 + $0x2f8] sm:$0xff]
    %v2864 = vld [vmem:[%s13 + $0x300] sm:$0xff]
    %v2865 = vld [vmem:[%s13 + $0x308] sm:$0xff]
    %v2866 = vld [vmem:[%s13 + $0x310] sm:$0xff]
    %v2867 = vld [vmem:[%s13 + $0x318] sm:$0xff]
    %v2868 = vld [vmem:[%s13 + $0x320] sm:$0xff]
    %v2869 = vld [vmem:[%s13 + $0x328] sm:$0xff]
    %v2870 = vld [vmem:[%s13 + $0x330] sm:$0xff]
    %v2871 = vld [vmem:[%s13 + $0x338] sm:$0xff]
    %v2872 = vld [vmem:[%s13 + $0x340] sm:$0xff]
    %v2873 = vld [vmem:[%s13 + $0x348] sm:$0xff]
    %v2874 = vld [vmem:[%s13 + $0x350] sm:$0xff]
    %v2875 = vld [vmem:[%s13 + $0x358] sm:$0xff]
    %v2876 = vld [vmem:[%s13 + $0x360] sm:$0xff]
    %v2877 = vld [vmem:[%s13 + $0x368] sm:$0xff]
    %v2878 = vld [vmem:[%s13 + $0x370] sm:$0xff]
    %v2879 = vld [vmem:[%s13 + $0x378] sm:$0xff]
    %v2880 = vld [vmem:[%s13 + $0x380] sm:$0xff]
    %v2881 = vld [vmem:[%s13 + $0x388] sm:$0xff]
    %v2882 = vld [vmem:[%s13 + $0x390] sm:$0xff]
    %v2883 = vld [vmem:[%s13 + $0x398] sm:$0xff]
    %v2884 = vld [vmem:[%s13 + $0x3a0] sm:$0xff]
    %v2885 = vld [vmem:[%s13 + $0x3a8] sm:$0xff]
    %v2886 = vld [vmem:[%s13 + $0x3b0] sm:$0xff]
    %v2887 = vld [vmem:[%s13 + $0x3b8] sm:$0xff]
    %v2888 = vld [vmem:[%s13 + $0x3c0] sm:$0xff]
    %v2889 = vld [vmem:[%s13 + $0x3c8] sm:$0xff]
    %v2890 = vld [vmem:[%s13 + $0x3d0] sm:$0xff]
    %v2891 = vld [vmem:[%s13 + $0x3d8] sm:$0xff]
    %v2892 = vld [vmem:[%s13 + $0x3e0] sm:$0xff]
    %v2893 = vld [vmem:[%s13 + $0x3e8] sm:$0xff]
    %v2894 = vld [vmem:[%s13 + $0x3f0] sm:$0xff]
    %v2895 = vld [vmem:[%s13 + $0x3f8] sm:$0xff]
    %v2896 = vld [vmem:[%s13 + $0x400] sm:$0xff]
    %v2897 = vld [vmem:[%s13 + $0x408] sm:$0xff]
    %v2898 = vld [vmem:[%s13 + $0x410] sm:$0xff]
    %v2899 = vld [vmem:[%s13 + $0x418] sm:$0xff]
    %v2900 = vld [vmem:[%s13 + $0x420] sm:$0xff]
    %v2901 = vld [vmem:[%s13 + $0x428] sm:$0xff]
    %v2902 = vld [vmem:[%s13 + $0x430] sm:$0xff]
    %v2903 = vld [vmem:[%s13 + $0x438] sm:$0xff]
    %v2904 = vld [vmem:[%s13 + $0x440] sm:$0xff]
    %v2905 = vld [vmem:[%s13 + $0x448] sm:$0xff]
    %v2906 = vld [vmem:[%s13 + $0x450] sm:$0xff]
    %v2907 = vld [vmem:[%s13 + $0x458] sm:$0xff]
    %v2908 = vld [vmem:[%s13 + $0x460] sm:$0xff]
    %v2909 = vld [vmem:[%s13 + $0x468] sm:$0xff]
    %v2910 = vld [vmem:[%s13 + $0x470] sm:$0xff]
    %v2911 = vld [vmem:[%s13 + $0x478] sm:$0xff]
    %v2912 = vld [vmem:[%s13 + $0x480] sm:$0xff]
    %v2913 = vld [vmem:[%s13 + $0x488] sm:$0xff]
    %v2914 = vld [vmem:[%s13 + $0x490] sm:$0xff]
    %v2915 = vld [vmem:[%s13 + $0x498] sm:$0xff]
    %v2916 = vld [vmem:[%s13 + $0x4a0] sm:$0xff]
    %v2917 = vld [vmem:[%s13 + $0x4a8] sm:$0xff]
    %v2918 = vld [vmem:[%s13 + $0x4b0] sm:$0xff]
    %v2919 = vld [vmem:[%s13 + $0x4b8] sm:$0xff]
    %v2920 = vld [vmem:[%s13 + $0x4c0] sm:$0xff]
    %v2921 = vld [vmem:[%s13 + $0x4c8] sm:$0xff]
    %v2922 = vld [vmem:[%s13 + $0x4d0] sm:$0xff]
    %v2923 = vld [vmem:[%s13 + $0x4d8] sm:$0xff]
    %v2924 = vld [vmem:[%s13 + $0x4e0] sm:$0xff]
    %v2925 = vld [vmem:[%s13 + $0x4e8] sm:$0xff]
    %v2926 = vld [vmem:[%s13 + $0x4f0] sm:$0xff]
    %v2927 = vld [vmem:[%s13 + $0x4f8] sm:$0xff]
    %v2928 = vld [vmem:[%s13 + $0x500] sm:$0xff]
    %v2929 = vld [vmem:[%s13 + $0x508] sm:$0xff]
    %v2930 = vld [vmem:[%s13 + $0x510] sm:$0xff]
    %v2931 = vld [vmem:[%s13 + $0x518] sm:$0xff]
    %v2932 = vld [vmem:[%s13 + $0x520] sm:$0xff]
    %v2933 = vld [vmem:[%s13 + $0x528] sm:$0xff]
    %v2934 = vld [vmem:[%s13 + $0x530] sm:$0xff]
    %v2935 = vld [vmem:[%s13 + $0x538] sm:$0xff]
    %v2936 = vld [vmem:[%s13 + $0x540] sm:$0xff]
    %v2937 = vld [vmem:[%s13 + $0x548] sm:$0xff]
    %v2938 = vld [vmem:[%s13 + $0x550] sm:$0xff]
    %v2939 = vld [vmem:[%s13 + $0x558] sm:$0xff]
    %v2940 = vld [vmem:[%s13 + $0x560] sm:$0xff]
    %v2941 = vld [vmem:[%s13 + $0x568] sm:$0xff]
    %v2942 = vld [vmem:[%s13 + $0x570] sm:$0xff]
    %v2943 = vld [vmem:[%s13 + $0x578] sm:$0xff]
    %v2944 = vld [vmem:[%s13 + $0x580] sm:$0xff]
    %v2945 = vld [vmem:[%s13 + $0x588] sm:$0xff]
    %v2946 = vld [vmem:[%s13 + $0x590] sm:$0xff]
    %v2947 = vld [vmem:[%s13 + $0x598] sm:$0xff]
    %v2948 = vld [vmem:[%s13 + $0x5a0] sm:$0xff]
    %v2949 = vld [vmem:[%s13 + $0x5a8] sm:$0xff]
    %v2950 = vld [vmem:[%s13 + $0x5b0] sm:$0xff]
    %v2951 = vld [vmem:[%s13 + $0x5b8] sm:$0xff]
    %v2952 = vld [vmem:[%s13 + $0x5c0] sm:$0xff]
    %v2953 = vld [vmem:[%s13 + $0x5c8] sm:$0xff]
    %v2954 = vld [vmem:[%s13 + $0x5d0] sm:$0xff]
    %v2955 = vld [vmem:[%s13 + $0x5d8] sm:$0xff]
    %v2956 = vld [vmem:[%s13 + $0x5e0] sm:$0xff]
    %v2957 = vld [vmem:[%s13 + $0x5e8] sm:$0xff]
    %v2958 = vld [vmem:[%s13 + $0x5f0] sm:$0xff]
    %v2959 = vld [vmem:[%s13 + $0x5f8] sm:$0xff]
    %v2960 = vld [vmem:[%s13 + $0x600] sm:$0xff]
    %v2961 = vld [vmem:[%s13 + $0x608] sm:$0xff]
    %v2962 = vld [vmem:[%s13 + $0x610] sm:$0xff]
    %v2963 = vld [vmem:[%s13 + $0x618] sm:$0xff]
    %v2964 = vld [vmem:[%s13 + $0x620] sm:$0xff]
    %v2965 = vld [vmem:[%s13 + $0x628] sm:$0xff]
    %v2966 = vld [vmem:[%s13 + $0x630] sm:$0xff]
    %v2967 = vld [vmem:[%s13 + $0x638] sm:$0xff]
    %v2968 = vld [vmem:[%s13 + $0x640] sm:$0xff]
    %v2969 = vld [vmem:[%s13 + $0x648] sm:$0xff]
    %v2970 = vld [vmem:[%s13 + $0x650] sm:$0xff]
    %v2971 = vld [vmem:[%s13 + $0x658] sm:$0xff]
    %v2972 = vld [vmem:[%s13 + $0x660] sm:$0xff]
    %v2973 = vld [vmem:[%s13 + $0x668] sm:$0xff]
    %v2974 = vld [vmem:[%s13 + $0x670] sm:$0xff]
    %v2975 = vld [vmem:[%s13 + $0x678] sm:$0xff]
    %v2976 = vld [vmem:[%s13 + $0x680] sm:$0xff]
    %v2977 = vld [vmem:[%s13 + $0x688] sm:$0xff]
    %v2978 = vld [vmem:[%s13 + $0x690] sm:$0xff]
    %v2979 = vld [vmem:[%s13 + $0x698] sm:$0xff]
    %v2980 = vld [vmem:[%s13 + $0x6a0] sm:$0xff]
    %v2981 = vld [vmem:[%s13 + $0x6a8] sm:$0xff]
    %v2982 = vld [vmem:[%s13 + $0x6b0] sm:$0xff]
    %v2983 = vld [vmem:[%s13 + $0x6b8] sm:$0xff]
    %v2984 = vld [vmem:[%s13 + $0x6c0] sm:$0xff]
    %v2985 = vld [vmem:[%s13 + $0x6c8] sm:$0xff]
    %v2986 = vld [vmem:[%s13 + $0x6d0] sm:$0xff]
    %v2987 = vld [vmem:[%s13 + $0x6d8] sm:$0xff]
    %v2988 = vld [vmem:[%s13 + $0x6e0] sm:$0xff]
    %v2989 = vld [vmem:[%s13 + $0x6e8] sm:$0xff]
    %v2990 = vld [vmem:[%s13 + $0x6f0] sm:$0xff]
    %v2991 = vld [vmem:[%s13 + $0x6f8] sm:$0xff]
    %v2992 = vld [vmem:[%s13 + $0x700] sm:$0xff]
    %v2993 = vld [vmem:[%s13 + $0x708] sm:$0xff]
    %v2994 = vld [vmem:[%s13 + $0x710] sm:$0xff]
    %v2995 = vld [vmem:[%s13 + $0x718] sm:$0xff]
    %v2996 = vld [vmem:[%s13 + $0x720] sm:$0xff]
    %v2997 = vld [vmem:[%s13 + $0x728] sm:$0xff]
    %v2998 = vld [vmem:[%s13 + $0x730] sm:$0xff]
    %v2999 = vld [vmem:[%s13 + $0x738] sm:$0xff]
    %v3000 = vld [vmem:[%s13 + $0x740] sm:$0xff]
    %v3001 = vld [vmem:[%s13 + $0x748] sm:$0xff]
    %v3002 = vld [vmem:[%s13 + $0x750] sm:$0xff]
    %v3003 = vld [vmem:[%s13 + $0x758] sm:$0xff]
    %v3004 = vld [vmem:[%s13 + $0x760] sm:$0xff]
    %v3005 = vld [vmem:[%s13 + $0x768] sm:$0xff]
    %v3006 = vld [vmem:[%s13 + $0x770] sm:$0xff]
    %v3007 = vld [vmem:[%s13 + $0x778] sm:$0xff]
    %v3008 = vld [vmem:[%s13 + $0x780] sm:$0xff]
    %v3009 = vld [vmem:[%s13 + $0x788] sm:$0xff]
    %v3010 = vld [vmem:[%s13 + $0x790] sm:$0xff]
    %v3011 = vld [vmem:[%s13 + $0x798] sm:$0xff]
    %v3012 = vld [vmem:[%s13 + $0x7a0] sm:$0xff]
    %v3013 = vld [vmem:[%s13 + $0x7a8] sm:$0xff]
    %v3014 = vld [vmem:[%s13 + $0x7b0] sm:$0xff]
    %v3015 = vld [vmem:[%s13 + $0x7b8] sm:$0xff]
    %v3016 = vld [vmem:[%s13 + $0x7c0] sm:$0xff]
    %v3017 = vld [vmem:[%s13 + $0x7c8] sm:$0xff]
    %v3018 = vld [vmem:[%s13 + $0x7d0] sm:$0xff]
    %v3019 = vld [vmem:[%s13 + $0x7d8] sm:$0xff]
    %v3020 = vld [vmem:[%s13 + $0x7e0] sm:$0xff]
    %v3021 = vld [vmem:[%s13 + $0x7e8] sm:$0xff]
    %v3022 = vld [vmem:[%s13 + $0x7f0] sm:$0xff]
    %v3023 = vld [vmem:[%s13 + $0x7f8] sm:$0xff]
    %v3024 = vld [vmem:[%s14] sm:$0x3]
    %v3026 = vlaneseq
    %v3027 = vshrl.u32 %v3026, 7
    %v3028 = vsub.s32 0, %v3027
    %v3029 = vrot.slane %v3024, %v3028
    %v3030 = vlaneseq
    %v3031 = vshrl.u32 %v3030, 7
    %v3032 = vsub.s32 1, %v3031
    %v3033 = vrot.slane %v3024, %v3032
    %v3038 = vcombine.high %v2766, %v2766
    %v3040 = vunpack.c.l.s4 1966171168
    %v3041 = vunpack.c.0.s8 %v3040
    %v3042 = vlaneseq
    %v3043 = vshrl.u32 %v3042, 7
    %v3044 = vsub.s32 %v3041, %v3043
    %v3045 = vrot.slane %v2766, %v3044
    %v3047 = vunpack.c.l.s4 1966171168
    %v3048 = vunpack.c.0.s8 %v3047
    %v3049 = vlaneseq
    %v3050 = vshrl.u32 %v3049, 7
    %v3051 = vsub.s32 %v3048, %v3050
    %v3052 = vrot.slane %v3038, %v3051
    %v3053 = vcombine.high %v3045, %v3045
    %v3054 = vcombine.high %v3052, %v3052
    %v3056 = vunpack.c.l.s4 1966171168
    %v3057 = vunpack.c.0.s8 %v3056
    %v3058 = vlaneseq
    %v3059 = vshrl.u32 %v3058, 7
    %v3060 = vsub.s32 %v3057, %v3059
    %v3061 = vrot.slane %v3045, %v3060
    %v3063 = vunpack.c.l.s4 1966171168
    %v3064 = vunpack.c.0.s8 %v3063
    %v3065 = vlaneseq
    %v3066 = vshrl.u32 %v3065, 7
    %v3067 = vsub.s32 %v3064, %v3066
    %v3068 = vrot.slane %v3052, %v3067
    %v3070 = vunpack.c.l.s4 1966171168
    %v3071 = vunpack.c.0.s8 %v3070
    %v3072 = vlaneseq
    %v3073 = vshrl.u32 %v3072, 7
    %v3074 = vsub.s32 %v3071, %v3073
    %v3075 = vrot.slane %v3053, %v3074
    %v3077 = vunpack.c.l.s4 1966171168
    %v3078 = vunpack.c.0.s8 %v3077
    %v3079 = vlaneseq
    %v3080 = vshrl.u32 %v3079, 7
    %v3081 = vsub.s32 %v3078, %v3080
    %v3082 = vrot.slane %v3054, %v3081
    %v3083 = vcombine.high %v3061, %v3061
    %v3084 = vcombine.high %v3068, %v3068
    %v3085 = vcombine.high %v3075, %v3075
    %v3086 = vcombine.high %v3082, %v3082
    %v3087 = vcombine.high %v2767, %v2767
    %v3089 = vunpack.c.l.s4 1966171168
    %v3090 = vunpack.c.0.s8 %v3089
    %v3091 = vlaneseq
    %v3092 = vshrl.u32 %v3091, 7
    %v3093 = vsub.s32 %v3090, %v3092
    %v3094 = vrot.slane %v2767, %v3093
    %v3096 = vunpack.c.l.s4 1966171168
    %v3097 = vunpack.c.0.s8 %v3096
    %v3098 = vlaneseq
    %v3099 = vshrl.u32 %v3098, 7
    %v3100 = vsub.s32 %v3097, %v3099
    %v3101 = vrot.slane %v3087, %v3100
    %v3102 = vcombine.high %v3094, %v3094
    %v3103 = vcombine.high %v3101, %v3101
    %v3105 = vunpack.c.l.s4 1966171168
    %v3106 = vunpack.c.0.s8 %v3105
    %v3107 = vlaneseq
    %v3108 = vshrl.u32 %v3107, 7
    %v3109 = vsub.s32 %v3106, %v3108
    %v3110 = vrot.slane %v3094, %v3109
    %v3112 = vunpack.c.l.s4 1966171168
    %v3113 = vunpack.c.0.s8 %v3112
    %v3114 = vlaneseq
    %v3115 = vshrl.u32 %v3114, 7
    %v3116 = vsub.s32 %v3113, %v3115
    %v3117 = vrot.slane %v3101, %v3116
    %v3119 = vunpack.c.l.s4 1966171168
    %v3120 = vunpack.c.0.s8 %v3119
    %v3121 = vlaneseq
    %v3122 = vshrl.u32 %v3121, 7
    %v3123 = vsub.s32 %v3120, %v3122
    %v3124 = vrot.slane %v3102, %v3123
    %v3126 = vunpack.c.l.s4 1966171168
    %v3127 = vunpack.c.0.s8 %v3126
    %v3128 = vlaneseq
    %v3129 = vshrl.u32 %v3128, 7
    %v3130 = vsub.s32 %v3127, %v3129
    %v3131 = vrot.slane %v3103, %v3130
    %v3132 = vcombine.high %v3110, %v3110
    %v3133 = vcombine.high %v3117, %v3117
    %v3134 = vcombine.high %v3124, %v3124
    %v3135 = vcombine.high %v3131, %v3131
    %v3408 = vunpack.c.l.b16 %v2768
    %v3409 = vunpack.c.h.b16 %v2768
    %v3410 = vunpack.c.l.b16 %v2769
    %v3411 = vunpack.c.h.b16 %v2769
    %v3412 = vunpack.c.l.b16 %v2770
    %v3413 = vunpack.c.h.b16 %v2770
    %v3414 = vunpack.c.l.b16 %v2771
    %v3415 = vunpack.c.h.b16 %v2771
    %v3416 = vunpack.c.l.b16 %v2772
    %v3417 = vunpack.c.h.b16 %v2772
    %v3418 = vunpack.c.l.b16 %v2773
    %v3419 = vunpack.c.h.b16 %v2773
    %v3420 = vunpack.c.l.b16 %v2774
    %v3421 = vunpack.c.h.b16 %v2774
    %v3422 = vunpack.c.l.b16 %v2775
    %v3423 = vunpack.c.h.b16 %v2775
    %v3424 = vunpack.c.l.b16 %v2776
    %v3425 = vunpack.c.h.b16 %v2776
    %v3426 = vunpack.c.l.b16 %v2777
    %v3427 = vunpack.c.h.b16 %v2777
    %v3428 = vunpack.c.l.b16 %v2778
    %v3429 = vunpack.c.h.b16 %v2778
    %v3430 = vunpack.c.l.b16 %v2779
    %v3431 = vunpack.c.h.b16 %v2779
    %v3432 = vunpack.c.l.b16 %v2780
    %v3433 = vunpack.c.h.b16 %v2780
    %v3434 = vunpack.c.l.b16 %v2781
    %v3435 = vunpack.c.h.b16 %v2781
    %v3436 = vunpack.c.l.b16 %v2782
    %v3437 = vunpack.c.h.b16 %v2782
    %v3438 = vunpack.c.l.b16 %v2783
    %v3439 = vunpack.c.h.b16 %v2783
    %v3440 = vunpack.c.l.b16 %v2784
    %v3441 = vunpack.c.h.b16 %v2784
    %v3442 = vunpack.c.l.b16 %v2785
    %v3443 = vunpack.c.h.b16 %v2785
    %v3444 = vunpack.c.l.b16 %v2786
    %v3445 = vunpack.c.h.b16 %v2786
    %v3446 = vunpack.c.l.b16 %v2787
    %v3447 = vunpack.c.h.b16 %v2787
    %v3448 = vunpack.c.l.b16 %v2788
    %v3449 = vunpack.c.h.b16 %v2788
    %v3450 = vunpack.c.l.b16 %v2789
    %v3451 = vunpack.c.h.b16 %v2789
    %v3452 = vunpack.c.l.b16 %v2790
    %v3453 = vunpack.c.h.b16 %v2790
    %v3454 = vunpack.c.l.b16 %v2791
    %v3455 = vunpack.c.h.b16 %v2791
    %v3456 = vunpack.c.l.b16 %v2792
    %v3457 = vunpack.c.h.b16 %v2792
    %v3458 = vunpack.c.l.b16 %v2793
    %v3459 = vunpack.c.h.b16 %v2793
    %v3460 = vunpack.c.l.b16 %v2794
    %v3461 = vunpack.c.h.b16 %v2794
    %v3462 = vunpack.c.l.b16 %v2795
    %v3463 = vunpack.c.h.b16 %v2795
    %v3464 = vunpack.c.l.b16 %v2796
    %v3465 = vunpack.c.h.b16 %v2796
    %v3466 = vunpack.c.l.b16 %v2797
    %v3467 = vunpack.c.h.b16 %v2797
    %v3468 = vunpack.c.l.b16 %v2798
    %v3469 = vunpack.c.h.b16 %v2798
    %v3470 = vunpack.c.l.b16 %v2799
    %v3471 = vunpack.c.h.b16 %v2799
    %v3472 = vunpack.c.l.b16 %v2800
    %v3473 = vunpack.c.h.b16 %v2800
    %v3474 = vunpack.c.l.b16 %v2801
    %v3475 = vunpack.c.h.b16 %v2801
    %v3476 = vunpack.c.l.b16 %v2802
    %v3477 = vunpack.c.h.b16 %v2802
    %v3478 = vunpack.c.l.b16 %v2803
    %v3479 = vunpack.c.h.b16 %v2803
    %v3480 = vunpack.c.l.b16 %v2804
    %v3481 = vunpack.c.h.b16 %v2804
    %v3482 = vunpack.c.l.b16 %v2805
    %v3483 = vunpack.c.h.b16 %v2805
    %v3484 = vunpack.c.l.b16 %v2806
    %v3485 = vunpack.c.h.b16 %v2806
    %v3486 = vunpack.c.l.b16 %v2807
    %v3487 = vunpack.c.h.b16 %v2807
    %v3488 = vunpack.c.l.b16 %v2808
    %v3489 = vunpack.c.h.b16 %v2808
    %v3490 = vunpack.c.l.b16 %v2809
    %v3491 = vunpack.c.h.b16 %v2809
    %v3492 = vunpack.c.l.b16 %v2810
    %v3493 = vunpack.c.h.b16 %v2810
    %v3494 = vunpack.c.l.b16 %v2811
    %v3495 = vunpack.c.h.b16 %v2811
    %v3496 = vunpack.c.l.b16 %v2812
    %v3497 = vunpack.c.h.b16 %v2812
    %v3498 = vunpack.c.l.b16 %v2813
    %v3499 = vunpack.c.h.b16 %v2813
    %v3500 = vunpack.c.l.b16 %v2814
    %v3501 = vunpack.c.h.b16 %v2814
    %v3502 = vunpack.c.l.b16 %v2815
    %v3503 = vunpack.c.h.b16 %v2815
    %v3504 = vunpack.c.l.b16 %v2816
    %v3505 = vunpack.c.h.b16 %v2816
    %v3506 = vunpack.c.l.b16 %v2817
    %v3507 = vunpack.c.h.b16 %v2817
    %v3508 = vunpack.c.l.b16 %v2818
    %v3509 = vunpack.c.h.b16 %v2818
    %v3510 = vunpack.c.l.b16 %v2819
    %v3511 = vunpack.c.h.b16 %v2819
    %v3512 = vunpack.c.l.b16 %v2820
    %v3513 = vunpack.c.h.b16 %v2820
    %v3514 = vunpack.c.l.b16 %v2821
    %v3515 = vunpack.c.h.b16 %v2821
    %v3516 = vunpack.c.l.b16 %v2822
    %v3517 = vunpack.c.h.b16 %v2822
    %v3518 = vunpack.c.l.b16 %v2823
    %v3519 = vunpack.c.h.b16 %v2823
    %v3520 = vunpack.c.l.b16 %v2824
    %v3521 = vunpack.c.h.b16 %v2824
    %v3522 = vunpack.c.l.b16 %v2825
    %v3523 = vunpack.c.h.b16 %v2825
    %v3524 = vunpack.c.l.b16 %v2826
    %v3525 = vunpack.c.h.b16 %v2826
    %v3526 = vunpack.c.l.b16 %v2827
    %v3527 = vunpack.c.h.b16 %v2827
    %v3528 = vunpack.c.l.b16 %v2828
    %v3529 = vunpack.c.h.b16 %v2828
    %v3530 = vunpack.c.l.b16 %v2829
    %v3531 = vunpack.c.h.b16 %v2829
    %v3532 = vunpack.c.l.b16 %v2830
    %v3533 = vunpack.c.h.b16 %v2830
    %v3534 = vunpack.c.l.b16 %v2831
    %v3535 = vunpack.c.h.b16 %v2831
    %v3536 = vunpack.c.l.b16 %v2832
    %v3537 = vunpack.c.h.b16 %v2832
    %v3538 = vunpack.c.l.b16 %v2833
    %v3539 = vunpack.c.h.b16 %v2833
    %v3540 = vunpack.c.l.b16 %v2834
    %v3541 = vunpack.c.h.b16 %v2834
    %v3542 = vunpack.c.l.b16 %v2835
    %v3543 = vunpack.c.h.b16 %v2835
    %v3544 = vunpack.c.l.b16 %v2836
    %v3545 = vunpack.c.h.b16 %v2836
    %v3546 = vunpack.c.l.b16 %v2837
    %v3547 = vunpack.c.h.b16 %v2837
    %v3548 = vunpack.c.l.b16 %v2838
    %v3549 = vunpack.c.h.b16 %v2838
    %v3550 = vunpack.c.l.b16 %v2839
    %v3551 = vunpack.c.h.b16 %v2839
    %v3552 = vunpack.c.l.b16 %v2840
    %v3553 = vunpack.c.h.b16 %v2840
    %v3554 = vunpack.c.l.b16 %v2841
    %v3555 = vunpack.c.h.b16 %v2841
    %v3556 = vunpack.c.l.b16 %v2842
    %v3557 = vunpack.c.h.b16 %v2842
    %v3558 = vunpack.c.l.b16 %v2843
    %v3559 = vunpack.c.h.b16 %v2843
    %v3560 = vunpack.c.l.b16 %v2844
    %v3561 = vunpack.c.h.b16 %v2844
    %v3562 = vunpack.c.l.b16 %v2845
    %v3563 = vunpack.c.h.b16 %v2845
    %v3564 = vunpack.c.l.b16 %v2846
    %v3565 = vunpack.c.h.b16 %v2846
    %v3566 = vunpack.c.l.b16 %v2847
    %v3567 = vunpack.c.h.b16 %v2847
    %v3568 = vunpack.c.l.b16 %v2848
    %v3569 = vunpack.c.h.b16 %v2848
    %v3570 = vunpack.c.l.b16 %v2849
    %v3571 = vunpack.c.h.b16 %v2849
    %v3572 = vunpack.c.l.b16 %v2850
    %v3573 = vunpack.c.h.b16 %v2850
    %v3574 = vunpack.c.l.b16 %v2851
    %v3575 = vunpack.c.h.b16 %v2851
    %v3576 = vunpack.c.l.b16 %v2852
    %v3577 = vunpack.c.h.b16 %v2852
    %v3578 = vunpack.c.l.b16 %v2853
    %v3579 = vunpack.c.h.b16 %v2853
    %v3580 = vunpack.c.l.b16 %v2854
    %v3581 = vunpack.c.h.b16 %v2854
    %v3582 = vunpack.c.l.b16 %v2855
    %v3583 = vunpack.c.h.b16 %v2855
    %v3584 = vunpack.c.l.b16 %v2856
    %v3585 = vunpack.c.h.b16 %v2856
    %v3586 = vunpack.c.l.b16 %v2857
    %v3587 = vunpack.c.h.b16 %v2857
    %v3588 = vunpack.c.l.b16 %v2858
    %v3589 = vunpack.c.h.b16 %v2858
    %v3590 = vunpack.c.l.b16 %v2859
    %v3591 = vunpack.c.h.b16 %v2859
    %v3592 = vunpack.c.l.b16 %v2860
    %v3593 = vunpack.c.h.b16 %v2860
    %v3594 = vunpack.c.l.b16 %v2861
    %v3595 = vunpack.c.h.b16 %v2861
    %v3596 = vunpack.c.l.b16 %v2862
    %v3597 = vunpack.c.h.b16 %v2862
    %v3598 = vunpack.c.l.b16 %v2863
    %v3599 = vunpack.c.h.b16 %v2863
    %v3600 = vunpack.c.l.b16 %v2864
    %v3601 = vunpack.c.h.b16 %v2864
    %v3602 = vunpack.c.l.b16 %v2865
    %v3603 = vunpack.c.h.b16 %v2865
    %v3604 = vunpack.c.l.b16 %v2866
    %v3605 = vunpack.c.h.b16 %v2866
    %v3606 = vunpack.c.l.b16 %v2867
    %v3607 = vunpack.c.h.b16 %v2867
    %v3608 = vunpack.c.l.b16 %v2868
    %v3609 = vunpack.c.h.b16 %v2868
    %v3610 = vunpack.c.l.b16 %v2869
    %v3611 = vunpack.c.h.b16 %v2869
    %v3612 = vunpack.c.l.b16 %v2870
    %v3613 = vunpack.c.h.b16 %v2870
    %v3614 = vunpack.c.l.b16 %v2871
    %v3615 = vunpack.c.h.b16 %v2871
    %v3616 = vunpack.c.l.b16 %v2872
    %v3617 = vunpack.c.h.b16 %v2872
    %v3618 = vunpack.c.l.b16 %v2873
    %v3619 = vunpack.c.h.b16 %v2873
    %v3620 = vunpack.c.l.b16 %v2874
    %v3621 = vunpack.c.h.b16 %v2874
    %v3622 = vunpack.c.l.b16 %v2875
    %v3623 = vunpack.c.h.b16 %v2875
    %v3624 = vunpack.c.l.b16 %v2876
    %v3625 = vunpack.c.h.b16 %v2876
    %v3626 = vunpack.c.l.b16 %v2877
    %v3627 = vunpack.c.h.b16 %v2877
    %v3628 = vunpack.c.l.b16 %v2878
    %v3629 = vunpack.c.h.b16 %v2878
    %v3630 = vunpack.c.l.b16 %v2879
    %v3631 = vunpack.c.h.b16 %v2879
    %v3632 = vunpack.c.l.b16 %v2880
    %v3633 = vunpack.c.h.b16 %v2880
    %v3634 = vunpack.c.l.b16 %v2881
    %v3635 = vunpack.c.h.b16 %v2881
    %v3636 = vunpack.c.l.b16 %v2882
    %v3637 = vunpack.c.h.b16 %v2882
    %v3638 = vunpack.c.l.b16 %v2883
    %v3639 = vunpack.c.h.b16 %v2883
    %v3640 = vunpack.c.l.b16 %v2884
    %v3641 = vunpack.c.h.b16 %v2884
    %v3642 = vunpack.c.l.b16 %v2885
    %v3643 = vunpack.c.h.b16 %v2885
    %v3644 = vunpack.c.l.b16 %v2886
    %v3645 = vunpack.c.h.b16 %v2886
    %v3646 = vunpack.c.l.b16 %v2887
    %v3647 = vunpack.c.h.b16 %v2887
    %v3648 = vunpack.c.l.b16 %v2888
    %v3649 = vunpack.c.h.b16 %v2888
    %v3650 = vunpack.c.l.b16 %v2889
    %v3651 = vunpack.c.h.b16 %v2889
    %v3652 = vunpack.c.l.b16 %v2890
    %v3653 = vunpack.c.h.b16 %v2890
    %v3654 = vunpack.c.l.b16 %v2891
    %v3655 = vunpack.c.h.b16 %v2891
    %v3656 = vunpack.c.l.b16 %v2892
    %v3657 = vunpack.c.h.b16 %v2892
    %v3658 = vunpack.c.l.b16 %v2893
    %v3659 = vunpack.c.h.b16 %v2893
    %v3660 = vunpack.c.l.b16 %v2894
    %v3661 = vunpack.c.h.b16 %v2894
    %v3662 = vunpack.c.l.b16 %v2895
    %v3663 = vunpack.c.h.b16 %v2895
    %v3664 = vunpack.c.l.b16 %v2896
    %v3665 = vunpack.c.h.b16 %v2896
    %v3666 = vunpack.c.l.b16 %v2897
    %v3667 = vunpack.c.h.b16 %v2897
    %v3668 = vunpack.c.l.b16 %v2898
    %v3669 = vunpack.c.h.b16 %v2898
    %v3670 = vunpack.c.l.b16 %v2899
    %v3671 = vunpack.c.h.b16 %v2899
    %v3672 = vunpack.c.l.b16 %v2900
    %v3673 = vunpack.c.h.b16 %v2900
    %v3674 = vunpack.c.l.b16 %v2901
    %v3675 = vunpack.c.h.b16 %v2901
    %v3676 = vunpack.c.l.b16 %v2902
    %v3677 = vunpack.c.h.b16 %v2902
    %v3678 = vunpack.c.l.b16 %v2903
    %v3679 = vunpack.c.h.b16 %v2903
    %v3680 = vunpack.c.l.b16 %v2904
    %v3681 = vunpack.c.h.b16 %v2904
    %v3682 = vunpack.c.l.b16 %v2905
    %v3683 = vunpack.c.h.b16 %v2905
    %v3684 = vunpack.c.l.b16 %v2906
    %v3685 = vunpack.c.h.b16 %v2906
    %v3686 = vunpack.c.l.b16 %v2907
    %v3687 = vunpack.c.h.b16 %v2907
    %v3688 = vunpack.c.l.b16 %v2908
    %v3689 = vunpack.c.h.b16 %v2908
    %v3690 = vunpack.c.l.b16 %v2909
    %v3691 = vunpack.c.h.b16 %v2909
    %v3692 = vunpack.c.l.b16 %v2910
    %v3693 = vunpack.c.h.b16 %v2910
    %v3694 = vunpack.c.l.b16 %v2911
    %v3695 = vunpack.c.h.b16 %v2911
    %v3696 = vunpack.c.l.b16 %v2912
    %v3697 = vunpack.c.h.b16 %v2912
    %v3698 = vunpack.c.l.b16 %v2913
    %v3699 = vunpack.c.h.b16 %v2913
    %v3700 = vunpack.c.l.b16 %v2914
    %v3701 = vunpack.c.h.b16 %v2914
    %v3702 = vunpack.c.l.b16 %v2915
    %v3703 = vunpack.c.h.b16 %v2915
    %v3704 = vunpack.c.l.b16 %v2916
    %v3705 = vunpack.c.h.b16 %v2916
    %v3706 = vunpack.c.l.b16 %v2917
    %v3707 = vunpack.c.h.b16 %v2917
    %v3708 = vunpack.c.l.b16 %v2918
    %v3709 = vunpack.c.h.b16 %v2918
    %v3710 = vunpack.c.l.b16 %v2919
    %v3711 = vunpack.c.h.b16 %v2919
    %v3712 = vunpack.c.l.b16 %v2920
    %v3713 = vunpack.c.h.b16 %v2920
    %v3714 = vunpack.c.l.b16 %v2921
    %v3715 = vunpack.c.h.b16 %v2921
    %v3716 = vunpack.c.l.b16 %v2922
    %v3717 = vunpack.c.h.b16 %v2922
    %v3718 = vunpack.c.l.b16 %v2923
    %v3719 = vunpack.c.h.b16 %v2923
    %v3720 = vunpack.c.l.b16 %v2924
    %v3721 = vunpack.c.h.b16 %v2924
    %v3722 = vunpack.c.l.b16 %v2925
    %v3723 = vunpack.c.h.b16 %v2925
    %v3724 = vunpack.c.l.b16 %v2926
    %v3725 = vunpack.c.h.b16 %v2926
    %v3726 = vunpack.c.l.b16 %v2927
    %v3727 = vunpack.c.h.b16 %v2927
    %v3728 = vunpack.c.l.b16 %v2928
    %v3729 = vunpack.c.h.b16 %v2928
    %v3730 = vunpack.c.l.b16 %v2929
    %v3731 = vunpack.c.h.b16 %v2929
    %v3732 = vunpack.c.l.b16 %v2930
    %v3733 = vunpack.c.h.b16 %v2930
    %v3734 = vunpack.c.l.b16 %v2931
    %v3735 = vunpack.c.h.b16 %v2931
    %v3736 = vunpack.c.l.b16 %v2932
    %v3737 = vunpack.c.h.b16 %v2932
    %v3738 = vunpack.c.l.b16 %v2933
    %v3739 = vunpack.c.h.b16 %v2933
    %v3740 = vunpack.c.l.b16 %v2934
    %v3741 = vunpack.c.h.b16 %v2934
    %v3742 = vunpack.c.l.b16 %v2935
    %v3743 = vunpack.c.h.b16 %v2935
    %v3744 = vunpack.c.l.b16 %v2936
    %v3745 = vunpack.c.h.b16 %v2936
    %v3746 = vunpack.c.l.b16 %v2937
    %v3747 = vunpack.c.h.b16 %v2937
    %v3748 = vunpack.c.l.b16 %v2938
    %v3749 = vunpack.c.h.b16 %v2938
    %v3750 = vunpack.c.l.b16 %v2939
    %v3751 = vunpack.c.h.b16 %v2939
    %v3752 = vunpack.c.l.b16 %v2940
    %v3753 = vunpack.c.h.b16 %v2940
    %v3754 = vunpack.c.l.b16 %v2941
    %v3755 = vunpack.c.h.b16 %v2941
    %v3756 = vunpack.c.l.b16 %v2942
    %v3757 = vunpack.c.h.b16 %v2942
    %v3758 = vunpack.c.l.b16 %v2943
    %v3759 = vunpack.c.h.b16 %v2943
    %v3760 = vunpack.c.l.b16 %v2944
    %v3761 = vunpack.c.h.b16 %v2944
    %v3762 = vunpack.c.l.b16 %v2945
    %v3763 = vunpack.c.h.b16 %v2945
    %v3764 = vunpack.c.l.b16 %v2946
    %v3765 = vunpack.c.h.b16 %v2946
    %v3766 = vunpack.c.l.b16 %v2947
    %v3767 = vunpack.c.h.b16 %v2947
    %v3768 = vunpack.c.l.b16 %v2948
    %v3769 = vunpack.c.h.b16 %v2948
    %v3770 = vunpack.c.l.b16 %v2949
    %v3771 = vunpack.c.h.b16 %v2949
    %v3772 = vunpack.c.l.b16 %v2950
    %v3773 = vunpack.c.h.b16 %v2950
    %v3774 = vunpack.c.l.b16 %v2951
    %v3775 = vunpack.c.h.b16 %v2951
    %v3776 = vunpack.c.l.b16 %v2952
    %v3777 = vunpack.c.h.b16 %v2952
    %v3778 = vunpack.c.l.b16 %v2953
    %v3779 = vunpack.c.h.b16 %v2953
    %v3780 = vunpack.c.l.b16 %v2954
    %v3781 = vunpack.c.h.b16 %v2954
    %v3782 = vunpack.c.l.b16 %v2955
    %v3783 = vunpack.c.h.b16 %v2955
    %v3784 = vunpack.c.l.b16 %v2956
    %v3785 = vunpack.c.h.b16 %v2956
    %v3786 = vunpack.c.l.b16 %v2957
    %v3787 = vunpack.c.h.b16 %v2957
    %v3788 = vunpack.c.l.b16 %v2958
    %v3789 = vunpack.c.h.b16 %v2958
    %v3790 = vunpack.c.l.b16 %v2959
    %v3791 = vunpack.c.h.b16 %v2959
    %v3792 = vunpack.c.l.b16 %v2960
    %v3793 = vunpack.c.h.b16 %v2960
    %v3794 = vunpack.c.l.b16 %v2961
    %v3795 = vunpack.c.h.b16 %v2961
    %v3796 = vunpack.c.l.b16 %v2962
    %v3797 = vunpack.c.h.b16 %v2962
    %v3798 = vunpack.c.l.b16 %v2963
    %v3799 = vunpack.c.h.b16 %v2963
    %v3800 = vunpack.c.l.b16 %v2964
    %v3801 = vunpack.c.h.b16 %v2964
    %v3802 = vunpack.c.l.b16 %v2965
    %v3803 = vunpack.c.h.b16 %v2965
    %v3804 = vunpack.c.l.b16 %v2966
    %v3805 = vunpack.c.h.b16 %v2966
    %v3806 = vunpack.c.l.b16 %v2967
    %v3807 = vunpack.c.h.b16 %v2967
    %v3808 = vunpack.c.l.b16 %v2968
    %v3809 = vunpack.c.h.b16 %v2968
    %v3810 = vunpack.c.l.b16 %v2969
    %v3811 = vunpack.c.h.b16 %v2969
    %v3812 = vunpack.c.l.b16 %v2970
    %v3813 = vunpack.c.h.b16 %v2970
    %v3814 = vunpack.c.l.b16 %v2971
    %v3815 = vunpack.c.h.b16 %v2971
    %v3816 = vunpack.c.l.b16 %v2972
    %v3817 = vunpack.c.h.b16 %v2972
    %v3818 = vunpack.c.l.b16 %v2973
    %v3819 = vunpack.c.h.b16 %v2973
    %v3820 = vunpack.c.l.b16 %v2974
    %v3821 = vunpack.c.h.b16 %v2974
    %v3822 = vunpack.c.l.b16 %v2975
    %v3823 = vunpack.c.h.b16 %v2975
    %v3824 = vunpack.c.l.b16 %v2976
    %v3825 = vunpack.c.h.b16 %v2976
    %v3826 = vunpack.c.l.b16 %v2977
    %v3827 = vunpack.c.h.b16 %v2977
    %v3828 = vunpack.c.l.b16 %v2978
    %v3829 = vunpack.c.h.b16 %v2978
    %v3830 = vunpack.c.l.b16 %v2979
    %v3831 = vunpack.c.h.b16 %v2979
    %v3832 = vunpack.c.l.b16 %v2980
    %v3833 = vunpack.c.h.b16 %v2980
    %v3834 = vunpack.c.l.b16 %v2981
    %v3835 = vunpack.c.h.b16 %v2981
    %v3836 = vunpack.c.l.b16 %v2982
    %v3837 = vunpack.c.h.b16 %v2982
    %v3838 = vunpack.c.l.b16 %v2983
    %v3839 = vunpack.c.h.b16 %v2983
    %v3840 = vunpack.c.l.b16 %v2984
    %v3841 = vunpack.c.h.b16 %v2984
    %v3842 = vunpack.c.l.b16 %v2985
    %v3843 = vunpack.c.h.b16 %v2985
    %v3844 = vunpack.c.l.b16 %v2986
    %v3845 = vunpack.c.h.b16 %v2986
    %v3846 = vunpack.c.l.b16 %v2987
    %v3847 = vunpack.c.h.b16 %v2987
    %v3848 = vunpack.c.l.b16 %v2988
    %v3849 = vunpack.c.h.b16 %v2988
    %v3850 = vunpack.c.l.b16 %v2989
    %v3851 = vunpack.c.h.b16 %v2989
    %v3852 = vunpack.c.l.b16 %v2990
    %v3853 = vunpack.c.h.b16 %v2990
    %v3854 = vunpack.c.l.b16 %v2991
    %v3855 = vunpack.c.h.b16 %v2991
    %v3856 = vunpack.c.l.b16 %v2992
    %v3857 = vunpack.c.h.b16 %v2992
    %v3858 = vunpack.c.l.b16 %v2993
    %v3859 = vunpack.c.h.b16 %v2993
    %v3860 = vunpack.c.l.b16 %v2994
    %v3861 = vunpack.c.h.b16 %v2994
    %v3862 = vunpack.c.l.b16 %v2995
    %v3863 = vunpack.c.h.b16 %v2995
    %v3864 = vunpack.c.l.b16 %v2996
    %v3865 = vunpack.c.h.b16 %v2996
    %v3866 = vunpack.c.l.b16 %v2997
    %v3867 = vunpack.c.h.b16 %v2997
    %v3868 = vunpack.c.l.b16 %v2998
    %v3869 = vunpack.c.h.b16 %v2998
    %v3870 = vunpack.c.l.b16 %v2999
    %v3871 = vunpack.c.h.b16 %v2999
    %v3872 = vunpack.c.l.b16 %v3000
    %v3873 = vunpack.c.h.b16 %v3000
    %v3874 = vunpack.c.l.b16 %v3001
    %v3875 = vunpack.c.h.b16 %v3001
    %v3876 = vunpack.c.l.b16 %v3002
    %v3877 = vunpack.c.h.b16 %v3002
    %v3878 = vunpack.c.l.b16 %v3003
    %v3879 = vunpack.c.h.b16 %v3003
    %v3880 = vunpack.c.l.b16 %v3004
    %v3881 = vunpack.c.h.b16 %v3004
    %v3882 = vunpack.c.l.b16 %v3005
    %v3883 = vunpack.c.h.b16 %v3005
    %v3884 = vunpack.c.l.b16 %v3006
    %v3885 = vunpack.c.h.b16 %v3006
    %v3886 = vunpack.c.l.b16 %v3007
    %v3887 = vunpack.c.h.b16 %v3007
    %v3888 = vunpack.c.l.b16 %v3008
    %v3889 = vunpack.c.h.b16 %v3008
    %v3890 = vunpack.c.l.b16 %v3009
    %v3891 = vunpack.c.h.b16 %v3009
    %v3892 = vunpack.c.l.b16 %v3010
    %v3893 = vunpack.c.h.b16 %v3010
    %v3894 = vunpack.c.l.b16 %v3011
    %v3895 = vunpack.c.h.b16 %v3011
    %v3896 = vunpack.c.l.b16 %v3012
    %v3897 = vunpack.c.h.b16 %v3012
    %v3898 = vunpack.c.l.b16 %v3013
    %v3899 = vunpack.c.h.b16 %v3013
    %v3900 = vunpack.c.l.b16 %v3014
    %v3901 = vunpack.c.h.b16 %v3014
    %v3902 = vunpack.c.l.b16 %v3015
    %v3903 = vunpack.c.h.b16 %v3015
    %v3904 = vunpack.c.l.b16 %v3016
    %v3905 = vunpack.c.h.b16 %v3016
    %v3906 = vunpack.c.l.b16 %v3017
    %v3907 = vunpack.c.h.b16 %v3017
    %v3908 = vunpack.c.l.b16 %v3018
    %v3909 = vunpack.c.h.b16 %v3018
    %v3910 = vunpack.c.l.b16 %v3019
    %v3911 = vunpack.c.h.b16 %v3019
    %v3912 = vunpack.c.l.b16 %v3020
    %v3913 = vunpack.c.h.b16 %v3020
    %v3914 = vunpack.c.l.b16 %v3021
    %v3915 = vunpack.c.h.b16 %v3021
    %v3916 = vunpack.c.l.b16 %v3022
    %v3917 = vunpack.c.h.b16 %v3022
    %v3918 = vunpack.c.l.b16 %v3023
    %v3919 = vunpack.c.h.b16 %v3023
    %v3920 = vpack.c.b16 %v3410, %v3408
    %v3921 = vpack.c.b16 %v3411, %v3409
    %v3922 = vpack.c.b16 %v3414, %v3412
    %v3923 = vpack.c.b16 %v3415, %v3413
    %v3924 = vpack.c.b16 %v3418, %v3416
    %v3925 = vpack.c.b16 %v3419, %v3417
    %v3926 = vpack.c.b16 %v3422, %v3420
    %v3927 = vpack.c.b16 %v3423, %v3421
    %v3928 = vpack.c.b16 %v3426, %v3424
    %v3929 = vpack.c.b16 %v3427, %v3425
    %v3930 = vpack.c.b16 %v3430, %v3428
    %v3931 = vpack.c.b16 %v3431, %v3429
    %v3932 = vpack.c.b16 %v3434, %v3432
    %v3933 = vpack.c.b16 %v3435, %v3433
    %v3934 = vpack.c.b16 %v3438, %v3436
    %v3935 = vpack.c.b16 %v3439, %v3437
    %v3936 = vpack.c.b16 %v3442, %v3440
    %v3937 = vpack.c.b16 %v3443, %v3441
    %v3938 = vpack.c.b16 %v3446, %v3444
    %v3939 = vpack.c.b16 %v3447, %v3445
    %v3940 = vpack.c.b16 %v3450, %v3448
    %v3941 = vpack.c.b16 %v3451, %v3449
    %v3942 = vpack.c.b16 %v3454, %v3452
    %v3943 = vpack.c.b16 %v3455, %v3453
    %v3944 = vpack.c.b16 %v3458, %v3456
    %v3945 = vpack.c.b16 %v3459, %v3457
    %v3946 = vpack.c.b16 %v3462, %v3460
    %v3947 = vpack.c.b16 %v3463, %v3461
    %v3948 = vpack.c.b16 %v3466, %v3464
    %v3949 = vpack.c.b16 %v3467, %v3465
    %v3950 = vpack.c.b16 %v3470, %v3468
    %v3951 = vpack.c.b16 %v3471, %v3469
    %v3952 = vpack.c.b16 %v3474, %v3472
    %v3953 = vpack.c.b16 %v3475, %v3473
    %v3954 = vpack.c.b16 %v3478, %v3476
    %v3955 = vpack.c.b16 %v3479, %v3477
    %v3956 = vpack.c.b16 %v3482, %v3480
    %v3957 = vpack.c.b16 %v3483, %v3481
    %v3958 = vpack.c.b16 %v3486, %v3484
    %v3959 = vpack.c.b16 %v3487, %v3485
    %v3960 = vpack.c.b16 %v3490, %v3488
    %v3961 = vpack.c.b16 %v3491, %v3489
    %v3962 = vpack.c.b16 %v3494, %v3492
    %v3963 = vpack.c.b16 %v3495, %v3493
    %v3964 = vpack.c.b16 %v3498, %v3496
    %v3965 = vpack.c.b16 %v3499, %v3497
    %v3966 = vpack.c.b16 %v3502, %v3500
    %v3967 = vpack.c.b16 %v3503, %v3501
    %v3968 = vpack.c.b16 %v3506, %v3504
    %v3969 = vpack.c.b16 %v3507, %v3505
    %v3970 = vpack.c.b16 %v3510, %v3508
    %v3971 = vpack.c.b16 %v3511, %v3509
    %v3972 = vpack.c.b16 %v3514, %v3512
    %v3973 = vpack.c.b16 %v3515, %v3513
    %v3974 = vpack.c.b16 %v3518, %v3516
    %v3975 = vpack.c.b16 %v3519, %v3517
    %v3976 = vpack.c.b16 %v3522, %v3520
    %v3977 = vpack.c.b16 %v3523, %v3521
    %v3978 = vpack.c.b16 %v3526, %v3524
    %v3979 = vpack.c.b16 %v3527, %v3525
    %v3980 = vpack.c.b16 %v3530, %v3528
    %v3981 = vpack.c.b16 %v3531, %v3529
    %v3982 = vpack.c.b16 %v3534, %v3532
    %v3983 = vpack.c.b16 %v3535, %v3533
    %v3984 = vpack.c.b16 %v3538, %v3536
    %v3985 = vpack.c.b16 %v3539, %v3537
    %v3986 = vpack.c.b16 %v3542, %v3540
    %v3987 = vpack.c.b16 %v3543, %v3541
    %v3988 = vpack.c.b16 %v3546, %v3544
    %v3989 = vpack.c.b16 %v3547, %v3545
    %v3990 = vpack.c.b16 %v3550, %v3548
    %v3991 = vpack.c.b16 %v3551, %v3549
    %v3992 = vpack.c.b16 %v3554, %v3552
    %v3993 = vpack.c.b16 %v3555, %v3553
    %v3994 = vpack.c.b16 %v3558, %v3556
    %v3995 = vpack.c.b16 %v3559, %v3557
    %v3996 = vpack.c.b16 %v3562, %v3560
    %v3997 = vpack.c.b16 %v3563, %v3561
    %v3998 = vpack.c.b16 %v3566, %v3564
    %v3999 = vpack.c.b16 %v3567, %v3565
    %v4000 = vpack.c.b16 %v3570, %v3568
    %v4001 = vpack.c.b16 %v3571, %v3569
    %v4002 = vpack.c.b16 %v3574, %v3572
    %v4003 = vpack.c.b16 %v3575, %v3573
    %v4004 = vpack.c.b16 %v3578, %v3576
    %v4005 = vpack.c.b16 %v3579, %v3577
    %v4006 = vpack.c.b16 %v3582, %v3580
    %v4007 = vpack.c.b16 %v3583, %v3581
    %v4008 = vpack.c.b16 %v3586, %v3584
    %v4009 = vpack.c.b16 %v3587, %v3585
    %v4010 = vpack.c.b16 %v3590, %v3588
    %v4011 = vpack.c.b16 %v3591, %v3589
    %v4012 = vpack.c.b16 %v3594, %v3592
    %v4013 = vpack.c.b16 %v3595, %v3593
    %v4014 = vpack.c.b16 %v3598, %v3596
    %v4015 = vpack.c.b16 %v3599, %v3597
    %v4016 = vpack.c.b16 %v3602, %v3600
    %v4017 = vpack.c.b16 %v3603, %v3601
    %v4018 = vpack.c.b16 %v3606, %v3604
    %v4019 = vpack.c.b16 %v3607, %v3605
    %v4020 = vpack.c.b16 %v3610, %v3608
    %v4021 = vpack.c.b16 %v3611, %v3609
    %v4022 = vpack.c.b16 %v3614, %v3612
    %v4023 = vpack.c.b16 %v3615, %v3613
    %v4024 = vpack.c.b16 %v3618, %v3616
    %v4025 = vpack.c.b16 %v3619, %v3617
    %v4026 = vpack.c.b16 %v3622, %v3620
    %v4027 = vpack.c.b16 %v3623, %v3621
    %v4028 = vpack.c.b16 %v3626, %v3624
    %v4029 = vpack.c.b16 %v3627, %v3625
    %v4030 = vpack.c.b16 %v3630, %v3628
    %v4031 = vpack.c.b16 %v3631, %v3629
    %v4032 = vpack.c.b16 %v3634, %v3632
    %v4033 = vpack.c.b16 %v3635, %v3633
    %v4034 = vpack.c.b16 %v3638, %v3636
    %v4035 = vpack.c.b16 %v3639, %v3637
    %v4036 = vpack.c.b16 %v3642, %v3640
    %v4037 = vpack.c.b16 %v3643, %v3641
    %v4038 = vpack.c.b16 %v3646, %v3644
    %v4039 = vpack.c.b16 %v3647, %v3645
    %v4040 = vpack.c.b16 %v3650, %v3648
    %v4041 = vpack.c.b16 %v3651, %v3649
    %v4042 = vpack.c.b16 %v3654, %v3652
    %v4043 = vpack.c.b16 %v3655, %v3653
    %v4044 = vpack.c.b16 %v3658, %v3656
    %v4045 = vpack.c.b16 %v3659, %v3657
    %v4046 = vpack.c.b16 %v3662, %v3660
    %v4047 = vpack.c.b16 %v3663, %v3661
    %v4048 = vpack.c.b16 %v3666, %v3664
    %v4049 = vpack.c.b16 %v3667, %v3665
    %v4050 = vpack.c.b16 %v3670, %v3668
    %v4051 = vpack.c.b16 %v3671, %v3669
    %v4052 = vpack.c.b16 %v3674, %v3672
    %v4053 = vpack.c.b16 %v3675, %v3673
    %v4054 = vpack.c.b16 %v3678, %v3676
    %v4055 = vpack.c.b16 %v3679, %v3677
    %v4056 = vpack.c.b16 %v3682, %v3680
    %v4057 = vpack.c.b16 %v3683, %v3681
    %v4058 = vpack.c.b16 %v3686, %v3684
    %v4059 = vpack.c.b16 %v3687, %v3685
    %v4060 = vpack.c.b16 %v3690, %v3688
    %v4061 = vpack.c.b16 %v3691, %v3689
    %v4062 = vpack.c.b16 %v3694, %v3692
    %v4063 = vpack.c.b16 %v3695, %v3693
    %v4064 = vpack.c.b16 %v3698, %v3696
    %v4065 = vpack.c.b16 %v3699, %v3697
    %v4066 = vpack.c.b16 %v3702, %v3700
    %v4067 = vpack.c.b16 %v3703, %v3701
    %v4068 = vpack.c.b16 %v3706, %v3704
    %v4069 = vpack.c.b16 %v3707, %v3705
    %v4070 = vpack.c.b16 %v3710, %v3708
    %v4071 = vpack.c.b16 %v3711, %v3709
    %v4072 = vpack.c.b16 %v3714, %v3712
    %v4073 = vpack.c.b16 %v3715, %v3713
    %v4074 = vpack.c.b16 %v3718, %v3716
    %v4075 = vpack.c.b16 %v3719, %v3717
    %v4076 = vpack.c.b16 %v3722, %v3720
    %v4077 = vpack.c.b16 %v3723, %v3721
    %v4078 = vpack.c.b16 %v3726, %v3724
    %v4079 = vpack.c.b16 %v3727, %v3725
    %v4080 = vpack.c.b16 %v3730, %v3728
    %v4081 = vpack.c.b16 %v3731, %v3729
    %v4082 = vpack.c.b16 %v3734, %v3732
    %v4083 = vpack.c.b16 %v3735, %v3733
    %v4084 = vpack.c.b16 %v3738, %v3736
    %v4085 = vpack.c.b16 %v3739, %v3737
    %v4086 = vpack.c.b16 %v3742, %v3740
    %v4087 = vpack.c.b16 %v3743, %v3741
    %v4088 = vpack.c.b16 %v3746, %v3744
    %v4089 = vpack.c.b16 %v3747, %v3745
    %v4090 = vpack.c.b16 %v3750, %v3748
    %v4091 = vpack.c.b16 %v3751, %v3749
    %v4092 = vpack.c.b16 %v3754, %v3752
    %v4093 = vpack.c.b16 %v3755, %v3753
    %v4094 = vpack.c.b16 %v3758, %v3756
    %v4095 = vpack.c.b16 %v3759, %v3757
    %v4096 = vpack.c.b16 %v3762, %v3760
    %v4097 = vpack.c.b16 %v3763, %v3761
    %v4098 = vpack.c.b16 %v3766, %v3764
    %v4099 = vpack.c.b16 %v3767, %v3765
    %v4100 = vpack.c.b16 %v3770, %v3768
    %v4101 = vpack.c.b16 %v3771, %v3769
    %v4102 = vpack.c.b16 %v3774, %v3772
    %v4103 = vpack.c.b16 %v3775, %v3773
    %v4104 = vpack.c.b16 %v3778, %v3776
    %v4105 = vpack.c.b16 %v3779, %v3777
    %v4106 = vpack.c.b16 %v3782, %v3780
    %v4107 = vpack.c.b16 %v3783, %v3781
    %v4108 = vpack.c.b16 %v3786, %v3784
    %v4109 = vpack.c.b16 %v3787, %v3785
    %v4110 = vpack.c.b16 %v3790, %v3788
    %v4111 = vpack.c.b16 %v3791, %v3789
    %v4112 = vpack.c.b16 %v3794, %v3792
    %v4113 = vpack.c.b16 %v3795, %v3793
    %v4114 = vpack.c.b16 %v3798, %v3796
    %v4115 = vpack.c.b16 %v3799, %v3797
    %v4116 = vpack.c.b16 %v3802, %v3800
    %v4117 = vpack.c.b16 %v3803, %v3801
    %v4118 = vpack.c.b16 %v3806, %v3804
    %v4119 = vpack.c.b16 %v3807, %v3805
    %v4120 = vpack.c.b16 %v3810, %v3808
    %v4121 = vpack.c.b16 %v3811, %v3809
    %v4122 = vpack.c.b16 %v3814, %v3812
    %v4123 = vpack.c.b16 %v3815, %v3813
    %v4124 = vpack.c.b16 %v3818, %v3816
    %v4125 = vpack.c.b16 %v3819, %v3817
    %v4126 = vpack.c.b16 %v3822, %v3820
    %v4127 = vpack.c.b16 %v3823, %v3821
    %v4128 = vpack.c.b16 %v3826, %v3824
    %v4129 = vpack.c.b16 %v3827, %v3825
    %v4130 = vpack.c.b16 %v3830, %v3828
    %v4131 = vpack.c.b16 %v3831, %v3829
    %v4132 = vpack.c.b16 %v3834, %v3832
    %v4133 = vpack.c.b16 %v3835, %v3833
    %v4134 = vpack.c.b16 %v3838, %v3836
    %v4135 = vpack.c.b16 %v3839, %v3837
    %v4136 = vpack.c.b16 %v3842, %v3840
    %v4137 = vpack.c.b16 %v3843, %v3841
    %v4138 = vpack.c.b16 %v3846, %v3844
    %v4139 = vpack.c.b16 %v3847, %v3845
    %v4140 = vpack.c.b16 %v3850, %v3848
    %v4141 = vpack.c.b16 %v3851, %v3849
    %v4142 = vpack.c.b16 %v3854, %v3852
    %v4143 = vpack.c.b16 %v3855, %v3853
    %v4144 = vpack.c.b16 %v3858, %v3856
    %v4145 = vpack.c.b16 %v3859, %v3857
    %v4146 = vpack.c.b16 %v3862, %v3860
    %v4147 = vpack.c.b16 %v3863, %v3861
    %v4148 = vpack.c.b16 %v3866, %v3864
    %v4149 = vpack.c.b16 %v3867, %v3865
    %v4150 = vpack.c.b16 %v3870, %v3868
    %v4151 = vpack.c.b16 %v3871, %v3869
    %v4152 = vpack.c.b16 %v3874, %v3872
    %v4153 = vpack.c.b16 %v3875, %v3873
    %v4154 = vpack.c.b16 %v3878, %v3876
    %v4155 = vpack.c.b16 %v3879, %v3877
    %v4156 = vpack.c.b16 %v3882, %v3880
    %v4157 = vpack.c.b16 %v3883, %v3881
    %v4158 = vpack.c.b16 %v3886, %v3884
    %v4159 = vpack.c.b16 %v3887, %v3885
    %v4160 = vpack.c.b16 %v3890, %v3888
    %v4161 = vpack.c.b16 %v3891, %v3889
    %v4162 = vpack.c.b16 %v3894, %v3892
    %v4163 = vpack.c.b16 %v3895, %v3893
    %v4164 = vpack.c.b16 %v3898, %v3896
    %v4165 = vpack.c.b16 %v3899, %v3897
    %v4166 = vpack.c.b16 %v3902, %v3900
    %v4167 = vpack.c.b16 %v3903, %v3901
    %v4168 = vpack.c.b16 %v3906, %v3904
    %v4169 = vpack.c.b16 %v3907, %v3905
    %v4170 = vpack.c.b16 %v3910, %v3908
    %v4171 = vpack.c.b16 %v3911, %v3909
    %v4172 = vpack.c.b16 %v3914, %v3912
    %v4173 = vpack.c.b16 %v3915, %v3913
    %v4174 = vpack.c.b16 %v3918, %v3916
    %v4175 = vpack.c.b16 %v3919, %v3917
    %4432 = vmatprep.subr.bf16.mxu0 %v3921
    %4433 = vmatpush1.bf16.msra.mxu0 %v3920
    %4434 = vmatprep.subr.bf16.mxu0 %v3923
    %4435 = vmatpush1.bf16.msra.mxu0 %v3922
    %4436 = vmatprep.subr.bf16.mxu0 %v3925
    %4437 = vmatpush1.bf16.msra.mxu0 %v3924
    %4438 = vmatprep.subr.bf16.mxu0 %v3927
    %4439 = vmatpush1.bf16.msra.mxu0 %v3926
    %4440 = vmatprep.subr.bf16.mxu0 %v3929
    %4441 = vmatpush1.bf16.msra.mxu0 %v3928
    %4442 = vmatprep.subr.bf16.mxu0 %v3931
    %4443 = vmatpush1.bf16.msra.mxu0 %v3930
    %4444 = vmatprep.subr.bf16.mxu0 %v3933
    %4445 = vmatpush1.bf16.msra.mxu0 %v3932
    %4446 = vmatprep.subr.bf16.mxu0 %v3935
    %4447 = vmatpush1.bf16.msra.mxu0 %v3934
    %4448 = vmatprep.subr.bf16.mxu0 %v3937
    %4449 = vmatpush1.bf16.msra.mxu0 %v3936
    %4450 = vmatprep.subr.bf16.mxu0 %v3939
    %4451 = vmatpush1.bf16.msra.mxu0 %v3938
    %4452 = vmatprep.subr.bf16.mxu0 %v3941
    %4453 = vmatpush1.bf16.msra.mxu0 %v3940
    %4454 = vmatprep.subr.bf16.mxu0 %v3943
    %4455 = vmatpush1.bf16.msra.mxu0 %v3942
    %4456 = vmatprep.subr.bf16.mxu0 %v3945
    %4457 = vmatpush1.bf16.msra.mxu0 %v3944
    %4458 = vmatprep.subr.bf16.mxu0 %v3947
    %4459 = vmatpush1.bf16.msra.mxu0 %v3946
    %4460 = vmatprep.subr.bf16.mxu0 %v3949
    %4461 = vmatpush1.bf16.msra.mxu0 %v3948
    %4462 = vmatprep.subr.bf16.mxu0 %v3951
    %4463 = vmatpush1.bf16.msra.mxu0 %v3950
    %4464 = vmatprep.mubr.bf16.mxu0 %v3075
    %4465 = vmatmul.mubr.bf16.gmra.mrb[0].mxu0 %v3061
    %v4466 = vpop.f32.mrb[0].mxu0
    %v4467 = vadd.f32 %v3029, %v4466
    %v4468 = vpop.f32.mrb[0].mxu0
    %v4469 = vadd.f32 %v3033, %v4468
    %v4470 = vpop.f32.mrb[0].mxu0
    %v4471 = vpop.f32.mrb[0].mxu0
    %4472 = vdwg.mxu0
    %4473 = vmatprep.subr.bf16.mxu0 %v3953
    %4474 = vmatpush1.bf16.msra.mxu0 %v3952
    %4475 = vmatprep.subr.bf16.mxu0 %v3955
    %4476 = vmatpush1.bf16.msra.mxu0 %v3954
    %4477 = vmatprep.subr.bf16.mxu0 %v3957
    %4478 = vmatpush1.bf16.msra.mxu0 %v3956
    %4479 = vmatprep.subr.bf16.mxu0 %v3959
    %4480 = vmatpush1.bf16.msra.mxu0 %v3958
    %4481 = vmatprep.subr.bf16.mxu0 %v3961
    %4482 = vmatpush1.bf16.msra.mxu0 %v3960
    %4483 = vmatprep.subr.bf16.mxu0 %v3963
    %4484 = vmatpush1.bf16.msra.mxu0 %v3962
    %4485 = vmatprep.subr.bf16.mxu0 %v3965
    %4486 = vmatpush1.bf16.msra.mxu0 %v3964
    %4487 = vmatprep.subr.bf16.mxu0 %v3967
    %4488 = vmatpush1.bf16.msra.mxu0 %v3966
    %4489 = vmatprep.subr.bf16.mxu0 %v3969
    %4490 = vmatpush1.bf16.msra.mxu0 %v3968
    %4491 = vmatprep.subr.bf16.mxu0 %v3971
    %4492 = vmatpush1.bf16.msra.mxu0 %v3970
    %4493 = vmatprep.subr.bf16.mxu0 %v3973
    %4494 = vmatpush1.bf16.msra.mxu0 %v3972
    %4495 = vmatprep.subr.bf16.mxu0 %v3975
    %4496 = vmatpush1.bf16.msra.mxu0 %v3974
    %4497 = vmatprep.subr.bf16.mxu0 %v3977
    %4498 = vmatpush1.bf16.msra.mxu0 %v3976
    %4499 = vmatprep.subr.bf16.mxu0 %v3979
    %4500 = vmatpush1.bf16.msra.mxu0 %v3978
    %4501 = vmatprep.subr.bf16.mxu0 %v3981
    %4502 = vmatpush1.bf16.msra.mxu0 %v3980
    %4503 = vmatprep.subr.bf16.mxu0 %v3983
    %4504 = vmatpush1.bf16.msra.mxu0 %v3982
    %4505 = vmatprep.mubr.bf16.mxu0 %v3085
    %4506 = vmatmul.mubr.bf16.gmra.mrb[0].mxu0 %v3083
    %v4507 = vpop.f32.mrb[0].mxu0
    %v4508 = vadd.f32 %v4467, %v4507
    %v4509 = vpop.f32.mrb[0].mxu0
    %v4510 = vadd.f32 %v4469, %v4509
    %v4511 = vpop.f32.mrb[0].mxu0
    %v4512 = vpop.f32.mrb[0].mxu0
    %4513 = vdwg.mxu0
    %4514 = vmatprep.subr.bf16.mxu0 %v3985
    %4515 = vmatpush1.bf16.msra.mxu0 %v3984
    %4516 = vmatprep.subr.bf16.mxu0 %v3987
    %4517 = vmatpush1.bf16.msra.mxu0 %v3986
    %4518 = vmatprep.subr.bf16.mxu0 %v3989
    %4519 = vmatpush1.bf16.msra.mxu0 %v3988
    %4520 = vmatprep.subr.bf16.mxu0 %v3991
    %4521 = vmatpush1.bf16.msra.mxu0 %v3990
    %4522 = vmatprep.subr.bf16.mxu0 %v3993
    %4523 = vmatpush1.bf16.msra.mxu0 %v3992
    %4524 = vmatprep.subr.bf16.mxu0 %v3995
    %4525 = vmatpush1.bf16.msra.mxu0 %v3994
    %4526 = vmatprep.subr.bf16.mxu0 %v3997
    %4527 = vmatpush1.bf16.msra.mxu0 %v3996
    %4528 = vmatprep.subr.bf16.mxu0 %v3999
    %4529 = vmatpush1.bf16.msra.mxu0 %v3998
    %4530 = vmatprep.subr.bf16.mxu0 %v4001
    %4531 = vmatpush1.bf16.msra.mxu0 %v4000
    %4532 = vmatprep.subr.bf16.mxu0 %v4003
    %4533 = vmatpush1.bf16.msra.mxu0 %v4002
    %4534 = vmatprep.subr.bf16.mxu0 %v4005
    %4535 = vmatpush1.bf16.msra.mxu0 %v4004
    %4536 = vmatprep.subr.bf16.mxu0 %v4007
    %4537 = vmatpush1.bf16.msra.mxu0 %v4006
    %4538 = vmatprep.subr.bf16.mxu0 %v4009
    %4539 = vmatpush1.bf16.msra.mxu0 %v4008
    %4540 = vmatprep.subr.bf16.mxu0 %v4011
    %4541 = vmatpush1.bf16.msra.mxu0 %v4010
    %4542 = vmatprep.subr.bf16.mxu0 %v4013
    %4543 = vmatpush1.bf16.msra.mxu0 %v4012
    %4544 = vmatprep.subr.bf16.mxu0 %v4015
    %4545 = vmatpush1.bf16.msra.mxu0 %v4014
    %4546 = vmatprep.mubr.bf16.mxu0 %v3082
    %4547 = vmatmul.mubr.bf16.gmra.mrb[0].mxu0 %v3068
    %v4548 = vpop.f32.mrb[0].mxu0
    %v4549 = vadd.f32 %v4508, %v4548
    %v4550 = vpop.f32.mrb[0].mxu0
    %v4551 = vadd.f32 %v4510, %v4550
    %v4552 = vpop.f32.mrb[0].mxu0
    %v4553 = vpop.f32.mrb[0].mxu0
    %4554 = vdwg.mxu0
    %4555 = vmatprep.subr.bf16.mxu0 %v4017
    %4556 = vmatpush1.bf16.msra.mxu0 %v4016
    %4557 = vmatprep.subr.bf16.mxu0 %v4019
    %4558 = vmatpush1.bf16.msra.mxu0 %v4018
    %4559 = vmatprep.subr.bf16.mxu0 %v4021
    %4560 = vmatpush1.bf16.msra.mxu0 %v4020
    %4561 = vmatprep.subr.bf16.mxu0 %v4023
    %4562 = vmatpush1.bf16.msra.mxu0 %v4022
    %4563 = vmatprep.subr.bf16.mxu0 %v4025
    %4564 = vmatpush1.bf16.msra.mxu0 %v4024
    %4565 = vmatprep.subr.bf16.mxu0 %v4027
    %4566 = vmatpush1.bf16.msra.mxu0 %v4026
    %4567 = vmatprep.subr.bf16.mxu0 %v4029
    %4568 = vmatpush1.bf16.msra.mxu0 %v4028
    %4569 = vmatprep.subr.bf16.mxu0 %v4031
    %4570 = vmatpush1.bf16.msra.mxu0 %v4030
    %4571 = vmatprep.subr.bf16.mxu0 %v4033
    %4572 = vmatpush1.bf16.msra.mxu0 %v4032
    %4573 = vmatprep.subr.bf16.mxu0 %v4035
    %4574 = vmatpush1.bf16.msra.mxu0 %v4034
    %4575 = vmatprep.subr.bf16.mxu0 %v4037
    %4576 = vmatpush1.bf16.msra.mxu0 %v4036
    %4577 = vmatprep.subr.bf16.mxu0 %v4039
    %4578 = vmatpush1.bf16.msra.mxu0 %v4038
    %4579 = vmatprep.subr.bf16.mxu0 %v4041
    %4580 = vmatpush1.bf16.msra.mxu0 %v4040
    %4581 = vmatprep.subr.bf16.mxu0 %v4043
    %4582 = vmatpush1.bf16.msra.mxu0 %v4042
    %4583 = vmatprep.subr.bf16.mxu0 %v4045
    %4584 = vmatpush1.bf16.msra.mxu0 %v4044
    %4585 = vmatprep.subr.bf16.mxu0 %v4047
    %4586 = vmatpush1.bf16.msra.mxu0 %v4046
    %4587 = vmatprep.mubr.bf16.mxu0 %v3086
    %4588 = vmatmul.mubr.bf16.gmra.mrb[0].mxu0 %v3084
    %v4589 = vpop.f32.mrb[0].mxu0
    %v4590 = vadd.f32 %v4549, %v4589
    %v4591 = vpop.f32.mrb[0].mxu0
    %v4592 = vadd.f32 %v4551, %v4591
    %v4593 = vpop.f32.mrb[0].mxu0
    %v4594 = vpop.f32.mrb[0].mxu0
    %4595 = vdwg.mxu0
    %4596 = vmatprep.subr.bf16.mxu0 %v4049
    %4597 = vmatpush1.bf16.msra.mxu0 %v4048
    %4598 = vmatprep.subr.bf16.mxu0 %v4051
    %4599 = vmatpush1.bf16.msra.mxu0 %v4050
    %4600 = vmatprep.subr.bf16.mxu0 %v4053
    %4601 = vmatpush1.bf16.msra.mxu0 %v4052
    %4602 = vmatprep.subr.bf16.mxu0 %v4055
    %4603 = vmatpush1.bf16.msra.mxu0 %v4054
    %4604 = vmatprep.subr.bf16.mxu0 %v4057
    %4605 = vmatpush1.bf16.msra.mxu0 %v4056
    %4606 = vmatprep.subr.bf16.mxu0 %v4059
    %4607 = vmatpush1.bf16.msra.mxu0 %v4058
    %4608 = vmatprep.subr.bf16.mxu0 %v4061
    %4609 = vmatpush1.bf16.msra.mxu0 %v4060
    %4610 = vmatprep.subr.bf16.mxu0 %v4063
    %4611 = vmatpush1.bf16.msra.mxu0 %v4062
    %4612 = vmatprep.subr.bf16.mxu0 %v4065
    %4613 = vmatpush1.bf16.msra.mxu0 %v4064
    %4614 = vmatprep.subr.bf16.mxu0 %v4067
    %4615 = vmatpush1.bf16.msra.mxu0 %v4066
    %4616 = vmatprep.subr.bf16.mxu0 %v4069
    %4617 = vmatpush1.bf16.msra.mxu0 %v4068
    %4618 = vmatprep.subr.bf16.mxu0 %v4071
    %4619 = vmatpush1.bf16.msra.mxu0 %v4070
    %4620 = vmatprep.subr.bf16.mxu0 %v4073
    %4621 = vmatpush1.bf16.msra.mxu0 %v4072
    %4622 = vmatprep.subr.bf16.mxu0 %v4075
    %4623 = vmatpush1.bf16.msra.mxu0 %v4074
    %4624 = vmatprep.subr.bf16.mxu0 %v4077
    %4625 = vmatpush1.bf16.msra.mxu0 %v4076
    %4626 = vmatprep.subr.bf16.mxu0 %v4079
    %4627 = vmatpush1.bf16.msra.mxu0 %v4078
    %4628 = vmatprep.mubr.bf16.mxu0 %v3124
    %4629 = vmatmul.mubr.bf16.gmra.mrb[0].mxu0 %v3110
    %v4630 = vpop.f32.mrb[0].mxu0
    %v4631 = vadd.f32 %v4590, %v4630
    %v4632 = vpop.f32.mrb[0].mxu0
    %v4633 = vadd.f32 %v4592, %v4632
    %v4634 = vpop.f32.mrb[0].mxu0
    %v4635 = vpop.f32.mrb[0].mxu0
    %4636 = vdwg.mxu0
    %4637 = vmatprep.subr.bf16.mxu0 %v4081
    %4638 = vmatpush1.bf16.msra.mxu0 %v4080
    %4639 = vmatprep.subr.bf16.mxu0 %v4083
    %4640 = vmatpush1.bf16.msra.mxu0 %v4082
    %4641 = vmatprep.subr.bf16.mxu0 %v4085
    %4642 = vmatpush1.bf16.msra.mxu0 %v4084
    %4643 = vmatprep.subr.bf16.mxu0 %v4087
    %4644 = vmatpush1.bf16.msra.mxu0 %v4086
    %4645 = vmatprep.subr.bf16.mxu0 %v4089
    %4646 = vmatpush1.bf16.msra.mxu0 %v4088
    %4647 = vmatprep.subr.bf16.mxu0 %v4091
    %4648 = vmatpush1.bf16.msra.mxu0 %v4090
    %4649 = vmatprep.subr.bf16.mxu0 %v4093
    %4650 = vmatpush1.bf16.msra.mxu0 %v4092
    %4651 = vmatprep.subr.bf16.mxu0 %v4095
    %4652 = vmatpush1.bf16.msra.mxu0 %v4094
    %4653 = vmatprep.subr.bf16.mxu0 %v4097
    %4654 = vmatpush1.bf16.msra.mxu0 %v4096
    %4655 = vmatprep.subr.bf16.mxu0 %v4099
    %4656 = vmatpush1.bf16.msra.mxu0 %v4098
    %4657 = vmatprep.subr.bf16.mxu0 %v4101
    %4658 = vmatpush1.bf16.msra.mxu0 %v4100
    %4659 = vmatprep.subr.bf16.mxu0 %v4103
    %4660 = vmatpush1.bf16.msra.mxu0 %v4102
    %4661 = vmatprep.subr.bf16.mxu0 %v4105
    %4662 = vmatpush1.bf16.msra.mxu0 %v4104
    %4663 = vmatprep.subr.bf16.mxu0 %v4107
    %4664 = vmatpush1.bf16.msra.mxu0 %v4106
    %4665 = vmatprep.subr.bf16.mxu0 %v4109
    %4666 = vmatpush1.bf16.msra.mxu0 %v4108
    %4667 = vmatprep.subr.bf16.mxu0 %v4111
    %4668 = vmatpush1.bf16.msra.mxu0 %v4110
    %4669 = vmatprep.mubr.bf16.mxu0 %v3134
    %4670 = vmatmul.mubr.bf16.gmra.mrb[0].mxu0 %v3132
    %v4671 = vpop.f32.mrb[0].mxu0
    %v4672 = vadd.f32 %v4631, %v4671
    %v4673 = vpop.f32.mrb[0].mxu0
    %v4674 = vadd.f32 %v4633, %v4673
    %v4675 = vpop.f32.mrb[0].mxu0
    %v4676 = vpop.f32.mrb[0].mxu0
    %4677 = vdwg.mxu0
    %4678 = vmatprep.subr.bf16.mxu0 %v4113
    %4679 = vmatpush1.bf16.msra.mxu0 %v4112
    %4680 = vmatprep.subr.bf16.mxu0 %v4115
    %4681 = vmatpush1.bf16.msra.mxu0 %v4114
    %4682 = vmatprep.subr.bf16.mxu0 %v4117
    %4683 = vmatpush1.bf16.msra.mxu0 %v4116
    %4684 = vmatprep.subr.bf16.mxu0 %v4119
    %4685 = vmatpush1.bf16.msra.mxu0 %v4118
    %4686 = vmatprep.subr.bf16.mxu0 %v4121
    %4687 = vmatpush1.bf16.msra.mxu0 %v4120
    %4688 = vmatprep.subr.bf16.mxu0 %v4123
    %4689 = vmatpush1.bf16.msra.mxu0 %v4122
    %4690 = vmatprep.subr.bf16.mxu0 %v4125
    %4691 = vmatpush1.bf16.msra.mxu0 %v4124
    %4692 = vmatprep.subr.bf16.mxu0 %v4127
    %4693 = vmatpush1.bf16.msra.mxu0 %v4126
    %4694 = vmatprep.subr.bf16.mxu0 %v4129
    %4695 = vmatpush1.bf16.msra.mxu0 %v4128
    %4696 = vmatprep.subr.bf16.mxu0 %v4131
    %4697 = vmatpush1.bf16.msra.mxu0 %v4130
    %4698 = vmatprep.subr.bf16.mxu0 %v4133
    %4699 = vmatpush1.bf16.msra.mxu0 %v4132
    %4700 = vmatprep.subr.bf16.mxu0 %v4135
    %4701 = vmatpush1.bf16.msra.mxu0 %v4134
    %4702 = vmatprep.subr.bf16.mxu0 %v4137
    %4703 = vmatpush1.bf16.msra.mxu0 %v4136
    %4704 = vmatprep.subr.bf16.mxu0 %v4139
    %4705 = vmatpush1.bf16.msra.mxu0 %v4138
    %4706 = vmatprep.subr.bf16.mxu0 %v4141
    %4707 = vmatpush1.bf16.msra.mxu0 %v4140
    %4708 = vmatprep.subr.bf16.mxu0 %v4143
    %4709 = vmatpush1.bf16.msra.mxu0 %v4142
    %4710 = vmatprep.mubr.bf16.mxu0 %v3131
    %4711 = vmatmul.mubr.bf16.gmra.mrb[0].mxu0 %v3117
    %v4712 = vpop.f32.mrb[0].mxu0
    %v4713 = vadd.f32 %v4672, %v4712
    %v4714 = vpop.f32.mrb[0].mxu0
    %v4715 = vadd.f32 %v4674, %v4714
    %v4716 = vpop.f32.mrb[0].mxu0
    %v4717 = vpop.f32.mrb[0].mxu0
    %4718 = vdwg.mxu0
    %4719 = vmatprep.subr.bf16.mxu0 %v4145
    %4720 = vmatpush1.bf16.msra.mxu0 %v4144
    %4721 = vmatprep.subr.bf16.mxu0 %v4147
    %4722 = vmatpush1.bf16.msra.mxu0 %v4146
    %4723 = vmatprep.subr.bf16.mxu0 %v4149
    %4724 = vmatpush1.bf16.msra.mxu0 %v4148
    %4725 = vmatprep.subr.bf16.mxu0 %v4151
    %4726 = vmatpush1.bf16.msra.mxu0 %v4150
    %4727 = vmatprep.subr.bf16.mxu0 %v4153
    %4728 = vmatpush1.bf16.msra.mxu0 %v4152
    %4729 = vmatprep.subr.bf16.mxu0 %v4155
    %4730 = vmatpush1.bf16.msra.mxu0 %v4154
    %4731 = vmatprep.subr.bf16.mxu0 %v4157
    %4732 = vmatpush1.bf16.msra.mxu0 %v4156
    %4733 = vmatprep.subr.bf16.mxu0 %v4159
    %4734 = vmatpush1.bf16.msra.mxu0 %v4158
    %4735 = vmatprep.subr.bf16.mxu0 %v4161
    %4736 = vmatpush1.bf16.msra.mxu0 %v4160
    %4737 = vmatprep.subr.bf16.mxu0 %v4163
    %4738 = vmatpush1.bf16.msra.mxu0 %v4162
    %4739 = vmatprep.subr.bf16.mxu0 %v4165
    %4740 = vmatpush1.bf16.msra.mxu0 %v4164
    %4741 = vmatprep.subr.bf16.mxu0 %v4167
    %4742 = vmatpush1.bf16.msra.mxu0 %v4166
    %4743 = vmatprep.subr.bf16.mxu0 %v4169
    %4744 = vmatpush1.bf16.msra.mxu0 %v4168
    %4745 = vmatprep.subr.bf16.mxu0 %v4171
    %4746 = vmatpush1.bf16.msra.mxu0 %v4170
    %4747 = vmatprep.subr.bf16.mxu0 %v4173
    %4748 = vmatpush1.bf16.msra.mxu0 %v4172
    %4749 = vmatprep.subr.bf16.mxu0 %v4175
    %4750 = vmatpush1.bf16.msra.mxu0 %v4174
    %4751 = vmatprep.mubr.bf16.mxu0 %v3135
    %4752 = vmatmul.mubr.bf16.gmra.mrb[0].mxu0 %v3133
    %v4753 = vpop.f32.mrb[0].mxu0
    %v4754 = vadd.f32 %v4713, %v4753
    %v4755 = vpop.f32.mrb[0].mxu0
    %v4756 = vadd.f32 %v4715, %v4755
    %v4757 = vpop.f32.mrb[0].mxu0
    %v4758 = vpop.f32.mrb[0].mxu0
    %4759 = vdwg.mxu0
    %v4762 = vcombine.low %v4754, %v4756
    %v4764 = vunpack.c.l.s4 1983009808
    %v4765 = vunpack.c.0.s8 %v4764
    %v4766 = vlaneseq
    %v4767 = vshrl.u32 %v4766, 7
    %v4768 = vsub.s32 %v4765, %v4767
    %v4769 = vrot.slane %v4762, %v4768
    %vm4771 = vcmask 1041408
    %vm4772 = vcmask 519170
    %vm4773 = vmor %vm4772, %vm4771
    %4774 = vst.msk [vmem:[#allocation4] sm:$0xf] %vm4773, %v4769
    // Predicated region
    $region98: #{tpu_custom_call.1} parent=1 // pred_check
      _
    $region99: #{tpu_custom_call.1} parent=1 // pred_check_branch
      %4776 = sbr.rel (0) target = $region101
    $region100: #{tpu_custom_call.1} parent=1 // pred_region
      %s4778 = ssub.s32 64, 64
      %4779 = vsyncadd [#allocation5], %s4778
      %s4781 = sshll.u32 [#allocation4], 4
      %s4782 = int_to_ptr.vmem [resolvable:$true] %s4781
      %4784 = dma.vmem_to_hbm [thread:$0]  %s4782, 64, %s15, [#allocation5]
    $region101: #{tpu_custom_call.1} parent=1 // pred_fallthru
      _
    // Predicated region
    $region102: #{tpu_custom_call.1} parent=1 // pred_check
      _
    $region103: #{tpu_custom_call.1} parent=1 // pred_check_branch
      %4786 = sbr.rel (0) target = $region105
    $region104: #{tpu_custom_call.1} parent=1 // pred_region
      %4787 = dma.done [#allocation5], 64
    $region105: #{tpu_custom_call.1} parent=1 // pred_fallthru
      _
    %4788 = vsyncpa [#allocation5], 1

</llo_original>
